<compile_context>
chip_gen: v7x
topology: tpu7x:2x2x1
jax: 0.10.0
libtpu: 0.0.40
codegen_flags: <defaults>
</compile_context>

<pallas_src>
import numpy as np
import jax
import jax.numpy as jnp
from jax.experimental import pallas as pl
from jax.experimental.pallas import tpu as pltpu

CROP_H0, CROP_LEN_H = 35, 188   # 223 - 35
CROP_W0, CROP_LEN_W = 32, 188   # 220 - 32
IMG = 256
POOL_OUT = 112
FEAT_DIM = 512


def _crop_pool_matrix(full_size, crop_start, crop_len, out_size):
    """Exact PyTorch AdaptiveAvgPool1d binning over the crop window
    [crop_start, crop_start + crop_len), embedded into a (out, full_size) matrix
    that is zero outside the crop (crop + pool fused into one matmul)."""
    P = np.zeros((out_size, full_size), dtype=np.float32)
    for i in range(out_size):
        s = (i * crop_len) // out_size
        e = -((-(i + 1) * crop_len) // out_size)  # ceil((i+1)*crop_len/out)
        P[i, crop_start + s: crop_start + e] = 1.0 / (e - s)
    return jnp.asarray(P)


# ---------------------------------------------------------------------------
# Kernel 1: fused crop + adaptive average pool  (B2, C, 256, 256) -> (B2, C, 112, 112)
# One batch element (all C channels) per grid step; each channel is
#   out_c = P_row @ X_c @ P_col^T   on the MXU, with P_col^T precomputed host-side.
# ---------------------------------------------------------------------------
def _face_pool_kernel(x_ref, prow_ref, pcolT_ref, o_ref):
    prow = prow_ref[...]      # (112, 256)
    pcolT = pcolT_ref[...]    # (256, 112)
    for c in range(x_ref.shape[1]):  # static unroll over channels (C small)
        t = jnp.dot(x_ref[0, c], pcolT, preferred_element_type=jnp.float32)   # (256, 112)
        o_ref[0, c] = jnp.dot(prow, t, preferred_element_type=jnp.float32)    # (112, 112)


def face_pool(x, p_row, p_colT):
    """x: (B2, C, 256, 256) -> (B2, C, 112, 112), crop folded into p_row / p_colT."""
    B2, C, H, W = x.shape
    return pl.pallas_call(
        _face_pool_kernel,
        out_shape=jax.ShapeDtypeStruct((B2, C, POOL_OUT, POOL_OUT), jnp.float32),
        grid=(B2,),
        in_specs=[
            pl.BlockSpec((1, C, IMG, IMG), lambda b: (b, 0, 0, 0)),
            pl.BlockSpec((POOL_OUT, IMG), lambda b: (0, 0)),
            pl.BlockSpec((IMG, POOL_OUT), lambda b: (0, 0)),
        ],
        out_specs=pl.BlockSpec((1, C, POOL_OUT, POOL_OUT), lambda b: (b, 0, 0, 0)),
        compiler_params=pltpu.CompilerParams(dimension_semantics=("parallel",)),
    )(x, p_row, p_colT)


# ---------------------------------------------------------------------------
# Kernel 2: feature projection (facenet stand-in).
# HBM-bound: dominated by streaming the (D, 512) weight.  Weight is stored in bf16
# (half the HBM bytes), y and y_hat share one (2B, D) LHS so the weight is read once.
# Grid = (F/tn "parallel", D/tk "arbitrary"); the parallel output axis lets v7x use
# both TensorCores; the reduction axis is last with the accumulator resident in the
# f32 output block.
# ---------------------------------------------------------------------------
def _feat_kernel(x_ref, w_ref, o_ref):
    @pl.when(pl.program_id(1) == 0)
    def _():
        o_ref[...] = jnp.zeros_like(o_ref)

    o_ref[...] += jnp.dot(x_ref[...].astype(jnp.bfloat16), w_ref[...],
                          preferred_element_type=jnp.float32)


def feat_matmul(x_flat, w_bf16, tk=2688, tn=256):
    B2, D = x_flat.shape
    F = w_bf16.shape[1]
    assert D % tk == 0 and tk % 128 == 0 and F % tn == 0
    # VMEM per step (double-buffered): (tk, tn) bf16 = 1.3 MiB * 2 per output tile,
    # safe under the default scoped VMEM on v5e / v6e / v7x.
    return pl.pallas_call(
        _feat_kernel,
        out_shape=jax.ShapeDtypeStruct((B2, F), jnp.float32),
        grid=(F // tn, D // tk),
        in_specs=[
            pl.BlockSpec((B2, tk), lambda j, k: (0, k)),
            pl.BlockSpec((tk, tn), lambda j, k: (k, j)),
        ],
        out_specs=pl.BlockSpec((B2, tn), lambda j, k: (0, j)),
        compiler_params=pltpu.CompilerParams(
            dimension_semantics=("parallel", "arbitrary")),
    )(x_flat, w_bf16)


# ---------------------------------------------------------------------------
# Glue: extract_feats (batched over [y_hat; y]) + forward
# ---------------------------------------------------------------------------
def extract_feats_batched(x, p_row, p_colT, w_feat_bf16):
    B2, C, H, W = x.shape
    if H != 256:
        # AdaptiveAvgPool2d((256, 256)); evenly-divisible case only.
        # TODO(synk): general (non-divisible) adaptive average pool to 256x256.
        assert H % 256 == 0 and W % 256 == 0
        x = x.reshape(B2, C, 256, H // 256, 256, W // 256).mean(axis=(3, 5))
    pooled = face_pool(x, p_row, p_colT)                     # (B2, C, 112, 112)
    flat = pooled.reshape(B2, C * POOL_OUT * POOL_OUT)       # (B2, D)
    return feat_matmul(flat, w_feat_bf16)                    # (B2, 512) raw feats


def id_loss_forward(y_hat, y, p_row, p_colT, w_feat_bf16):
    B = y.shape[0]
    # Single pipeline pass: the projection weight is streamed from HBM once for both.
    xs = jnp.concatenate([y_hat, y], axis=0)                 # (2B, C, H, W)
    feats = extract_feats_batched(xs, p_row, p_colT, w_feat_bf16)
    y_hat_feats = feats[:B]
    y_feats = jax.lax.stop_gradient(feats[B:])               # .detach() in torch
    # Cosine of L2-normalized features (backbone ends in l2_norm; no eps, as in reference).
    dots = jnp.sum(y_hat_feats * y_feats, axis=-1)
    n1 = jnp.sqrt(jnp.sum(y_hat_feats * y_hat_feats, axis=-1))
    n2 = jnp.sqrt(jnp.sum(y_feats * y_feats, axis=-1))
    loss = jnp.mean(1.0 - dots / (n1 * n2))
    sim_improvement = jnp.float32(0.0)                       # 0 / count, as in the reference
    return loss, sim_improvement


if __name__ == "__main__":
    key = jax.random.PRNGKey(0)
    k1, k2, k3 = jax.random.split(key, 3)

    B, C, H, W = 2, 3, 256, 256
    y = jax.random.normal(k1, (B, C, H, W), dtype=jnp.float32)
    y_hat = jax.random.normal(k2, (B, C, H, W), dtype=jnp.float32)

    D = C * POOL_OUT * POOL_OUT                              # 3 * 112 * 112 = 37632
    # Deterministic facenet stand-in, stored bf16 (f32 MXU accumulation in the kernel).
    w_feat = ((jax.random.normal(k3, (D, FEAT_DIM), dtype=jnp.float32)
               * (1.0 / np.sqrt(D))).astype(jnp.bfloat16))
    # Crop (35:223 / 32:220) folded into the (112, 256) pooling matrices.
    p_row = _crop_pool_matrix(IMG, CROP_H0, CROP_LEN_H, POOL_OUT)          # (112, 256)
    p_colT = jnp.transpose(_crop_pool_matrix(IMG, CROP_W0, CROP_LEN_W, POOL_OUT))  # (256, 112)

    fwd = jax.jit(id_loss_forward)
    loss, sim_improvement = fwd(y_hat, y, p_row, p_colT, w_feat)
    loss = jax.block_until_ready(loss)
    assert jnp.isfinite(loss)
    print("KERNEL_OK")
</pallas_src>

<mosaic_0001>
module attributes {stable_mosaic.version = 11 : i64} {
  func.func @_face_pool_kernel(%arg0: i32, %arg1: memref<1x3x256x256xf32, #tpu.memory_space<vmem>>, %arg2: memref<112x256xf32, #tpu.memory_space<vmem>>, %arg3: memref<256x112xf32, #tpu.memory_space<vmem>>, %arg4: memref<1x3x112x112xf32, #tpu.memory_space<vmem>>) attributes {dimension_semantics = [#tpu.dimension_semantics<parallel>], iteration_bounds = array<i64: 4>, scalar_prefetch = 0 : i64, scratch_operands = 0 : i64, tpu.core_type = #tpu.core_type<tc>, window_params = [{transform_indices = @transform_0, window_bounds = array<i64: 1, 3, 256, 256>}, {pipeline_mode = #tpu.pipeline_mode<synchronous>, transform_indices = @transform_1, window_bounds = array<i64: 112, 256>}, {pipeline_mode = #tpu.pipeline_mode<synchronous>, transform_indices = @transform_2, window_bounds = array<i64: 256, 112>}, {transform_indices = @transform_3, window_bounds = array<i64: 1, 3, 112, 112>}]} {
    %c0 = arith.constant 0 : index
    %c0_0 = arith.constant 0 : index
    %0 = vector.load %arg2[%c0, %c0_0] : memref<112x256xf32, #tpu.memory_space<vmem>>, vector<112x256xf32>
    %c0_1 = arith.constant 0 : index
    %c0_2 = arith.constant 0 : index
    %1 = vector.load %arg3[%c0_1, %c0_2] : memref<256x112xf32, #tpu.memory_space<vmem>>, vector<256x112xf32>
    %c0_3 = arith.constant 0 : index
    %c0_4 = arith.constant 0 : index
    %c0_5 = arith.constant 0 : index
    %c0_6 = arith.constant 0 : index
    %2 = vector.load %arg1[%c0_3, %c0_4, %c0_5, %c0_6] : memref<1x3x256x256xf32, #tpu.memory_space<vmem>>, vector<1x1x256x256xf32>
    %3 = vector.shape_cast %2 : vector<1x1x256x256xf32> to vector<256x256xf32>
    %cst = arith.constant dense<0.000000e+00> : vector<256x112xf32>
    %4 = tpu.matmul %3, %1, %cst {dimension_numbers = #tpu.dot_dimension_numbers<[1], [0], [0], [1], [0, 0, 1, 1], [], []>} : vector<256x256xf32>, vector<256x112xf32>, vector<256x112xf32> -> vector<256x112xf32>
    %cst_7 = arith.constant dense<0.000000e+00> : vector<112x112xf32>
    %5 = tpu.matmul %0, %4, %cst_7 {dimension_numbers = #tpu.dot_dimension_numbers<[1], [0], [0], [1], [0, 0, 1, 1], [], []>} : vector<112x256xf32>, vector<256x112xf32>, vector<112x112xf32> -> vector<112x112xf32>
    %c0_8 = arith.constant 0 : index
    %c0_9 = arith.constant 0 : index
    %c0_10 = arith.constant 0 : index
    %c0_11 = arith.constant 0 : index
    %6 = vector.load %arg4[%c0_8, %c0_9, %c0_10, %c0_11] : memref<1x3x112x112xf32, #tpu.memory_space<vmem>>, vector<1x1x112x112xf32>
    %7 = vector.shape_cast %6 : vector<1x1x112x112xf32> to vector<112x112xf32>
    %8 = vector.shape_cast %5 : vector<112x112xf32> to vector<1x1x112x112xf32>
    tpu.vector_store %arg4[%c0_8, %c0_9, %c0_10, %c0_11], %8 {strides = array<i32>} : memref<1x3x112x112xf32, #tpu.memory_space<vmem>>, vector<1x1x112x112xf32>,
    %c0_12 = arith.constant 0 : index
    %c1 = arith.constant 1 : index
    %c0_13 = arith.constant 0 : index
    %c0_14 = arith.constant 0 : index
    %9 = vector.load %arg1[%c0_12, %c1, %c0_13, %c0_14] : memref<1x3x256x256xf32, #tpu.memory_space<vmem>>, vector<1x1x256x256xf32>
    %10 = vector.shape_cast %9 : vector<1x1x256x256xf32> to vector<256x256xf32>
    %cst_15 = arith.constant dense<0.000000e+00> : vector<256x112xf32>
    %11 = tpu.matmul %10, %1, %cst_15 {dimension_numbers = #tpu.dot_dimension_numbers<[1], [0], [0], [1], [0, 0, 1, 1], [], []>} : vector<256x256xf32>, vector<256x112xf32>, vector<256x112xf32> -> vector<256x112xf32>
    %cst_16 = arith.constant dense<0.000000e+00> : vector<112x112xf32>
    %12 = tpu.matmul %0, %11, %cst_16 {dimension_numbers = #tpu.dot_dimension_numbers<[1], [0], [0], [1], [0, 0, 1, 1], [], []>} : vector<112x256xf32>, vector<256x112xf32>, vector<112x112xf32> -> vector<112x112xf32>
    %c0_17 = arith.constant 0 : index
    %c1_18 = arith.constant 1 : index
    %c0_19 = arith.constant 0 : index
    %c0_20 = arith.constant 0 : index
    %13 = vector.load %arg4[%c0_17, %c1_18, %c0_19, %c0_20] : memref<1x3x112x112xf32, #tpu.memory_space<vmem>>, vector<1x1x112x112xf32>
    %14 = vector.shape_cast %13 : vector<1x1x112x112xf32> to vector<112x112xf32>
    %15 = vector.shape_cast %12 : vector<112x112xf32> to vector<1x1x112x112xf32>
    tpu.vector_store %arg4[%c0_17, %c1_18, %c0_19, %c0_20], %15 {strides = array<i32>} : memref<1x3x112x112xf32, #tpu.memory_space<vmem>>, vector<1x1x112x112xf32>,
    %c0_21 = arith.constant 0 : index
    %c2 = arith.constant 2 : index
    %c0_22 = arith.constant 0 : index
    %c0_23 = arith.constant 0 : index
    %16 = vector.load %arg1[%c0_21, %c2, %c0_22, %c0_23] : memref<1x3x256x256xf32, #tpu.memory_space<vmem>>, vector<1x1x256x256xf32>
    %17 = vector.shape_cast %16 : vector<1x1x256x256xf32> to vector<256x256xf32>
    %cst_24 = arith.constant dense<0.000000e+00> : vector<256x112xf32>
    %18 = tpu.matmul %17, %1, %cst_24 {dimension_numbers = #tpu.dot_dimension_numbers<[1], [0], [0], [1], [0, 0, 1, 1], [], []>} : vector<256x256xf32>, vector<256x112xf32>, vector<256x112xf32> -> vector<256x112xf32>
    %cst_25 = arith.constant dense<0.000000e+00> : vector<112x112xf32>
    %19 = tpu.matmul %0, %18, %cst_25 {dimension_numbers = #tpu.dot_dimension_numbers<[1], [0], [0], [1], [0, 0, 1, 1], [], []>} : vector<112x256xf32>, vector<256x112xf32>, vector<112x112xf32> -> vector<112x112xf32>
    %c0_26 = arith.constant 0 : index
    %c2_27 = arith.constant 2 : index
    %c0_28 = arith.constant 0 : index
    %c0_29 = arith.constant 0 : index
    %20 = vector.load %arg4[%c0_26, %c2_27, %c0_28, %c0_29] : memref<1x3x112x112xf32, #tpu.memory_space<vmem>>, vector<1x1x112x112xf32>
    %21 = vector.shape_cast %20 : vector<1x1x112x112xf32> to vector<112x112xf32>
    %22 = vector.shape_cast %19 : vector<112x112xf32> to vector<1x1x112x112xf32>
    tpu.vector_store %arg4[%c0_26, %c2_27, %c0_28, %c0_29], %22 {strides = array<i32>} : memref<1x3x112x112xf32, #tpu.memory_space<vmem>>, vector<1x1x112x112xf32>,
    return
  }
  func.func @transform_0(%arg0: i32) -> (i32, i32, i32, i32) {
    %c0_i32 = arith.constant 0 : i32
    %c0_i32_0 = arith.constant 0 : i32
    %c0_i32_1 = arith.constant 0 : i32
    %c0_i32_2 = arith.constant 0 : i32
    return %arg0, %c0_i32, %c0_i32_0, %c0_i32_1 : i32, i32, i32, i32
  }
  func.func @transform_1(%arg0: i32) -> (i32, i32) {
    %c0_i32 = arith.constant 0 : i32
    %c0_i32_0 = arith.constant 0 : i32
    %c0_i32_1 = arith.constant 0 : i32
    return %c0_i32, %c0_i32_0 : i32, i32
  }
  func.func @transform_2(%arg0: i32) -> (i32, i32) {
    %c0_i32 = arith.constant 0 : i32
    %c0_i32_0 = arith.constant 0 : i32
    %c0_i32_1 = arith.constant 0 : i32
    return %c0_i32, %c0_i32_0 : i32, i32
  }
  func.func @transform_3(%arg0: i32) -> (i32, i32, i32, i32) {
    %c0_i32 = arith.constant 0 : i32
    %c0_i32_0 = arith.constant 0 : i32
    %c0_i32_1 = arith.constant 0 : i32
    %c0_i32_2 = arith.constant 0 : i32
    return %arg0, %c0_i32, %c0_i32_0, %c0_i32_1 : i32, i32, i32, i32
  }
}

module attributes {stable_mosaic.version = 11 : i64} {
  func.func @_feat_kernel(%arg0: i32, %arg1: i32, %arg2: memref<4x2688xf32, #tpu.memory_space<vmem>>, %arg3: memref<2688x256xbf16, #tpu.memory_space<vmem>>, %arg4: memref<4x256xf32, #tpu.memory_space<vmem>>) attributes {dimension_semantics = [#tpu.dimension_semantics<parallel>, #tpu.dimension_semantics<arbitrary>], iteration_bounds = array<i64: 2, 14>, scalar_prefetch = 0 : i64, scratch_operands = 0 : i64, tpu.core_type = #tpu.core_type<tc>, window_params = [{transform_indices = @transform_0, window_bounds = array<i64: 4, 2688>}, {transform_indices = @transform_1, window_bounds = array<i64: 2688, 256>}, {transform_indices = @transform_2, window_bounds = array<i64: 4, 256>}]} {
    %c0_i32 = arith.constant 0 : i32
    %0 = arith.cmpi eq, %arg1, %c0_i32 : i32
    %1 = arith.extui %0 : i1 to i32
    %c0_i32_0 = arith.constant 0 : i32
    %2 = arith.cmpi ne, %1, %c0_i32_0 : i32
    scf.if %2 {
      %cst_8 = arith.constant 0.000000e+00 : f32
      %10 = vector.broadcast %cst_8 : f32 to vector<4x256xf32>
      %c0_9 = arith.constant 0 : index
      %c0_10 = arith.constant 0 : index
      %11 = vector.load %arg4[%c0_9, %c0_10] : memref<4x256xf32, #tpu.memory_space<vmem>>, vector<4x256xf32>
      tpu.vector_store %arg4[%c0_9, %c0_10], %10 {strides = array<i32>} : memref<4x256xf32, #tpu.memory_space<vmem>>, vector<4x256xf32>,
    } else {
    }
    %c0 = arith.constant 0 : index
    %c0_1 = arith.constant 0 : index
    %3 = vector.load %arg4[%c0, %c0_1] : memref<4x256xf32, #tpu.memory_space<vmem>>, vector<4x256xf32>
    %c0_2 = arith.constant 0 : index
    %c0_3 = arith.constant 0 : index
    %4 = vector.load %arg2[%c0_2, %c0_3] : memref<4x2688xf32, #tpu.memory_space<vmem>>, vector<4x2688xf32>
    %5 = arith.truncf %4 : vector<4x2688xf32> to vector<4x2688xbf16>
    %c0_4 = arith.constant 0 : index
    %c0_5 = arith.constant 0 : index
    %6 = vector.load %arg3[%c0_4, %c0_5] : memref<2688x256xbf16, #tpu.memory_space<vmem>>, vector<2688x256xbf16>
    %cst = arith.constant dense<0.000000e+00> : vector<4x256xf32>
    %7 = tpu.matmul %5, %6, %cst {dimension_numbers = #tpu.dot_dimension_numbers<[1], [0], [0], [1], [0, 0, 1, 1], [], []>} : vector<4x2688xbf16>, vector<2688x256xbf16>, vector<4x256xf32> -> vector<4x256xf32>
    %8 = arith.addf %3, %7 : vector<4x256xf32>
    %c0_6 = arith.constant 0 : index
    %c0_7 = arith.constant 0 : index
    %9 = vector.load %arg4[%c0_6, %c0_7] : memref<4x256xf32, #tpu.memory_space<vmem>>, vector<4x256xf32>
    tpu.vector_store %arg4[%c0_6, %c0_7], %8 {strides = array<i32>} : memref<4x256xf32, #tpu.memory_space<vmem>>, vector<4x256xf32>,
    return
  }
  func.func @transform_0(%arg0: i32, %arg1: i32) -> (i32, i32) {
    %c0_i32 = arith.constant 0 : i32
    %c0_i32_0 = arith.constant 0 : i32
    return %c0_i32, %arg1 : i32, i32
  }
  func.func @transform_1(%arg0: i32, %arg1: i32) -> (i32, i32) {
    %c0_i32 = arith.constant 0 : i32
    return %arg1, %arg0 : i32, i32
  }
  func.func @transform_2(%arg0: i32, %arg1: i32) -> (i32, i32) {
    %c0_i32 = arith.constant 0 : i32
    %c0_i32_0 = arith.constant 0 : i32
    return %c0_i32, %arg0 : i32, i32
  }
}

</mosaic_0001>

<llo_original>
// kernel: id_loss_forward.2
$region0: #{id_loss_forward.2}
  #allocation0 [shape = 'u32[]', space=smem, size = 0x4, offset = 0x4, fixed_abs, tag = 'smem constant byte address 0x4 - core index']
  #allocation1 [shape = 'u32[144,128]{1,0:T(1,128)}', space=vmem, size = 0x12000, scoped, tag = 'internal scratch']
  %s0 = inlined_call_operand.vmem [shape: f32[4,3,256,256], index: 0, kind: input, shape index: {}]
  %s1 = inlined_call_operand.vmem [shape: f32[112,256], index: 1, kind: input, shape index: {}]
  %s2 = inlined_call_operand.vmem [shape: f32[256,112], index: 2, kind: input, shape index: {}]
  %s3 = inlined_call_operand.vmem [shape: f32[4,3,112,112], index: 3, kind: output, shape index: {}]
  %s4 = sld [smem:[#allocation0]]
  $region45: #{id_loss_forward.2} parent=0
    _
  %s6 = ssub.s32 1, %s4
  %s7 = scalar_select 0, %s6, %s4
  loop: start=0, step=1, limit=6
  $region2: #{id_loss_forward.2} parent=0 // loop_pre_header
    _
  $region3: #{id_loss_forward.2} parent=0 // loop_header
    %s9 = sphi 0, %s13
    %p10 = scmp.ge.s32.totalorder %s9, 6
    %s19 = sphi 0, %s21
    %s22 = sphi 0, %s19
    %s23 = sphi 0, %s22
    %s39 = sphi 0, %s23
    %s43 = sphi 0, %s43
    %s45 = sphi 0, %s43
    %s46 = sphi 0, %s45
    %s60 = sphi 0, %s46
    %s64 = sphi 0, %s64
    %s66 = sphi 0, %s64
    %s67 = sphi 0, %s66
    %s81 = sphi 0, %s67
    %s87 = sphi 0, %s89
    %s90 = sphi 0, %s87
    %s91 = sphi 0, %s90
    %s107 = sphi 0, %s91
  $region4: #{id_loss_forward.2} parent=0 // loop_header_branch
    %12 = sbr.rel (%p10) target = $region8
  $region5: #{id_loss_forward.2} parent=0 // loop_body
    %s14 = ssub.s32 %s9, 1
    %s15 = ssub.s32 %s9, 2
    %s16 = sadd.s32 %s9, 1
    %s17 = ssub.s32 %s9, %s16
    %p18 = scmp.eq.s32.totalorder %s17, 0
    %s20 = sadd.s32 %s19, 1
    %s21 = scalar_select %p18, %s19, %s20
    %p24 = pneg %p18
    %p25 = scmp.eq.s32.totalorder %s9, 3
    %p26 = por %p24, %p25
    %p27 = scmp.ne.s32.totalorder %s19, %s22
    %p28 = scmp.eq.s32.totalorder %s9, 0
    %p29 = por %p27, %p28
    %p30 = scmp.ne.s32.totalorder %s19, %s22
    %p31 = scmp.eq.s32.totalorder %s14, 3
    %p32 = por %p30, %p31
    %p33 = scmp.ne.s32.totalorder %s22, %s23
    %p34 = scmp.eq.s32.totalorder %s14, 0
    %p35 = por %p33, %p34
    %p36 = scmp.ne.s32.totalorder %s22, %s23
    %p37 = scmp.eq.s32.totalorder %s15, 3
    %p38 = por %p36, %p37
    %p40 = scmp.ne.s32.totalorder %s23, %s39
    %p41 = scmp.eq.s32.totalorder %s15, 0
    %p42 = por %p40, %p41
    %s44 = sadd.s32 %s43, 1
    %p47 = scmp.eq.s32.totalorder %s9, 3
    %p48 = scmp.ne.s32.totalorder %s43, %s45
    %p49 = scmp.eq.s32.totalorder %s9, 0
    %p50 = por %p48, %p49
    %p51 = scmp.ne.s32.totalorder %s43, %s45
    %p52 = scmp.eq.s32.totalorder %s14, 3
    %p53 = por %p51, %p52
    %p54 = scmp.ne.s32.totalorder %s45, %s46
    %p55 = scmp.eq.s32.totalorder %s14, 0
    %p56 = por %p54, %p55
    %p57 = scmp.ne.s32.totalorder %s45, %s46
    %p58 = scmp.eq.s32.totalorder %s15, 3
    %p59 = por %p57, %p58
    %p61 = scmp.ne.s32.totalorder %s46, %s60
    %p62 = scmp.eq.s32.totalorder %s15, 0
    %p63 = por %p61, %p62
    %s65 = sadd.s32 %s64, 1
    %p68 = scmp.eq.s32.totalorder %s9, 3
    %p69 = scmp.ne.s32.totalorder %s64, %s66
    %p70 = scmp.eq.s32.totalorder %s9, 0
    %p71 = por %p69, %p70
    %p72 = scmp.ne.s32.totalorder %s64, %s66
    %p73 = scmp.eq.s32.totalorder %s14, 3
    %p74 = por %p72, %p73
    %p75 = scmp.ne.s32.totalorder %s66, %s67
    %p76 = scmp.eq.s32.totalorder %s14, 0
    %p77 = por %p75, %p76
    %p78 = scmp.ne.s32.totalorder %s66, %s67
    %p79 = scmp.eq.s32.totalorder %s15, 3
    %p80 = por %p78, %p79
    %p82 = scmp.ne.s32.totalorder %s67, %s81
    %p83 = scmp.eq.s32.totalorder %s15, 0
    %p84 = por %p82, %p83
    %s85 = ssub.s32 %s9, %s16
    %p86 = scmp.eq.s32.totalorder %s85, 0
    %s88 = sadd.s32 %s87, 1
    %s89 = scalar_select %p86, %s87, %s88
    %p92 = pneg %p86
    %p93 = scmp.eq.s32.totalorder %s9, 3
    %p94 = por %p92, %p93
    %p95 = scmp.ne.s32.totalorder %s87, %s90
    %p96 = scmp.eq.s32.totalorder %s9, 0
    %p97 = por %p95, %p96
    %p98 = scmp.ne.s32.totalorder %s87, %s90
    %p99 = scmp.eq.s32.totalorder %s14, 3
    %p100 = por %p98, %p99
    %p101 = scmp.ne.s32.totalorder %s90, %s91
    %p102 = scmp.eq.s32.totalorder %s14, 0
    %p103 = por %p101, %p102
    %p104 = scmp.ne.s32.totalorder %s90, %s91
    %p105 = scmp.eq.s32.totalorder %s15, 3
    %p106 = por %p104, %p105
    %p108 = scmp.ne.s32.totalorder %s91, %s107
    %p109 = scmp.eq.s32.totalorder %s15, 0
    %p110 = por %p108, %p109
    %p111 = scmp.le.s32.totalorder 1, %s9
    %p112 = scmp.lt.s32.totalorder %s9, 5
    %p113 = pnand %p111, %p112
    %p114 = pneg %p113
    // Predicated region
    $region9: #{id_loss_forward.2} parent=5 // pred_check
      _
    $region10: #{id_loss_forward.2} parent=5 // pred_check_branch
      %116 = sbr.rel (%p113) target = $region12
    $region11: #{id_loss_forward.2} parent=5 // pred_region
      %s117 = ssub.s32 %s9, 1
      // Predicated region
      $region13: #{id_loss_forward.2} parent=11 // pred_check
        %p118 = pneg %p56
      $region14: #{id_loss_forward.2} parent=11 // pred_check_branch
        %120 = sbr.rel (%p118) target = $region16
      $region15: #{id_loss_forward.2} parent=11 // pred_region
        _
      $region16: #{id_loss_forward.2} parent=11 // pred_fallthru
        _
      // Predicated region
      $region17: #{id_loss_forward.2} parent=11 // pred_check
        %p121 = pneg %p77
      $region18: #{id_loss_forward.2} parent=11 // pred_check_branch
        %123 = sbr.rel (%p121) target = $region20
      $region19: #{id_loss_forward.2} parent=11 // pred_region
        _
      $region20: #{id_loss_forward.2} parent=11 // pred_fallthru
        _
    $region12: #{id_loss_forward.2} parent=5 // pred_fallthru
      _
    %p124 = scmp.lt.s32.totalorder %s9, 4
    // Predicated region
    $region21: #{id_loss_forward.2} parent=5 // pred_check
      %p125 = pneg %p124
    $region22: #{id_loss_forward.2} parent=5 // pred_check_branch
      %127 = sbr.rel (%p125) target = $region24
    $region23: #{id_loss_forward.2} parent=5 // pred_region
      // Predicated region
      $region25: #{id_loss_forward.2} parent=23 // pred_check
        %p128 = pneg %p29
      $region26: #{id_loss_forward.2} parent=23 // pred_check_branch
        %130 = sbr.rel (%p128) target = $region28
      $region27: #{id_loss_forward.2} parent=23 // pred_region
        %p131 = scmp.lt.s32.totalorder %s9, 3
        %s132 = scalar_select %p131, %s9, 3
        %s133 = smul.addr %s132, 192
        %s134 = smul.addr %s133, 8
        %s135 = scalar_lea.vmem %s0, %s134
      $region28: #{id_loss_forward.2} parent=23 // pred_fallthru
        _
    $region24: #{id_loss_forward.2} parent=5 // pred_fallthru
      _
    %p136 = scmp.le.s32.totalorder 1, %s9
    %p137 = scmp.lt.s32.totalorder %s9, 5
    %p138 = pnand %p136, %p137
    %p139 = pneg %p138
    // Predicated region
    $region29: #{id_loss_forward.2} parent=5 // pred_check
      _
    $region30: #{id_loss_forward.2} parent=5 // pred_check_branch
      %141 = sbr.rel (%p138) target = $region32
    $region31: #{id_loss_forward.2} parent=5 // pred_region
      %s142 = ssub.s32 %s9, 1
      %p143 = scmp.lt.s32.totalorder %s14, 3
      %s144 = scalar_select %p143, %s14, 3
      %s145 = smul.addr %s144, 192
      %s146 = smul.addr %s145, 8
      %s147 = scalar_lea.vmem %s0, %s146
      %p148 = pneg %p35
      %p149 = pneg %p32
      %p150 = pneg %p56
      %p151 = pneg %p53
      %p152 = pneg %p77
      %p153 = pneg %p74
      %p154 = pneg %p103
      %p155 = pneg %p100
      %p156 = scmp.lt.s32.totalorder %s14, 3
      %s157 = scalar_select %p156, %s14, 3
      %s158 = smul.addr %s157, 42
      %s159 = smul.addr %s158, 8
      %s160 = scalar_lea.vmem %s3, %s159
      %p161 = scmp.lt.s32.totalorder %s14, 3
      %s162 = scalar_select %p161, %s14, 3
      %s163 = smul.addr %s162, 192
      %s164 = smul.addr %s163, 8
      %s165 = scalar_lea.vmem %s0, %s164
      %p166 = scmp.lt.s32.totalorder %s14, 3
      %s167 = scalar_select %p166, %s14, 3
      %s168 = smul.addr %s167, 42
      %s169 = smul.addr %s168, 8
      %s170 = scalar_lea.vmem %s3, %s169
      %v171 = vld [vmem:[%s1] sm:$0xff]
      %v172 = vld [vmem:[%s1 + $0x8] sm:$0xff]
      %v173 = vld [vmem:[%s1 + $0x10] sm:$0xff]
      %v174 = vld [vmem:[%s1 + $0x18] sm:$0xff]
      %v175 = vld [vmem:[%s1 + $0x20] sm:$0xff]
      %v176 = vld [vmem:[%s1 + $0x28] sm:$0xff]
      %v177 = vld [vmem:[%s1 + $0x30] sm:$0xff]
      %v178 = vld [vmem:[%s1 + $0x38] sm:$0xff]
      %v179 = vld [vmem:[%s1 + $0x40] sm:$0xff]
      %v180 = vld [vmem:[%s1 + $0x48] sm:$0xff]
      %v181 = vld [vmem:[%s1 + $0x50] sm:$0xff]
      %v182 = vld [vmem:[%s1 + $0x58] sm:$0xff]
      %v183 = vld [vmem:[%s1 + $0x60] sm:$0xff]
      %v184 = vld [vmem:[%s1 + $0x68] sm:$0xff]
      %v185 = vld [vmem:[%s1 + $0x70] sm:$0xff]
      %v186 = vld [vmem:[%s1 + $0x78] sm:$0xff]
      %v187 = vld [vmem:[%s1 + $0x80] sm:$0xff]
      %v188 = vld [vmem:[%s1 + $0x88] sm:$0xff]
      %v189 = vld [vmem:[%s1 + $0x90] sm:$0xff]
      %v190 = vld [vmem:[%s1 + $0x98] sm:$0xff]
      %v191 = vld [vmem:[%s1 + $0xa0] sm:$0xff]
      %v192 = vld [vmem:[%s1 + $0xa8] sm:$0xff]
      %v193 = vld [vmem:[%s1 + $0xb0] sm:$0xff]
      %v194 = vld [vmem:[%s1 + $0xb8] sm:$0xff]
      %v195 = vld [vmem:[%s1 + $0xc0] sm:$0xff]
      %v196 = vld [vmem:[%s1 + $0xc8] sm:$0xff]
      %v197 = vld [vmem:[%s1 + $0xd0] sm:$0xff]
      %v198 = vld [vmem:[%s1 + $0xd8] sm:$0xff]
      %v199 = vld [vmem:[%s2] sm:$0xff]
      %v200 = vld [vmem:[%s2 + $0x8] sm:$0xff]
      %v201 = vld [vmem:[%s2 + $0x10] sm:$0xff]
      %v202 = vld [vmem:[%s2 + $0x18] sm:$0xff]
      %v203 = vld [vmem:[%s2 + $0x20] sm:$0xff]
      %v204 = vld [vmem:[%s2 + $0x28] sm:$0xff]
      %v205 = vld [vmem:[%s2 + $0x30] sm:$0xff]
      %v206 = vld [vmem:[%s2 + $0x38] sm:$0xff]
      %v207 = vld [vmem:[%s2 + $0x40] sm:$0xff]
      %v208 = vld [vmem:[%s2 + $0x48] sm:$0xff]
      %v209 = vld [vmem:[%s2 + $0x50] sm:$0xff]
      %v210 = vld [vmem:[%s2 + $0x58] sm:$0xff]
      %v211 = vld [vmem:[%s2 + $0x60] sm:$0xff]
      %v212 = vld [vmem:[%s2 + $0x68] sm:$0xff]
      %v213 = vld [vmem:[%s2 + $0x70] sm:$0xff]
      %v214 = vld [vmem:[%s2 + $0x78] sm:$0xff]
      %v215 = vld [vmem:[%s2 + $0x80] sm:$0xff]
      %v216 = vld [vmem:[%s2 + $0x88] sm:$0xff]
      %v217 = vld [vmem:[%s2 + $0x90] sm:$0xff]
      %v218 = vld [vmem:[%s2 + $0x98] sm:$0xff]
      %v219 = vld [vmem:[%s2 + $0xa0] sm:$0xff]
      %v220 = vld [vmem:[%s2 + $0xa8] sm:$0xff]
      %v221 = vld [vmem:[%s2 + $0xb0] sm:$0xff]
      %v222 = vld [vmem:[%s2 + $0xb8] sm:$0xff]
      %v223 = vld [vmem:[%s2 + $0xc0] sm:$0xff]
      %v224 = vld [vmem:[%s2 + $0xc8] sm:$0xff]
      %v225 = vld [vmem:[%s2 + $0xd0] sm:$0xff]
      %v226 = vld [vmem:[%s2 + $0xd8] sm:$0xff]
      %v227 = vld [vmem:[%s2 + $0xe0] sm:$0xff]
      %v228 = vld [vmem:[%s2 + $0xe8] sm:$0xff]
      %v229 = vld [vmem:[%s2 + $0xf0] sm:$0xff]
      %v230 = vld [vmem:[%s2 + $0xf8] sm:$0xff]
      %v231 = vld [vmem:[%s165] sm:$0xff]
      %v232 = vld [vmem:[%s165 + $0x8] sm:$0xff]
      %v233 = vld [vmem:[%s165 + $0x10] sm:$0xff]
      %v234 = vld [vmem:[%s165 + $0x18] sm:$0xff]
      %v235 = vld [vmem:[%s165 + $0x20] sm:$0xff]
      %v236 = vld [vmem:[%s165 + $0x28] sm:$0xff]
      %v237 = vld [vmem:[%s165 + $0x30] sm:$0xff]
      %v238 = vld [vmem:[%s165 + $0x38] sm:$0xff]
      %v239 = vld [vmem:[%s165 + $0x40] sm:$0xff]
      %v240 = vld [vmem:[%s165 + $0x48] sm:$0xff]
      %v241 = vld [vmem:[%s165 + $0x50] sm:$0xff]
      %v242 = vld [vmem:[%s165 + $0x58] sm:$0xff]
      %v243 = vld [vmem:[%s165 + $0x60] sm:$0xff]
      %v244 = vld [vmem:[%s165 + $0x68] sm:$0xff]
      %v245 = vld [vmem:[%s165 + $0x70] sm:$0xff]
      %v246 = vld [vmem:[%s165 + $0x78] sm:$0xff]
      %v247 = vld [vmem:[%s165 + $0x80] sm:$0xff]
      %v248 = vld [vmem:[%s165 + $0x88] sm:$0xff]
      %v249 = vld [vmem:[%s165 + $0x90] sm:$0xff]
      %v250 = vld [vmem:[%s165 + $0x98] sm:$0xff]
      %v251 = vld [vmem:[%s165 + $0xa0] sm:$0xff]
      %v252 = vld [vmem:[%s165 + $0xa8] sm:$0xff]
      %v253 = vld [vmem:[%s165 + $0xb0] sm:$0xff]
      %v254 = vld [vmem:[%s165 + $0xb8] sm:$0xff]
      %v255 = vld [vmem:[%s165 + $0xc0] sm:$0xff]
      %v256 = vld [vmem:[%s165 + $0xc8] sm:$0xff]
      %v257 = vld [vmem:[%s165 + $0xd0] sm:$0xff]
      %v258 = vld [vmem:[%s165 + $0xd8] sm:$0xff]
      %v259 = vld [vmem:[%s165 + $0xe0] sm:$0xff]
      %v260 = vld [vmem:[%s165 + $0xe8] sm:$0xff]
      %v261 = vld [vmem:[%s165 + $0xf0] sm:$0xff]
      %v262 = vld [vmem:[%s165 + $0xf8] sm:$0xff]
      %v263 = vld [vmem:[%s165 + $0x100] sm:$0xff]
      %v264 = vld [vmem:[%s165 + $0x108] sm:$0xff]
      %v265 = vld [vmem:[%s165 + $0x110] sm:$0xff]
      %v266 = vld [vmem:[%s165 + $0x118] sm:$0xff]
      %v267 = vld [vmem:[%s165 + $0x120] sm:$0xff]
      %v268 = vld [vmem:[%s165 + $0x128] sm:$0xff]
      %v269 = vld [vmem:[%s165 + $0x130] sm:$0xff]
      %v270 = vld [vmem:[%s165 + $0x138] sm:$0xff]
      %v271 = vld [vmem:[%s165 + $0x140] sm:$0xff]
      %v272 = vld [vmem:[%s165 + $0x148] sm:$0xff]
      %v273 = vld [vmem:[%s165 + $0x150] sm:$0xff]
      %v274 = vld [vmem:[%s165 + $0x158] sm:$0xff]
      %v275 = vld [vmem:[%s165 + $0x160] sm:$0xff]
      %v276 = vld [vmem:[%s165 + $0x168] sm:$0xff]
      %v277 = vld [vmem:[%s165 + $0x170] sm:$0xff]
      %v278 = vld [vmem:[%s165 + $0x178] sm:$0xff]
      %v279 = vld [vmem:[%s165 + $0x180] sm:$0xff]
      %v280 = vld [vmem:[%s165 + $0x188] sm:$0xff]
      %v281 = vld [vmem:[%s165 + $0x190] sm:$0xff]
      %v282 = vld [vmem:[%s165 + $0x198] sm:$0xff]
      %v283 = vld [vmem:[%s165 + $0x1a0] sm:$0xff]
      %v284 = vld [vmem:[%s165 + $0x1a8] sm:$0xff]
      %v285 = vld [vmem:[%s165 + $0x1b0] sm:$0xff]
      %v286 = vld [vmem:[%s165 + $0x1b8] sm:$0xff]
      %v287 = vld [vmem:[%s165 + $0x1c0] sm:$0xff]
      %v288 = vld [vmem:[%s165 + $0x1c8] sm:$0xff]
      %v289 = vld [vmem:[%s165 + $0x1d0] sm:$0xff]
      %v290 = vld [vmem:[%s165 + $0x1d8] sm:$0xff]
      %v291 = vld [vmem:[%s165 + $0x1e0] sm:$0xff]
      %v292 = vld [vmem:[%s165 + $0x1e8] sm:$0xff]
      %v293 = vld [vmem:[%s165 + $0x1f0] sm:$0xff]
      %v294 = vld [vmem:[%s165 + $0x1f8] sm:$0xff]
      %295 = vmatprep.subr.mxu0 0.0
      %296 = vmatpush1.msra.mxu0 %v199
      %297 = vmatprep.subr.mxu0 0.0
      %298 = vmatpush1.msra.mxu0 %v200
      %299 = vmatprep.subr.mxu0 0.0
      %300 = vmatpush1.msra.mxu0 %v201
      %301 = vmatprep.subr.mxu0 0.0
      %302 = vmatpush1.msra.mxu0 %v202
      %303 = vmatprep.subr.mxu0 0.0
      %304 = vmatpush1.msra.mxu0 %v203
      %305 = vmatprep.subr.mxu0 0.0
      %306 = vmatpush1.msra.mxu0 %v204
      %307 = vmatprep.subr.mxu0 0.0
      %308 = vmatpush1.msra.mxu0 %v205
      %309 = vmatprep.subr.mxu0 0.0
      %310 = vmatpush1.msra.mxu0 %v206
      %311 = vmatprep.subr.mxu0 0.0
      %312 = vmatpush1.msra.mxu0 %v207
      %313 = vmatprep.subr.mxu0 0.0
      %314 = vmatpush1.msra.mxu0 %v208
      %315 = vmatprep.subr.mxu0 0.0
      %316 = vmatpush1.msra.mxu0 %v209
      %317 = vmatprep.subr.mxu0 0.0
      %318 = vmatpush1.msra.mxu0 %v210
      %319 = vmatprep.subr.mxu0 0.0
      %320 = vmatpush1.msra.mxu0 %v211
      %321 = vmatprep.subr.mxu0 0.0
      %322 = vmatpush1.msra.mxu0 %v212
      %323 = vmatprep.subr.mxu0 0.0
      %324 = vmatpush1.msra.mxu0 %v213
      %325 = vmatprep.subr.mxu0 0.0
      %326 = vmatpush1.msra.mxu0 %v214
      %327 = vmatprep.subr.mxu0 0.0
      %328 = vmatpush1.msra.mxu0 %v215
      %329 = vmatprep.subr.mxu0 0.0
      %330 = vmatpush1.msra.mxu0 %v216
      %331 = vmatprep.subr.mxu0 0.0
      %332 = vmatpush1.msra.mxu0 %v217
      %333 = vmatprep.subr.mxu0 0.0
      %334 = vmatpush1.msra.mxu0 %v218
      %335 = vmatprep.subr.mxu0 0.0
      %336 = vmatpush1.msra.mxu0 %v219
      %337 = vmatprep.subr.mxu0 0.0
      %338 = vmatpush1.msra.mxu0 %v220
      %339 = vmatprep.subr.mxu0 0.0
      %340 = vmatpush1.msra.mxu0 %v221
      %341 = vmatprep.subr.mxu0 0.0
      %342 = vmatpush1.msra.mxu0 %v222
      %343 = vmatprep.subr.mxu0 0.0
      %344 = vmatpush1.msra.mxu0 %v223
      %345 = vmatprep.subr.mxu0 0.0
      %346 = vmatpush1.msra.mxu0 %v224
      %347 = vmatprep.subr.mxu0 0.0
      %348 = vmatpush1.msra.mxu0 %v225
      %349 = vmatprep.subr.mxu0 0.0
      %350 = vmatpush1.msra.mxu0 %v226
      %351 = vmatprep.subr.mxu0 0.0
      %352 = vmatpush1.msra.mxu0 %v227
      %353 = vmatprep.subr.mxu0 0.0
      %354 = vmatpush1.msra.mxu0 %v228
      %355 = vmatprep.subr.mxu0 0.0
      %356 = vmatpush1.msra.mxu0 %v229
      %357 = vmatprep.subr.mxu0 0.0
      %358 = vmatpush1.msra.mxu0 %v230
      %359 = vmatprep.mubr.f32.mxu0 %v232
      %360 = vmatmul.mubr.f32.gmra.mrb[0].mxu0 %v231
      %v361 = vpop.f32.mrb[0].mxu0
      %v362 = vadd.f32 0.0, %v361
      %v363 = vpop.f32.mrb[0].mxu0
      %364 = vmatprep.mubr.f32.mxu0 %v234
      %365 = vmatmul.mubr.f32.gmra.mrb[0].mxu0 %v233
      %v366 = vpop.f32.mrb[0].mxu0
      %v367 = vadd.f32 0.0, %v366
      %v368 = vpop.f32.mrb[0].mxu0
      %369 = vmatprep.mubr.f32.mxu0 %v236
      %370 = vmatmul.mubr.f32.gmra.mrb[0].mxu0 %v235
      %v371 = vpop.f32.mrb[0].mxu0
      %v372 = vadd.f32 0.0, %v371
      %v373 = vpop.f32.mrb[0].mxu0
      %374 = vmatprep.mubr.f32.mxu0 %v238
      %375 = vmatmul.mubr.f32.gmra.mrb[0].mxu0 %v237
      %v376 = vpop.f32.mrb[0].mxu0
      %v377 = vadd.f32 0.0, %v376
      %v378 = vpop.f32.mrb[0].mxu0
      %379 = vmatprep.mubr.f32.mxu0 %v240
      %380 = vmatmul.mubr.f32.gmra.mrb[0].mxu0 %v239
      %v381 = vpop.f32.mrb[0].mxu0
      %v382 = vadd.f32 0.0, %v381
      %v383 = vpop.f32.mrb[0].mxu0
      %384 = vmatprep.mubr.f32.mxu0 %v242
      %385 = vmatmul.mubr.f32.gmra.mrb[0].mxu0 %v241
      %v386 = vpop.f32.mrb[0].mxu0
      %v387 = vadd.f32 0.0, %v386
      %v388 = vpop.f32.mrb[0].mxu0
      %389 = vmatprep.mubr.f32.mxu0 %v244
      %390 = vmatmul.mubr.f32.gmra.mrb[0].mxu0 %v243
      %v391 = vpop.f32.mrb[0].mxu0
      %v392 = vadd.f32 0.0, %v391
      %v393 = vpop.f32.mrb[0].mxu0
      %394 = vmatprep.mubr.f32.mxu0 %v246
      %395 = vmatmul.mubr.f32.gmra.mrb[0].mxu0 %v245
      %v396 = vpop.f32.mrb[0].mxu0
      %v397 = vadd.f32 0.0, %v396
      %v398 = vpop.f32.mrb[0].mxu0
      %399 = vmatprep.mubr.f32.mxu0 %v248
      %400 = vmatmul.mubr.f32.gmra.mrb[0].mxu0 %v247
      %v401 = vpop.f32.mrb[0].mxu0
      %v402 = vadd.f32 0.0, %v401
      %v403 = vpop.f32.mrb[0].mxu0
      %404 = vmatprep.mubr.f32.mxu0 %v250
      %405 = vmatmul.mubr.f32.gmra.mrb[0].mxu0 %v249
      %v406 = vpop.f32.mrb[0].mxu0
      %v407 = vadd.f32 0.0, %v406
      %v408 = vpop.f32.mrb[0].mxu0
      %409 = vmatprep.mubr.f32.mxu0 %v252
      %410 = vmatmul.mubr.f32.gmra.mrb[0].mxu0 %v251
      %v411 = vpop.f32.mrb[0].mxu0
      %v412 = vadd.f32 0.0, %v411
      %v413 = vpop.f32.mrb[0].mxu0
      %414 = vmatprep.mubr.f32.mxu0 %v254
      %415 = vmatmul.mubr.f32.gmra.mrb[0].mxu0 %v253
      %v416 = vpop.f32.mrb[0].mxu0
      %v417 = vadd.f32 0.0, %v416
      %v418 = vpop.f32.mrb[0].mxu0
      %419 = vmatprep.mubr.f32.mxu0 %v256
      %420 = vmatmul.mubr.f32.gmra.mrb[0].mxu0 %v255
      %v421 = vpop.f32.mrb[0].mxu0
      %v422 = vadd.f32 0.0, %v421
      %v423 = vpop.f32.mrb[0].mxu0
      %424 = vmatprep.mubr.f32.mxu0 %v258
      %425 = vmatmul.mubr.f32.gmra.mrb[0].mxu0 %v257
      %v426 = vpop.f32.mrb[0].mxu0
      %v427 = vadd.f32 0.0, %v426
      %v428 = vpop.f32.mrb[0].mxu0
      %429 = vmatprep.mubr.f32.mxu0 %v260
      %430 = vmatmul.mubr.f32.gmra.mrb[0].mxu0 %v259
      %v431 = vpop.f32.mrb[0].mxu0
      %v432 = vadd.f32 0.0, %v431
      %v433 = vpop.f32.mrb[0].mxu0
      %434 = vmatprep.mubr.f32.mxu0 %v262
      %435 = vmatmul.mubr.f32.gmra.mrb[0].mxu0 %v261
      %v436 = vpop.f32.mrb[0].mxu0
      %v437 = vadd.f32 0.0, %v436
      %v438 = vpop.f32.mrb[0].mxu0
      %439 = vmatprep.mubr.f32.mxu0 %v264
      %440 = vmatmul.mubr.f32.gmra.mrb[0].mxu0 %v263
      %v441 = vpop.f32.mrb[0].mxu0
      %v442 = vadd.f32 0.0, %v441
      %v443 = vpop.f32.mrb[0].mxu0
      %444 = vmatprep.mubr.f32.mxu0 %v266
      %445 = vmatmul.mubr.f32.gmra.mrb[0].mxu0 %v265
      %v446 = vpop.f32.mrb[0].mxu0
      %v447 = vadd.f32 0.0, %v446
      %v448 = vpop.f32.mrb[0].mxu0
      %449 = vmatprep.mubr.f32.mxu0 %v268
      %450 = vmatmul.mubr.f32.gmra.mrb[0].mxu0 %v267
      %v451 = vpop.f32.mrb[0].mxu0
      %v452 = vadd.f32 0.0, %v451
      %v453 = vpop.f32.mrb[0].mxu0
      %454 = vmatprep.mubr.f32.mxu0 %v270
      %455 = vmatmul.mubr.f32.gmra.mrb[0].mxu0 %v269
      %v456 = vpop.f32.mrb[0].mxu0
      %v457 = vadd.f32 0.0, %v456
      %v458 = vpop.f32.mrb[0].mxu0
      %459 = vmatprep.mubr.f32.mxu0 %v272
      %460 = vmatmul.mubr.f32.gmra.mrb[0].mxu0 %v271
      %v461 = vpop.f32.mrb[0].mxu0
      %v462 = vadd.f32 0.0, %v461
      %v463 = vpop.f32.mrb[0].mxu0
      %464 = vmatprep.mubr.f32.mxu0 %v274
      %465 = vmatmul.mubr.f32.gmra.mrb[0].mxu0 %v273
      %v466 = vpop.f32.mrb[0].mxu0
      %v467 = vadd.f32 0.0, %v466
      %v468 = vpop.f32.mrb[0].mxu0
      %469 = vmatprep.mubr.f32.mxu0 %v276
      %470 = vmatmul.mubr.f32.gmra.mrb[0].mxu0 %v275
      %v471 = vpop.f32.mrb[0].mxu0
      %v472 = vadd.f32 0.0, %v471
      %v473 = vpop.f32.mrb[0].mxu0
      %474 = vmatprep.mubr.f32.mxu0 %v278
      %475 = vmatmul.mubr.f32.gmra.mrb[0].mxu0 %v277
      %v476 = vpop.f32.mrb[0].mxu0
      %v477 = vadd.f32 0.0, %v476
      %v478 = vpop.f32.mrb[0].mxu0
      %479 = vmatprep.mubr.f32.mxu0 %v280
      %480 = vmatmul.mubr.f32.gmra.mrb[0].mxu0 %v279
      %v481 = vpop.f32.mrb[0].mxu0
      %v482 = vadd.f32 0.0, %v481
      %v483 = vpop.f32.mrb[0].mxu0
      %484 = vmatprep.mubr.f32.mxu0 %v282
      %485 = vmatmul.mubr.f32.gmra.mrb[0].mxu0 %v281
      %v486 = vpop.f32.mrb[0].mxu0
      %v487 = vadd.f32 0.0, %v486
      %v488 = vpop.f32.mrb[0].mxu0
      %489 = vmatprep.mubr.f32.mxu0 %v284
      %490 = vmatmul.mubr.f32.gmra.mrb[0].mxu0 %v283
      %v491 = vpop.f32.mrb[0].mxu0
      %v492 = vadd.f32 0.0, %v491
      %v493 = vpop.f32.mrb[0].mxu0
      %494 = vmatprep.mubr.f32.mxu0 %v286
      %495 = vmatmul.mubr.f32.gmra.mrb[0].mxu0 %v285
      %v496 = vpop.f32.mrb[0].mxu0
      %v497 = vadd.f32 0.0, %v496
      %v498 = vpop.f32.mrb[0].mxu0
      %499 = vmatprep.mubr.f32.mxu0 %v288
      %500 = vmatmul.mubr.f32.gmra.mrb[0].mxu0 %v287
      %v501 = vpop.f32.mrb[0].mxu0
      %v502 = vadd.f32 0.0, %v501
      %v503 = vpop.f32.mrb[0].mxu0
      %504 = vmatprep.mubr.f32.mxu0 %v290
      %505 = vmatmul.mubr.f32.gmra.mrb[0].mxu0 %v289
      %v506 = vpop.f32.mrb[0].mxu0
      %v507 = vadd.f32 0.0, %v506
      %v508 = vpop.f32.mrb[0].mxu0
      %509 = vmatprep.mubr.f32.mxu0 %v292
      %510 = vmatmul.mubr.f32.gmra.mrb[0].mxu0 %v291
      %v511 = vpop.f32.mrb[0].mxu0
      %v512 = vadd.f32 0.0, %v511
      %v513 = vpop.f32.mrb[0].mxu0
      %514 = vmatprep.mubr.f32.mxu0 %v294
      %515 = vmatmul.mubr.f32.gmra.mrb[0].mxu0 %v293
      %v516 = vpop.f32.mrb[0].mxu0
      %v517 = vadd.f32 0.0, %v516
      %v518 = vpop.f32.mrb[0].mxu0
      %519 = vdwg.mxu0
      %520 = vmatprep.subr.mxu0 0.0
      %521 = vmatpush1.msra.mxu0 %v362
      %522 = vmatprep.subr.mxu0 0.0
      %523 = vmatpush1.msra.mxu0 %v367
      %524 = vmatprep.subr.mxu0 0.0
      %525 = vmatpush1.msra.mxu0 %v372
      %526 = vmatprep.subr.mxu0 0.0
      %527 = vmatpush1.msra.mxu0 %v377
      %528 = vmatprep.subr.mxu0 0.0
      %529 = vmatpush1.msra.mxu0 %v382
      %530 = vmatprep.subr.mxu0 0.0
      %531 = vmatpush1.msra.mxu0 %v387
      %532 = vmatprep.subr.mxu0 0.0
      %533 = vmatpush1.msra.mxu0 %v392
      %534 = vmatprep.subr.mxu0 0.0
      %535 = vmatpush1.msra.mxu0 %v397
      %536 = vmatprep.subr.mxu0 0.0
      %537 = vmatpush1.msra.mxu0 %v402
      %538 = vmatprep.subr.mxu0 0.0
      %539 = vmatpush1.msra.mxu0 %v407
      %540 = vmatprep.subr.mxu0 0.0
      %541 = vmatpush1.msra.mxu0 %v412
      %542 = vmatprep.subr.mxu0 0.0
      %543 = vmatpush1.msra.mxu0 %v417
      %544 = vmatprep.subr.mxu0 0.0
      %545 = vmatpush1.msra.mxu0 %v422
      %546 = vmatprep.subr.mxu0 0.0
      %547 = vmatpush1.msra.mxu0 %v427
      %548 = vmatprep.subr.mxu0 0.0
      %549 = vmatpush1.msra.mxu0 %v432
      %550 = vmatprep.subr.mxu0 0.0
      %551 = vmatpush1.msra.mxu0 %v437
      %552 = vmatprep.subr.mxu0 0.0
      %553 = vmatpush1.msra.mxu0 %v442
      %554 = vmatprep.subr.mxu0 0.0
      %555 = vmatpush1.msra.mxu0 %v447
      %556 = vmatprep.subr.mxu0 0.0
      %557 = vmatpush1.msra.mxu0 %v452
      %558 = vmatprep.subr.mxu0 0.0
      %559 = vmatpush1.msra.mxu0 %v457
      %560 = vmatprep.subr.mxu0 0.0
      %561 = vmatpush1.msra.mxu0 %v462
      %562 = vmatprep.subr.mxu0 0.0
      %563 = vmatpush1.msra.mxu0 %v467
      %564 = vmatprep.subr.mxu0 0.0
      %565 = vmatpush1.msra.mxu0 %v472
      %566 = vmatprep.subr.mxu0 0.0
      %567 = vmatpush1.msra.mxu0 %v477
      %568 = vmatprep.subr.mxu0 0.0
      %569 = vmatpush1.msra.mxu0 %v482
      %570 = vmatprep.subr.mxu0 0.0
      %571 = vmatpush1.msra.mxu0 %v487
      %572 = vmatprep.subr.mxu0 0.0
      %573 = vmatpush1.msra.mxu0 %v492
      %574 = vmatprep.subr.mxu0 0.0
      %575 = vmatpush1.msra.mxu0 %v497
      %576 = vmatprep.subr.mxu0 0.0
      %577 = vmatpush1.msra.mxu0 %v502
      %578 = vmatprep.subr.mxu0 0.0
      %579 = vmatpush1.msra.mxu0 %v507
      %580 = vmatprep.subr.mxu0 0.0
      %581 = vmatpush1.msra.mxu0 %v512
      %582 = vmatprep.subr.mxu0 0.0
      %583 = vmatpush1.msra.mxu0 %v517
      %584 = vmatprep.mubr.f32.mxu0 %v172
      %585 = vmatmul.mubr.f32.gmra.mrb[0].mxu0 %v171
      %v586 = vpop.f32.mrb[0].mxu0
      %v587 = vadd.f32 0.0, %v586
      %v588 = vpop.f32.mrb[0].mxu0
      %589 = vmatprep.mubr.f32.mxu0 %v174
      %590 = vmatmul.mubr.f32.gmra.mrb[0].mxu0 %v173
      %v591 = vpop.f32.mrb[0].mxu0
      %v592 = vadd.f32 0.0, %v591
      %v593 = vpop.f32.mrb[0].mxu0
      %594 = vmatprep.mubr.f32.mxu0 %v176
      %595 = vmatmul.mubr.f32.gmra.mrb[0].mxu0 %v175
      %v596 = vpop.f32.mrb[0].mxu0
      %v597 = vadd.f32 0.0, %v596
      %v598 = vpop.f32.mrb[0].mxu0
      %599 = vmatprep.mubr.f32.mxu0 %v178
      %600 = vmatmul.mubr.f32.gmra.mrb[0].mxu0 %v177
      %v601 = vpop.f32.mrb[0].mxu0
      %v602 = vadd.f32 0.0, %v601
      %v603 = vpop.f32.mrb[0].mxu0
      %604 = vmatprep.mubr.f32.mxu0 %v180
      %605 = vmatmul.mubr.f32.gmra.mrb[0].mxu0 %v179
      %v606 = vpop.f32.mrb[0].mxu0
      %v607 = vadd.f32 0.0, %v606
      %v608 = vpop.f32.mrb[0].mxu0
      %609 = vmatprep.mubr.f32.mxu0 %v182
      %610 = vmatmul.mubr.f32.gmra.mrb[0].mxu0 %v181
      %v611 = vpop.f32.mrb[0].mxu0
      %v612 = vadd.f32 0.0, %v611
      %v613 = vpop.f32.mrb[0].mxu0
      %614 = vmatprep.mubr.f32.mxu0 %v184
      %615 = vmatmul.mubr.f32.gmra.mrb[0].mxu0 %v183
      %v616 = vpop.f32.mrb[0].mxu0
      %v617 = vadd.f32 0.0, %v616
      %v618 = vpop.f32.mrb[0].mxu0
      %619 = vmatprep.mubr.f32.mxu0 %v186
      %620 = vmatmul.mubr.f32.gmra.mrb[0].mxu0 %v185
      %v621 = vpop.f32.mrb[0].mxu0
      %v622 = vadd.f32 0.0, %v621
      %v623 = vpop.f32.mrb[0].mxu0
      %624 = vmatprep.mubr.f32.mxu0 %v188
      %625 = vmatmul.mubr.f32.gmra.mrb[0].mxu0 %v187
      %v626 = vpop.f32.mrb[0].mxu0
      %v627 = vadd.f32 0.0, %v626
      %v628 = vpop.f32.mrb[0].mxu0
      %629 = vmatprep.mubr.f32.mxu0 %v190
      %630 = vmatmul.mubr.f32.gmra.mrb[0].mxu0 %v189
      %v631 = vpop.f32.mrb[0].mxu0
      %v632 = vadd.f32 0.0, %v631
      %v633 = vpop.f32.mrb[0].mxu0
      %634 = vmatprep.mubr.f32.mxu0 %v192
      %635 = vmatmul.mubr.f32.gmra.mrb[0].mxu0 %v191
      %v636 = vpop.f32.mrb[0].mxu0
      %v637 = vadd.f32 0.0, %v636
      %v638 = vpop.f32.mrb[0].mxu0
      %639 = vmatprep.mubr.f32.mxu0 %v194
      %640 = vmatmul.mubr.f32.gmra.mrb[0].mxu0 %v193
      %v641 = vpop.f32.mrb[0].mxu0
      %v642 = vadd.f32 0.0, %v641
      %v643 = vpop.f32.mrb[0].mxu0
      %644 = vmatprep.mubr.f32.mxu0 %v196
      %645 = vmatmul.mubr.f32.gmra.mrb[0].mxu0 %v195
      %v646 = vpop.f32.mrb[0].mxu0
      %v647 = vadd.f32 0.0, %v646
      %v648 = vpop.f32.mrb[0].mxu0
      %649 = vmatprep.mubr.f32.mxu0 %v198
      %650 = vmatmul.mubr.f32.gmra.mrb[0].mxu0 %v197
      %v651 = vpop.f32.mrb[0].mxu0
      %v652 = vadd.f32 0.0, %v651
      %v653 = vpop.f32.mrb[0].mxu0
      %654 = vdwg.mxu0
      %vm655 = vcmask 916480
      %656 = vst.msk [vmem:[%s170] sm:$0xff] %vm655, %v587
      %657 = vst.msk [vmem:[%s170 + $0x8] sm:$0xff] %vm655, %v592
      %658 = vst.msk [vmem:[%s170 + $0x10] sm:$0xff] %vm655, %v597
      %659 = vst.msk [vmem:[%s170 + $0x18] sm:$0xff] %vm655, %v602
      %660 = vst.msk [vmem:[%s170 + $0x20] sm:$0xff] %vm655, %v607
      %661 = vst.msk [vmem:[%s170 + $0x28] sm:$0xff] %vm655, %v612
      %662 = vst.msk [vmem:[%s170 + $0x30] sm:$0xff] %vm655, %v617
      %663 = vst.msk [vmem:[%s170 + $0x38] sm:$0xff] %vm655, %v622
      %664 = vst.msk [vmem:[%s170 + $0x40] sm:$0xff] %vm655, %v627
      %665 = vst.msk [vmem:[%s170 + $0x48] sm:$0xff] %vm655, %v632
      %666 = vst.msk [vmem:[%s170 + $0x50] sm:$0xff] %vm655, %v637
      %667 = vst.msk [vmem:[%s170 + $0x58] sm:$0xff] %vm655, %v642
      %668 = vst.msk [vmem:[%s170 + $0x60] sm:$0xff] %vm655, %v647
      %669 = vst.msk [vmem:[%s170 + $0x68] sm:$0xff] %vm655, %v652
      %s670 = scalar_lea.vmem %s165, 512
      %v671 = vld [vmem:[%s670] sm:$0xff]
      %v672 = vld [vmem:[%s670 + $0x8] sm:$0xff]
      %v673 = vld [vmem:[%s670 + $0x10] sm:$0xff]
      %v674 = vld [vmem:[%s670 + $0x18] sm:$0xff]
      %v675 = vld [vmem:[%s670 + $0x20] sm:$0xff]
      %v676 = vld [vmem:[%s670 + $0x28] sm:$0xff]
      %v677 = vld [vmem:[%s670 + $0x30] sm:$0xff]
      %v678 = vld [vmem:[%s670 + $0x38] sm:$0xff]
      %v679 = vld [vmem:[%s670 + $0x40] sm:$0xff]
      %v680 = vld [vmem:[%s670 + $0x48] sm:$0xff]
      %v681 = vld [vmem:[%s670 + $0x50] sm:$0xff]
      %v682 = vld [vmem:[%s670 + $0x58] sm:$0xff]
      %v683 = vld [vmem:[%s670 + $0x60] sm:$0xff]
      %v684 = vld [vmem:[%s670 + $0x68] sm:$0xff]
      %v685 = vld [vmem:[%s670 + $0x70] sm:$0xff]
      %v686 = vld [vmem:[%s670 + $0x78] sm:$0xff]
      %v687 = vld [vmem:[%s670 + $0x80] sm:$0xff]
      %v688 = vld [vmem:[%s670 + $0x88] sm:$0xff]
      %v689 = vld [vmem:[%s670 + $0x90] sm:$0xff]
      %v690 = vld [vmem:[%s670 + $0x98] sm:$0xff]
      %v691 = vld [vmem:[%s670 + $0xa0] sm:$0xff]
      %v692 = vld [vmem:[%s670 + $0xa8] sm:$0xff]
      %v693 = vld [vmem:[%s670 + $0xb0] sm:$0xff]
      %v694 = vld [vmem:[%s670 + $0xb8] sm:$0xff]
      %v695 = vld [vmem:[%s670 + $0xc0] sm:$0xff]
      %v696 = vld [vmem:[%s670 + $0xc8] sm:$0xff]
      %v697 = vld [vmem:[%s670 + $0xd0] sm:$0xff]
      %v698 = vld [vmem:[%s670 + $0xd8] sm:$0xff]
      %v699 = vld [vmem:[%s670 + $0xe0] sm:$0xff]
      %v700 = vld [vmem:[%s670 + $0xe8] sm:$0xff]
      %v701 = vld [vmem:[%s670 + $0xf0] sm:$0xff]
      %v702 = vld [vmem:[%s670 + $0xf8] sm:$0xff]
      %v703 = vld [vmem:[%s670 + $0x100] sm:$0xff]
      %v704 = vld [vmem:[%s670 + $0x108] sm:$0xff]
      %v705 = vld [vmem:[%s670 + $0x110] sm:$0xff]
      %v706 = vld [vmem:[%s670 + $0x118] sm:$0xff]
      %v707 = vld [vmem:[%s670 + $0x120] sm:$0xff]
      %v708 = vld [vmem:[%s670 + $0x128] sm:$0xff]
      %v709 = vld [vmem:[%s670 + $0x130] sm:$0xff]
      %v710 = vld [vmem:[%s670 + $0x138] sm:$0xff]
      %v711 = vld [vmem:[%s670 + $0x140] sm:$0xff]
      %v712 = vld [vmem:[%s670 + $0x148] sm:$0xff]
      %v713 = vld [vmem:[%s670 + $0x150] sm:$0xff]
      %v714 = vld [vmem:[%s670 + $0x158] sm:$0xff]
      %v715 = vld [vmem:[%s670 + $0x160] sm:$0xff]
      %v716 = vld [vmem:[%s670 + $0x168] sm:$0xff]
      %v717 = vld [vmem:[%s670 + $0x170] sm:$0xff]
      %v718 = vld [vmem:[%s670 + $0x178] sm:$0xff]
      %v719 = vld [vmem:[%s670 + $0x180] sm:$0xff]
      %v720 = vld [vmem:[%s670 + $0x188] sm:$0xff]
      %v721 = vld [vmem:[%s670 + $0x190] sm:$0xff]
      %v722 = vld [vmem:[%s670 + $0x198] sm:$0xff]
      %v723 = vld [vmem:[%s670 + $0x1a0] sm:$0xff]
      %v724 = vld [vmem:[%s670 + $0x1a8] sm:$0xff]
      %v725 = vld [vmem:[%s670 + $0x1b0] sm:$0xff]
      %v726 = vld [vmem:[%s670 + $0x1b8] sm:$0xff]
      %v727 = vld [vmem:[%s670 + $0x1c0] sm:$0xff]
      %v728 = vld [vmem:[%s670 + $0x1c8] sm:$0xff]
      %v729 = vld [vmem:[%s670 + $0x1d0] sm:$0xff]
      %v730 = vld [vmem:[%s670 + $0x1d8] sm:$0xff]
      %v731 = vld [vmem:[%s670 + $0x1e0] sm:$0xff]
      %v732 = vld [vmem:[%s670 + $0x1e8] sm:$0xff]
      %v733 = vld [vmem:[%s670 + $0x1f0] sm:$0xff]
      %v734 = vld [vmem:[%s670 + $0x1f8] sm:$0xff]
      %735 = vmatprep.subr.mxu0 0.0
      %736 = vmatpush1.msra.mxu0 %v199
      %737 = vmatprep.subr.mxu0 0.0
      %738 = vmatpush1.msra.mxu0 %v200
      %739 = vmatprep.subr.mxu0 0.0
      %740 = vmatpush1.msra.mxu0 %v201
      %741 = vmatprep.subr.mxu0 0.0
      %742 = vmatpush1.msra.mxu0 %v202
      %743 = vmatprep.subr.mxu0 0.0
      %744 = vmatpush1.msra.mxu0 %v203
      %745 = vmatprep.subr.mxu0 0.0
      %746 = vmatpush1.msra.mxu0 %v204
      %747 = vmatprep.subr.mxu0 0.0
      %748 = vmatpush1.msra.mxu0 %v205
      %749 = vmatprep.subr.mxu0 0.0
      %750 = vmatpush1.msra.mxu0 %v206
      %751 = vmatprep.subr.mxu0 0.0
      %752 = vmatpush1.msra.mxu0 %v207
      %753 = vmatprep.subr.mxu0 0.0
      %754 = vmatpush1.msra.mxu0 %v208
      %755 = vmatprep.subr.mxu0 0.0
      %756 = vmatpush1.msra.mxu0 %v209
      %757 = vmatprep.subr.mxu0 0.0
      %758 = vmatpush1.msra.mxu0 %v210
      %759 = vmatprep.subr.mxu0 0.0
      %760 = vmatpush1.msra.mxu0 %v211
      %761 = vmatprep.subr.mxu0 0.0
      %762 = vmatpush1.msra.mxu0 %v212
      %763 = vmatprep.subr.mxu0 0.0
      %764 = vmatpush1.msra.mxu0 %v213
      %765 = vmatprep.subr.mxu0 0.0
      %766 = vmatpush1.msra.mxu0 %v214
      %767 = vmatprep.subr.mxu0 0.0
      %768 = vmatpush1.msra.mxu0 %v215
      %769 = vmatprep.subr.mxu0 0.0
      %770 = vmatpush1.msra.mxu0 %v216
      %771 = vmatprep.subr.mxu0 0.0
      %772 = vmatpush1.msra.mxu0 %v217
      %773 = vmatprep.subr.mxu0 0.0
      %774 = vmatpush1.msra.mxu0 %v218
      %775 = vmatprep.subr.mxu0 0.0
      %776 = vmatpush1.msra.mxu0 %v219
      %777 = vmatprep.subr.mxu0 0.0
      %778 = vmatpush1.msra.mxu0 %v220
      %779 = vmatprep.subr.mxu0 0.0
      %780 = vmatpush1.msra.mxu0 %v221
      %781 = vmatprep.subr.mxu0 0.0
      %782 = vmatpush1.msra.mxu0 %v222
      %783 = vmatprep.subr.mxu0 0.0
      %784 = vmatpush1.msra.mxu0 %v223
      %785 = vmatprep.subr.mxu0 0.0
      %786 = vmatpush1.msra.mxu0 %v224
      %787 = vmatprep.subr.mxu0 0.0
      %788 = vmatpush1.msra.mxu0 %v225
      %789 = vmatprep.subr.mxu0 0.0
      %790 = vmatpush1.msra.mxu0 %v226
      %791 = vmatprep.subr.mxu0 0.0
      %792 = vmatpush1.msra.mxu0 %v227
      %793 = vmatprep.subr.mxu0 0.0
      %794 = vmatpush1.msra.mxu0 %v228
      %795 = vmatprep.subr.mxu0 0.0
      %796 = vmatpush1.msra.mxu0 %v229
      %797 = vmatprep.subr.mxu0 0.0
      %798 = vmatpush1.msra.mxu0 %v230
      %799 = vmatprep.mubr.f32.mxu0 %v672
      %800 = vmatmul.mubr.f32.gmra.mrb[0].mxu0 %v671
      %v801 = vpop.f32.mrb[0].mxu0
      %v802 = vadd.f32 0.0, %v801
      %v803 = vpop.f32.mrb[0].mxu0
      %804 = vmatprep.mubr.f32.mxu0 %v674
      %805 = vmatmul.mubr.f32.gmra.mrb[0].mxu0 %v673
      %v806 = vpop.f32.mrb[0].mxu0
      %v807 = vadd.f32 0.0, %v806
      %v808 = vpop.f32.mrb[0].mxu0
      %809 = vmatprep.mubr.f32.mxu0 %v676
      %810 = vmatmul.mubr.f32.gmra.mrb[0].mxu0 %v675
      %v811 = vpop.f32.mrb[0].mxu0
      %v812 = vadd.f32 0.0, %v811
      %v813 = vpop.f32.mrb[0].mxu0
      %814 = vmatprep.mubr.f32.mxu0 %v678
      %815 = vmatmul.mubr.f32.gmra.mrb[0].mxu0 %v677
      %v816 = vpop.f32.mrb[0].mxu0
      %v817 = vadd.f32 0.0, %v816
      %v818 = vpop.f32.mrb[0].mxu0
      %819 = vmatprep.mubr.f32.mxu0 %v680
      %820 = vmatmul.mubr.f32.gmra.mrb[0].mxu0 %v679
      %v821 = vpop.f32.mrb[0].mxu0
      %v822 = vadd.f32 0.0, %v821
      %v823 = vpop.f32.mrb[0].mxu0
      %824 = vmatprep.mubr.f32.mxu0 %v682
      %825 = vmatmul.mubr.f32.gmra.mrb[0].mxu0 %v681
      %v826 = vpop.f32.mrb[0].mxu0
      %v827 = vadd.f32 0.0, %v826
      %v828 = vpop.f32.mrb[0].mxu0
      %829 = vmatprep.mubr.f32.mxu0 %v684
      %830 = vmatmul.mubr.f32.gmra.mrb[0].mxu0 %v683
      %v831 = vpop.f32.mrb[0].mxu0
      %v832 = vadd.f32 0.0, %v831
      %v833 = vpop.f32.mrb[0].mxu0
      %834 = vmatprep.mubr.f32.mxu0 %v686
      %835 = vmatmul.mubr.f32.gmra.mrb[0].mxu0 %v685
      %v836 = vpop.f32.mrb[0].mxu0
      %v837 = vadd.f32 0.0, %v836
      %v838 = vpop.f32.mrb[0].mxu0
      %839 = vmatprep.mubr.f32.mxu0 %v688
      %840 = vmatmul.mubr.f32.gmra.mrb[0].mxu0 %v687
      %v841 = vpop.f32.mrb[0].mxu0
      %v842 = vadd.f32 0.0, %v841
      %v843 = vpop.f32.mrb[0].mxu0
      %844 = vmatprep.mubr.f32.mxu0 %v690
      %845 = vmatmul.mubr.f32.gmra.mrb[0].mxu0 %v689
      %v846 = vpop.f32.mrb[0].mxu0
      %v847 = vadd.f32 0.0, %v846
      %v848 = vpop.f32.mrb[0].mxu0
      %849 = vmatprep.mubr.f32.mxu0 %v692
      %850 = vmatmul.mubr.f32.gmra.mrb[0].mxu0 %v691
      %v851 = vpop.f32.mrb[0].mxu0
      %v852 = vadd.f32 0.0, %v851
      %v853 = vpop.f32.mrb[0].mxu0
      %854 = vmatprep.mubr.f32.mxu0 %v694
      %855 = vmatmul.mubr.f32.gmra.mrb[0].mxu0 %v693
      %v856 = vpop.f32.mrb[0].mxu0
      %v857 = vadd.f32 0.0, %v856
      %v858 = vpop.f32.mrb[0].mxu0
      %859 = vmatprep.mubr.f32.mxu0 %v696
      %860 = vmatmul.mubr.f32.gmra.mrb[0].mxu0 %v695
      %v861 = vpop.f32.mrb[0].mxu0
      %v862 = vadd.f32 0.0, %v861
      %v863 = vpop.f32.mrb[0].mxu0
      %864 = vmatprep.mubr.f32.mxu0 %v698
      %865 = vmatmul.mubr.f32.gmra.mrb[0].mxu0 %v697
      %v866 = vpop.f32.mrb[0].mxu0
      %v867 = vadd.f32 0.0, %v866
      %v868 = vpop.f32.mrb[0].mxu0
      %869 = vmatprep.mubr.f32.mxu0 %v700
      %870 = vmatmul.mubr.f32.gmra.mrb[0].mxu0 %v699
      %v871 = vpop.f32.mrb[0].mxu0
      %v872 = vadd.f32 0.0, %v871
      %v873 = vpop.f32.mrb[0].mxu0
      %874 = vmatprep.mubr.f32.mxu0 %v702
      %875 = vmatmul.mubr.f32.gmra.mrb[0].mxu0 %v701
      %v876 = vpop.f32.mrb[0].mxu0
      %v877 = vadd.f32 0.0, %v876
      %v878 = vpop.f32.mrb[0].mxu0
      %879 = vmatprep.mubr.f32.mxu0 %v704
      %880 = vmatmul.mubr.f32.gmra.mrb[0].mxu0 %v703
      %v881 = vpop.f32.mrb[0].mxu0
      %v882 = vadd.f32 0.0, %v881
      %v883 = vpop.f32.mrb[0].mxu0
      %884 = vmatprep.mubr.f32.mxu0 %v706
      %885 = vmatmul.mubr.f32.gmra.mrb[0].mxu0 %v705
      %v886 = vpop.f32.mrb[0].mxu0
      %v887 = vadd.f32 0.0, %v886
      %v888 = vpop.f32.mrb[0].mxu0
      %889 = vmatprep.mubr.f32.mxu0 %v708
      %890 = vmatmul.mubr.f32.gmra.mrb[0].mxu0 %v707
      %v891 = vpop.f32.mrb[0].mxu0
      %v892 = vadd.f32 0.0, %v891
      %v893 = vpop.f32.mrb[0].mxu0
      %894 = vmatprep.mubr.f32.mxu0 %v710
      %895 = vmatmul.mubr.f32.gmra.mrb[0].mxu0 %v709
      %v896 = vpop.f32.mrb[0].mxu0
      %v897 = vadd.f32 0.0, %v896
      %v898 = vpop.f32.mrb[0].mxu0
      %899 = vmatprep.mubr.f32.mxu0 %v712
      %900 = vmatmul.mubr.f32.gmra.mrb[0].mxu0 %v711
      %v901 = vpop.f32.mrb[0].mxu0
      %v902 = vadd.f32 0.0, %v901
      %v903 = vpop.f32.mrb[0].mxu0
      %904 = vmatprep.mubr.f32.mxu0 %v714
      %905 = vmatmul.mubr.f32.gmra.mrb[0].mxu0 %v713
      %v906 = vpop.f32.mrb[0].mxu0
      %v907 = vadd.f32 0.0, %v906
      %v908 = vpop.f32.mrb[0].mxu0
      %909 = vmatprep.mubr.f32.mxu0 %v716
      %910 = vmatmul.mubr.f32.gmra.mrb[0].mxu0 %v715
      %v911 = vpop.f32.mrb[0].mxu0
      %v912 = vadd.f32 0.0, %v911
      %v913 = vpop.f32.mrb[0].mxu0
      %914 = vmatprep.mubr.f32.mxu0 %v718
      %915 = vmatmul.mubr.f32.gmra.mrb[0].mxu0 %v717
      %v916 = vpop.f32.mrb[0].mxu0
      %v917 = vadd.f32 0.0, %v916
      %v918 = vpop.f32.mrb[0].mxu0
      %919 = vmatprep.mubr.f32.mxu0 %v720
      %920 = vmatmul.mubr.f32.gmra.mrb[0].mxu0 %v719
      %v921 = vpop.f32.mrb[0].mxu0
      %v922 = vadd.f32 0.0, %v921
      %v923 = vpop.f32.mrb[0].mxu0
      %924 = vmatprep.mubr.f32.mxu0 %v722
      %925 = vmatmul.mubr.f32.gmra.mrb[0].mxu0 %v721
      %v926 = vpop.f32.mrb[0].mxu0
      %v927 = vadd.f32 0.0, %v926
      %v928 = vpop.f32.mrb[0].mxu0
      %929 = vmatprep.mubr.f32.mxu0 %v724
      %930 = vmatmul.mubr.f32.gmra.mrb[0].mxu0 %v723
      %v931 = vpop.f32.mrb[0].mxu0
      %v932 = vadd.f32 0.0, %v931
      %v933 = vpop.f32.mrb[0].mxu0
      %934 = vmatprep.mubr.f32.mxu0 %v726
      %935 = vmatmul.mubr.f32.gmra.mrb[0].mxu0 %v725
      %v936 = vpop.f32.mrb[0].mxu0
      %v937 = vadd.f32 0.0, %v936
      %v938 = vpop.f32.mrb[0].mxu0
      %939 = vmatprep.mubr.f32.mxu0 %v728
      %940 = vmatmul.mubr.f32.gmra.mrb[0].mxu0 %v727
      %v941 = vpop.f32.mrb[0].mxu0
      %v942 = vadd.f32 0.0, %v941
      %v943 = vpop.f32.mrb[0].mxu0
      %944 = vmatprep.mubr.f32.mxu0 %v730
      %945 = vmatmul.mubr.f32.gmra.mrb[0].mxu0 %v729
      %v946 = vpop.f32.mrb[0].mxu0
      %v947 = vadd.f32 0.0, %v946
      %v948 = vpop.f32.mrb[0].mxu0
      %949 = vmatprep.mubr.f32.mxu0 %v732
      %950 = vmatmul.mubr.f32.gmra.mrb[0].mxu0 %v731
      %v951 = vpop.f32.mrb[0].mxu0
      %v952 = vadd.f32 0.0, %v951
      %v953 = vpop.f32.mrb[0].mxu0
      %954 = vmatprep.mubr.f32.mxu0 %v734
      %955 = vmatmul.mubr.f32.gmra.mrb[0].mxu0 %v733
      %v956 = vpop.f32.mrb[0].mxu0
      %v957 = vadd.f32 0.0, %v956
      %v958 = vpop.f32.mrb[0].mxu0
      %959 = vdwg.mxu0
      %960 = vmatprep.subr.mxu0 0.0
      %961 = vmatpush1.msra.mxu0 %v802
      %962 = vmatprep.subr.mxu0 0.0
      %963 = vmatpush1.msra.mxu0 %v807
      %964 = vmatprep.subr.mxu0 0.0
      %965 = vmatpush1.msra.mxu0 %v812
      %966 = vmatprep.subr.mxu0 0.0
      %967 = vmatpush1.msra.mxu0 %v817
      %968 = vmatprep.subr.mxu0 0.0
      %969 = vmatpush1.msra.mxu0 %v822
      %970 = vmatprep.subr.mxu0 0.0
      %971 = vmatpush1.msra.mxu0 %v827
      %972 = vmatprep.subr.mxu0 0.0
      %973 = vmatpush1.msra.mxu0 %v832
      %974 = vmatprep.subr.mxu0 0.0
      %975 = vmatpush1.msra.mxu0 %v837
      %976 = vmatprep.subr.mxu0 0.0
      %977 = vmatpush1.msra.mxu0 %v842
      %978 = vmatprep.subr.mxu0 0.0
      %979 = vmatpush1.msra.mxu0 %v847
      %980 = vmatprep.subr.mxu0 0.0
      %981 = vmatpush1.msra.mxu0 %v852
      %982 = vmatprep.subr.mxu0 0.0
      %983 = vmatpush1.msra.mxu0 %v857
      %984 = vmatprep.subr.mxu0 0.0
      %985 = vmatpush1.msra.mxu0 %v862
      %986 = vmatprep.subr.mxu0 0.0
      %987 = vmatpush1.msra.mxu0 %v867
      %988 = vmatprep.subr.mxu0 0.0
      %989 = vmatpush1.msra.mxu0 %v872
      %990 = vmatprep.subr.mxu0 0.0
      %991 = vmatpush1.msra.mxu0 %v877
      %992 = vmatprep.subr.mxu0 0.0
      %993 = vmatpush1.msra.mxu0 %v882
      %994 = vmatprep.subr.mxu0 0.0
      %995 = vmatpush1.msra.mxu0 %v887
      %996 = vmatprep.subr.mxu0 0.0
      %997 = vmatpush1.msra.mxu0 %v892
      %998 = vmatprep.subr.mxu0 0.0
      %999 = vmatpush1.msra.mxu0 %v897
      %1000 = vmatprep.subr.mxu0 0.0
      %1001 = vmatpush1.msra.mxu0 %v902
      %1002 = vmatprep.subr.mxu0 0.0
      %1003 = vmatpush1.msra.mxu0 %v907
      %1004 = vmatprep.subr.mxu0 0.0
      %1005 = vmatpush1.msra.mxu0 %v912
      %1006 = vmatprep.subr.mxu0 0.0
      %1007 = vmatpush1.msra.mxu0 %v917
      %1008 = vmatprep.subr.mxu0 0.0
      %1009 = vmatpush1.msra.mxu0 %v922
      %1010 = vmatprep.subr.mxu0 0.0
      %1011 = vmatpush1.msra.mxu0 %v927
      %1012 = vmatprep.subr.mxu0 0.0
      %1013 = vmatpush1.msra.mxu0 %v932
      %1014 = vmatprep.subr.mxu0 0.0
      %1015 = vmatpush1.msra.mxu0 %v937
      %1016 = vmatprep.subr.mxu0 0.0
      %1017 = vmatpush1.msra.mxu0 %v942
      %1018 = vmatprep.subr.mxu0 0.0
      %1019 = vmatpush1.msra.mxu0 %v947
      %1020 = vmatprep.subr.mxu0 0.0
      %1021 = vmatpush1.msra.mxu0 %v952
      %1022 = vmatprep.subr.mxu0 0.0
      %1023 = vmatpush1.msra.mxu0 %v957
      %1024 = vmatprep.mubr.f32.mxu0 %v172
      %1025 = vmatmul.mubr.f32.gmra.mrb[0].mxu0 %v171
      %v1026 = vpop.f32.mrb[0].mxu0
      %v1027 = vadd.f32 0.0, %v1026
      %v1028 = vpop.f32.mrb[0].mxu0
      %1029 = vmatprep.mubr.f32.mxu0 %v174
      %1030 = vmatmul.mubr.f32.gmra.mrb[0].mxu0 %v173
      %v1031 = vpop.f32.mrb[0].mxu0
      %v1032 = vadd.f32 0.0, %v1031
      %v1033 = vpop.f32.mrb[0].mxu0
      %1034 = vmatprep.mubr.f32.mxu0 %v176
      %1035 = vmatmul.mubr.f32.gmra.mrb[0].mxu0 %v175
      %v1036 = vpop.f32.mrb[0].mxu0
      %v1037 = vadd.f32 0.0, %v1036
      %v1038 = vpop.f32.mrb[0].mxu0
      %1039 = vmatprep.mubr.f32.mxu0 %v178
      %1040 = vmatmul.mubr.f32.gmra.mrb[0].mxu0 %v177
      %v1041 = vpop.f32.mrb[0].mxu0
      %v1042 = vadd.f32 0.0, %v1041
      %v1043 = vpop.f32.mrb[0].mxu0
      %1044 = vmatprep.mubr.f32.mxu0 %v180
      %1045 = vmatmul.mubr.f32.gmra.mrb[0].mxu0 %v179
      %v1046 = vpop.f32.mrb[0].mxu0
      %v1047 = vadd.f32 0.0, %v1046
      %v1048 = vpop.f32.mrb[0].mxu0
      %1049 = vmatprep.mubr.f32.mxu0 %v182
      %1050 = vmatmul.mubr.f32.gmra.mrb[0].mxu0 %v181
      %v1051 = vpop.f32.mrb[0].mxu0
      %v1052 = vadd.f32 0.0, %v1051
      %v1053 = vpop.f32.mrb[0].mxu0
      %1054 = vmatprep.mubr.f32.mxu0 %v184
      %1055 = vmatmul.mubr.f32.gmra.mrb[0].mxu0 %v183
      %v1056 = vpop.f32.mrb[0].mxu0
      %v1057 = vadd.f32 0.0, %v1056
      %v1058 = vpop.f32.mrb[0].mxu0
      %1059 = vmatprep.mubr.f32.mxu0 %v186
      %1060 = vmatmul.mubr.f32.gmra.mrb[0].mxu0 %v185
      %v1061 = vpop.f32.mrb[0].mxu0
      %v1062 = vadd.f32 0.0, %v1061
      %v1063 = vpop.f32.mrb[0].mxu0
      %1064 = vmatprep.mubr.f32.mxu0 %v188
      %1065 = vmatmul.mubr.f32.gmra.mrb[0].mxu0 %v187
      %v1066 = vpop.f32.mrb[0].mxu0
      %v1067 = vadd.f32 0.0, %v1066
      %v1068 = vpop.f32.mrb[0].mxu0
      %1069 = vmatprep.mubr.f32.mxu0 %v190
      %1070 = vmatmul.mubr.f32.gmra.mrb[0].mxu0 %v189
      %v1071 = vpop.f32.mrb[0].mxu0
      %v1072 = vadd.f32 0.0, %v1071
      %v1073 = vpop.f32.mrb[0].mxu0
      %1074 = vmatprep.mubr.f32.mxu0 %v192
      %1075 = vmatmul.mubr.f32.gmra.mrb[0].mxu0 %v191
      %v1076 = vpop.f32.mrb[0].mxu0
      %v1077 = vadd.f32 0.0, %v1076
      %v1078 = vpop.f32.mrb[0].mxu0
      %1079 = vmatprep.mubr.f32.mxu0 %v194
      %1080 = vmatmul.mubr.f32.gmra.mrb[0].mxu0 %v193
      %v1081 = vpop.f32.mrb[0].mxu0
      %v1082 = vadd.f32 0.0, %v1081
      %v1083 = vpop.f32.mrb[0].mxu0
      %1084 = vmatprep.mubr.f32.mxu0 %v196
      %1085 = vmatmul.mubr.f32.gmra.mrb[0].mxu0 %v195
      %v1086 = vpop.f32.mrb[0].mxu0
      %v1087 = vadd.f32 0.0, %v1086
      %v1088 = vpop.f32.mrb[0].mxu0
      %1089 = vmatprep.mubr.f32.mxu0 %v198
      %1090 = vmatmul.mubr.f32.gmra.mrb[0].mxu0 %v197
      %v1091 = vpop.f32.mrb[0].mxu0
      %v1092 = vadd.f32 0.0, %v1091
      %v1093 = vpop.f32.mrb[0].mxu0
      %1094 = vdwg.mxu0
      %s1095 = scalar_lea.vmem %s170, 112
      %1096 = vst.msk [vmem:[%s1095] sm:$0xff] %vm655, %v1027
      %1097 = vst.msk [vmem:[%s1095 + $0x8] sm:$0xff] %vm655, %v1032
      %1098 = vst.msk [vmem:[%s1095 + $0x10] sm:$0xff] %vm655, %v1037
      %1099 = vst.msk [vmem:[%s1095 + $0x18] sm:$0xff] %vm655, %v1042
      %1100 = vst.msk [vmem:[%s1095 + $0x20] sm:$0xff] %vm655, %v1047
      %1101 = vst.msk [vmem:[%s1095 + $0x28] sm:$0xff] %vm655, %v1052
      %1102 = vst.msk [vmem:[%s1095 + $0x30] sm:$0xff] %vm655, %v1057
      %1103 = vst.msk [vmem:[%s1095 + $0x38] sm:$0xff] %vm655, %v1062
      %1104 = vst.msk [vmem:[%s1095 + $0x40] sm:$0xff] %vm655, %v1067
      %1105 = vst.msk [vmem:[%s1095 + $0x48] sm:$0xff] %vm655, %v1072
      %1106 = vst.msk [vmem:[%s1095 + $0x50] sm:$0xff] %vm655, %v1077
      %1107 = vst.msk [vmem:[%s1095 + $0x58] sm:$0xff] %vm655, %v1082
      %1108 = vst.msk [vmem:[%s1095 + $0x60] sm:$0xff] %vm655, %v1087
      %1109 = vst.msk [vmem:[%s1095 + $0x68] sm:$0xff] %vm655, %v1092
      %s1110 = scalar_lea.vmem %s165, 1024
      %v1111 = vld [vmem:[%s1110] sm:$0xff]
      %v1112 = vld [vmem:[%s1110 + $0x8] sm:$0xff]
      %v1113 = vld [vmem:[%s1110 + $0x10] sm:$0xff]
      %v1114 = vld [vmem:[%s1110 + $0x18] sm:$0xff]
      %v1115 = vld [vmem:[%s1110 + $0x20] sm:$0xff]
      %v1116 = vld [vmem:[%s1110 + $0x28] sm:$0xff]
      %v1117 = vld [vmem:[%s1110 + $0x30] sm:$0xff]
      %v1118 = vld [vmem:[%s1110 + $0x38] sm:$0xff]
      %v1119 = vld [vmem:[%s1110 + $0x40] sm:$0xff]
      %v1120 = vld [vmem:[%s1110 + $0x48] sm:$0xff]
      %v1121 = vld [vmem:[%s1110 + $0x50] sm:$0xff]
      %v1122 = vld [vmem:[%s1110 + $0x58] sm:$0xff]
      %v1123 = vld [vmem:[%s1110 + $0x60] sm:$0xff]
      %v1124 = vld [vmem:[%s1110 + $0x68] sm:$0xff]
      %v1125 = vld [vmem:[%s1110 + $0x70] sm:$0xff]
      %v1126 = vld [vmem:[%s1110 + $0x78] sm:$0xff]
      %v1127 = vld [vmem:[%s1110 + $0x80] sm:$0xff]
      %v1128 = vld [vmem:[%s1110 + $0x88] sm:$0xff]
      %v1129 = vld [vmem:[%s1110 + $0x90] sm:$0xff]
      %v1130 = vld [vmem:[%s1110 + $0x98] sm:$0xff]
      %v1131 = vld [vmem:[%s1110 + $0xa0] sm:$0xff]
      %v1132 = vld [vmem:[%s1110 + $0xa8] sm:$0xff]
      %v1133 = vld [vmem:[%s1110 + $0xb0] sm:$0xff]
      %v1134 = vld [vmem:[%s1110 + $0xb8] sm:$0xff]
      %v1135 = vld [vmem:[%s1110 + $0xc0] sm:$0xff]
      %v1136 = vld [vmem:[%s1110 + $0xc8] sm:$0xff]
      %v1137 = vld [vmem:[%s1110 + $0xd0] sm:$0xff]
      %v1138 = vld [vmem:[%s1110 + $0xd8] sm:$0xff]
      %v1139 = vld [vmem:[%s1110 + $0xe0] sm:$0xff]
      %v1140 = vld [vmem:[%s1110 + $0xe8] sm:$0xff]
      %v1141 = vld [vmem:[%s1110 + $0xf0] sm:$0xff]
      %v1142 = vld [vmem:[%s1110 + $0xf8] sm:$0xff]
      %v1143 = vld [vmem:[%s1110 + $0x100] sm:$0xff]
      %v1144 = vld [vmem:[%s1110 + $0x108] sm:$0xff]
      %v1145 = vld [vmem:[%s1110 + $0x110] sm:$0xff]
      %v1146 = vld [vmem:[%s1110 + $0x118] sm:$0xff]
      %v1147 = vld [vmem:[%s1110 + $0x120] sm:$0xff]
      %v1148 = vld [vmem:[%s1110 + $0x128] sm:$0xff]
      %v1149 = vld [vmem:[%s1110 + $0x130] sm:$0xff]
      %v1150 = vld [vmem:[%s1110 + $0x138] sm:$0xff]
      %v1151 = vld [vmem:[%s1110 + $0x140] sm:$0xff]
      %v1152 = vld [vmem:[%s1110 + $0x148] sm:$0xff]
      %v1153 = vld [vmem:[%s1110 + $0x150] sm:$0xff]
      %v1154 = vld [vmem:[%s1110 + $0x158] sm:$0xff]
      %v1155 = vld [vmem:[%s1110 + $0x160] sm:$0xff]
      %v1156 = vld [vmem:[%s1110 + $0x168] sm:$0xff]
      %v1157 = vld [vmem:[%s1110 + $0x170] sm:$0xff]
      %v1158 = vld [vmem:[%s1110 + $0x178] sm:$0xff]
      %v1159 = vld [vmem:[%s1110 + $0x180] sm:$0xff]
      %v1160 = vld [vmem:[%s1110 + $0x188] sm:$0xff]
      %v1161 = vld [vmem:[%s1110 + $0x190] sm:$0xff]
      %v1162 = vld [vmem:[%s1110 + $0x198] sm:$0xff]
      %v1163 = vld [vmem:[%s1110 + $0x1a0] sm:$0xff]
      %v1164 = vld [vmem:[%s1110 + $0x1a8] sm:$0xff]
      %v1165 = vld [vmem:[%s1110 + $0x1b0] sm:$0xff]
      %v1166 = vld [vmem:[%s1110 + $0x1b8] sm:$0xff]
      %v1167 = vld [vmem:[%s1110 + $0x1c0] sm:$0xff]
      %v1168 = vld [vmem:[%s1110 + $0x1c8] sm:$0xff]
      %v1169 = vld [vmem:[%s1110 + $0x1d0] sm:$0xff]
      %v1170 = vld [vmem:[%s1110 + $0x1d8] sm:$0xff]
      %v1171 = vld [vmem:[%s1110 + $0x1e0] sm:$0xff]
      %v1172 = vld [vmem:[%s1110 + $0x1e8] sm:$0xff]
      %v1173 = vld [vmem:[%s1110 + $0x1f0] sm:$0xff]
      %v1174 = vld [vmem:[%s1110 + $0x1f8] sm:$0xff]
      %1175 = vmatprep.subr.mxu0 0.0
      %1176 = vmatpush1.msra.mxu0 %v199
      %1177 = vmatprep.subr.mxu0 0.0
      %1178 = vmatpush1.msra.mxu0 %v200
      %1179 = vmatprep.subr.mxu0 0.0
      %1180 = vmatpush1.msra.mxu0 %v201
      %1181 = vmatprep.subr.mxu0 0.0
      %1182 = vmatpush1.msra.mxu0 %v202
      %1183 = vmatprep.subr.mxu0 0.0
      %1184 = vmatpush1.msra.mxu0 %v203
      %1185 = vmatprep.subr.mxu0 0.0
      %1186 = vmatpush1.msra.mxu0 %v204
      %1187 = vmatprep.subr.mxu0 0.0
      %1188 = vmatpush1.msra.mxu0 %v205
      %1189 = vmatprep.subr.mxu0 0.0
      %1190 = vmatpush1.msra.mxu0 %v206
      %1191 = vmatprep.subr.mxu0 0.0
      %1192 = vmatpush1.msra.mxu0 %v207
      %1193 = vmatprep.subr.mxu0 0.0
      %1194 = vmatpush1.msra.mxu0 %v208
      %1195 = vmatprep.subr.mxu0 0.0
      %1196 = vmatpush1.msra.mxu0 %v209
      %1197 = vmatprep.subr.mxu0 0.0
      %1198 = vmatpush1.msra.mxu0 %v210
      %1199 = vmatprep.subr.mxu0 0.0
      %1200 = vmatpush1.msra.mxu0 %v211
      %1201 = vmatprep.subr.mxu0 0.0
      %1202 = vmatpush1.msra.mxu0 %v212
      %1203 = vmatprep.subr.mxu0 0.0
      %1204 = vmatpush1.msra.mxu0 %v213
      %1205 = vmatprep.subr.mxu0 0.0
      %1206 = vmatpush1.msra.mxu0 %v214
      %1207 = vmatprep.subr.mxu0 0.0
      %1208 = vmatpush1.msra.mxu0 %v215
      %1209 = vmatprep.subr.mxu0 0.0
      %1210 = vmatpush1.msra.mxu0 %v216
      %1211 = vmatprep.subr.mxu0 0.0
      %1212 = vmatpush1.msra.mxu0 %v217
      %1213 = vmatprep.subr.mxu0 0.0
      %1214 = vmatpush1.msra.mxu0 %v218
      %1215 = vmatprep.subr.mxu0 0.0
      %1216 = vmatpush1.msra.mxu0 %v219
      %1217 = vmatprep.subr.mxu0 0.0
      %1218 = vmatpush1.msra.mxu0 %v220
      %1219 = vmatprep.subr.mxu0 0.0
      %1220 = vmatpush1.msra.mxu0 %v221
      %1221 = vmatprep.subr.mxu0 0.0
      %1222 = vmatpush1.msra.mxu0 %v222
      %1223 = vmatprep.subr.mxu0 0.0
      %1224 = vmatpush1.msra.mxu0 %v223
      %1225 = vmatprep.subr.mxu0 0.0
      %1226 = vmatpush1.msra.mxu0 %v224
      %1227 = vmatprep.subr.mxu0 0.0
      %1228 = vmatpush1.msra.mxu0 %v225
      %1229 = vmatprep.subr.mxu0 0.0
      %1230 = vmatpush1.msra.mxu0 %v226
      %1231 = vmatprep.subr.mxu0 0.0
      %1232 = vmatpush1.msra.mxu0 %v227
      %1233 = vmatprep.subr.mxu0 0.0
      %1234 = vmatpush1.msra.mxu0 %v228
      %1235 = vmatprep.subr.mxu0 0.0
      %1236 = vmatpush1.msra.mxu0 %v229
      %1237 = vmatprep.subr.mxu0 0.0
      %1238 = vmatpush1.msra.mxu0 %v230
      %1239 = vmatprep.mubr.f32.mxu0 %v1112
      %1240 = vmatmul.mubr.f32.gmra.mrb[0].mxu0 %v1111
      %v1241 = vpop.f32.mrb[0].mxu0
      %v1242 = vadd.f32 0.0, %v1241
      %v1243 = vpop.f32.mrb[0].mxu0
      %1244 = vmatprep.mubr.f32.mxu0 %v1114
      %1245 = vmatmul.mubr.f32.gmra.mrb[0].mxu0 %v1113
      %v1246 = vpop.f32.mrb[0].mxu0
      %v1247 = vadd.f32 0.0, %v1246
      %v1248 = vpop.f32.mrb[0].mxu0
      %1249 = vmatprep.mubr.f32.mxu0 %v1116
      %1250 = vmatmul.mubr.f32.gmra.mrb[0].mxu0 %v1115
      %v1251 = vpop.f32.mrb[0].mxu0
      %v1252 = vadd.f32 0.0, %v1251
      %v1253 = vpop.f32.mrb[0].mxu0
      %1254 = vmatprep.mubr.f32.mxu0 %v1118
      %1255 = vmatmul.mubr.f32.gmra.mrb[0].mxu0 %v1117
      %v1256 = vpop.f32.mrb[0].mxu0
      %v1257 = vadd.f32 0.0, %v1256
      %v1258 = vpop.f32.mrb[0].mxu0
      %1259 = vmatprep.mubr.f32.mxu0 %v1120
      %1260 = vmatmul.mubr.f32.gmra.mrb[0].mxu0 %v1119
      %v1261 = vpop.f32.mrb[0].mxu0
      %v1262 = vadd.f32 0.0, %v1261
      %v1263 = vpop.f32.mrb[0].mxu0
      %1264 = vmatprep.mubr.f32.mxu0 %v1122
      %1265 = vmatmul.mubr.f32.gmra.mrb[0].mxu0 %v1121
      %v1266 = vpop.f32.mrb[0].mxu0
      %v1267 = vadd.f32 0.0, %v1266
      %v1268 = vpop.f32.mrb[0].mxu0
      %1269 = vmatprep.mubr.f32.mxu0 %v1124
      %1270 = vmatmul.mubr.f32.gmra.mrb[0].mxu0 %v1123
      %v1271 = vpop.f32.mrb[0].mxu0
      %v1272 = vadd.f32 0.0, %v1271
      %v1273 = vpop.f32.mrb[0].mxu0
      %1274 = vmatprep.mubr.f32.mxu0 %v1126
      %1275 = vmatmul.mubr.f32.gmra.mrb[0].mxu0 %v1125
      %v1276 = vpop.f32.mrb[0].mxu0
      %v1277 = vadd.f32 0.0, %v1276
      %v1278 = vpop.f32.mrb[0].mxu0
      %1279 = vmatprep.mubr.f32.mxu0 %v1128
      %1280 = vmatmul.mubr.f32.gmra.mrb[0].mxu0 %v1127
      %v1281 = vpop.f32.mrb[0].mxu0
      %v1282 = vadd.f32 0.0, %v1281
      %v1283 = vpop.f32.mrb[0].mxu0
      %1284 = vmatprep.mubr.f32.mxu0 %v1130
      %1285 = vmatmul.mubr.f32.gmra.mrb[0].mxu0 %v1129
      %v1286 = vpop.f32.mrb[0].mxu0
      %v1287 = vadd.f32 0.0, %v1286
      %v1288 = vpop.f32.mrb[0].mxu0
      %1289 = vmatprep.mubr.f32.mxu0 %v1132
      %1290 = vmatmul.mubr.f32.gmra.mrb[0].mxu0 %v1131
      %v1291 = vpop.f32.mrb[0].mxu0
      %v1292 = vadd.f32 0.0, %v1291
      %v1293 = vpop.f32.mrb[0].mxu0
      %1294 = vmatprep.mubr.f32.mxu0 %v1134
      %1295 = vmatmul.mubr.f32.gmra.mrb[0].mxu0 %v1133
      %v1296 = vpop.f32.mrb[0].mxu0
      %v1297 = vadd.f32 0.0, %v1296
      %v1298 = vpop.f32.mrb[0].mxu0
      %1299 = vmatprep.mubr.f32.mxu0 %v1136
      %1300 = vmatmul.mubr.f32.gmra.mrb[0].mxu0 %v1135
      %v1301 = vpop.f32.mrb[0].mxu0
      %v1302 = vadd.f32 0.0, %v1301
      %v1303 = vpop.f32.mrb[0].mxu0
      %1304 = vmatprep.mubr.f32.mxu0 %v1138
      %1305 = vmatmul.mubr.f32.gmra.mrb[0].mxu0 %v1137
      %v1306 = vpop.f32.mrb[0].mxu0
      %v1307 = vadd.f32 0.0, %v1306
      %v1308 = vpop.f32.mrb[0].mxu0
      %1309 = vmatprep.mubr.f32.mxu0 %v1140
      %1310 = vmatmul.mubr.f32.gmra.mrb[0].mxu0 %v1139
      %v1311 = vpop.f32.mrb[0].mxu0
      %v1312 = vadd.f32 0.0, %v1311
      %v1313 = vpop.f32.mrb[0].mxu0
      %1314 = vmatprep.mubr.f32.mxu0 %v1142
      %1315 = vmatmul.mubr.f32.gmra.mrb[0].mxu0 %v1141
      %v1316 = vpop.f32.mrb[0].mxu0
      %v1317 = vadd.f32 0.0, %v1316
      %v1318 = vpop.f32.mrb[0].mxu0
      %1319 = vmatprep.mubr.f32.mxu0 %v1144
      %1320 = vmatmul.mubr.f32.gmra.mrb[0].mxu0 %v1143
      %v1321 = vpop.f32.mrb[0].mxu0
      %v1322 = vadd.f32 0.0, %v1321
      %v1323 = vpop.f32.mrb[0].mxu0
      %1324 = vmatprep.mubr.f32.mxu0 %v1146
      %1325 = vmatmul.mubr.f32.gmra.mrb[0].mxu0 %v1145
      %v1326 = vpop.f32.mrb[0].mxu0
      %v1327 = vadd.f32 0.0, %v1326
      %v1328 = vpop.f32.mrb[0].mxu0
      %1329 = vmatprep.mubr.f32.mxu0 %v1148
      %1330 = vmatmul.mubr.f32.gmra.mrb[0].mxu0 %v1147
      %v1331 = vpop.f32.mrb[0].mxu0
      %v1332 = vadd.f32 0.0, %v1331
      %v1333 = vpop.f32.mrb[0].mxu0
      %1334 = vmatprep.mubr.f32.mxu0 %v1150
      %1335 = vmatmul.mubr.f32.gmra.mrb[0].mxu0 %v1149
      %v1336 = vpop.f32.mrb[0].mxu0
      %v1337 = vadd.f32 0.0, %v1336
      %v1338 = vpop.f32.mrb[0].mxu0
      %1339 = vmatprep.mubr.f32.mxu0 %v1152
      %1340 = vmatmul.mubr.f32.gmra.mrb[0].mxu0 %v1151
      %v1341 = vpop.f32.mrb[0].mxu0
      %v1342 = vadd.f32 0.0, %v1341
      %v1343 = vpop.f32.mrb[0].mxu0
      %1344 = vmatprep.mubr.f32.mxu0 %v1154
      %1345 = vmatmul.mubr.f32.gmra.mrb[0].mxu0 %v1153
      %v1346 = vpop.f32.mrb[0].mxu0
      %v1347 = vadd.f32 0.0, %v1346
      %v1348 = vpop.f32.mrb[0].mxu0
      %1349 = vmatprep.mubr.f32.mxu0 %v1156
      %1350 = vmatmul.mubr.f32.gmra.mrb[0].mxu0 %v1155
      %v1351 = vpop.f32.mrb[0].mxu0
      %v1352 = vadd.f32 0.0, %v1351
      %v1353 = vpop.f32.mrb[0].mxu0
      %1354 = vmatprep.mubr.f32.mxu0 %v1158
      %1355 = vmatmul.mubr.f32.gmra.mrb[0].mxu0 %v1157
      %v1356 = vpop.f32.mrb[0].mxu0
      %v1357 = vadd.f32 0.0, %v1356
      %v1358 = vpop.f32.mrb[0].mxu0
      %1359 = vmatprep.mubr.f32.mxu0 %v1160
      %1360 = vmatmul.mubr.f32.gmra.mrb[0].mxu0 %v1159
      %v1361 = vpop.f32.mrb[0].mxu0
      %v1362 = vadd.f32 0.0, %v1361
      %v1363 = vpop.f32.mrb[0].mxu0
      %1364 = vmatprep.mubr.f32.mxu0 %v1162
      %1365 = vmatmul.mubr.f32.gmra.mrb[0].mxu0 %v1161
      %v1366 = vpop.f32.mrb[0].mxu0
      %v1367 = vadd.f32 0.0, %v1366
      %v1368 = vpop.f32.mrb[0].mxu0
      %1369 = vmatprep.mubr.f32.mxu0 %v1164
      %1370 = vmatmul.mubr.f32.gmra.mrb[0].mxu0 %v1163
      %v1371 = vpop.f32.mrb[0].mxu0
      %v1372 = vadd.f32 0.0, %v1371
      %v1373 = vpop.f32.mrb[0].mxu0
      %1374 = vmatprep.mubr.f32.mxu0 %v1166
      %1375 = vmatmul.mubr.f32.gmra.mrb[0].mxu0 %v1165
      %v1376 = vpop.f32.mrb[0].mxu0
      %v1377 = vadd.f32 0.0, %v1376
      %v1378 = vpop.f32.mrb[0].mxu0
      %1379 = vmatprep.mubr.f32.mxu0 %v1168
      %1380 = vmatmul.mubr.f32.gmra.mrb[0].mxu0 %v1167
      %v1381 = vpop.f32.mrb[0].mxu0
      %v1382 = vadd.f32 0.0, %v1381
      %v1383 = vpop.f32.mrb[0].mxu0
      %1384 = vmatprep.mubr.f32.mxu0 %v1170
      %1385 = vmatmul.mubr.f32.gmra.mrb[0].mxu0 %v1169
      %v1386 = vpop.f32.mrb[0].mxu0
      %v1387 = vadd.f32 0.0, %v1386
      %v1388 = vpop.f32.mrb[0].mxu0
      %1389 = vmatprep.mubr.f32.mxu0 %v1172
      %1390 = vmatmul.mubr.f32.gmra.mrb[0].mxu0 %v1171
      %v1391 = vpop.f32.mrb[0].mxu0
      %v1392 = vadd.f32 0.0, %v1391
      %v1393 = vpop.f32.mrb[0].mxu0
      %1394 = vmatprep.mubr.f32.mxu0 %v1174
      %1395 = vmatmul.mubr.f32.gmra.mrb[0].mxu0 %v1173
      %v1396 = vpop.f32.mrb[0].mxu0
      %v1397 = vadd.f32 0.0, %v1396
      %v1398 = vpop.f32.mrb[0].mxu0
      %1399 = vdwg.mxu0
      %1400 = vmatprep.subr.mxu0 0.0
      %1401 = vmatpush1.msra.mxu0 %v1242
      %1402 = vmatprep.subr.mxu0 0.0
      %1403 = vmatpush1.msra.mxu0 %v1247
      %1404 = vmatprep.subr.mxu0 0.0
      %1405 = vmatpush1.msra.mxu0 %v1252
      %1406 = vmatprep.subr.mxu0 0.0
      %1407 = vmatpush1.msra.mxu0 %v1257
      %1408 = vmatprep.subr.mxu0 0.0
      %1409 = vmatpush1.msra.mxu0 %v1262
      %1410 = vmatprep.subr.mxu0 0.0
      %1411 = vmatpush1.msra.mxu0 %v1267
      %1412 = vmatprep.subr.mxu0 0.0
      %1413 = vmatpush1.msra.mxu0 %v1272
      %1414 = vmatprep.subr.mxu0 0.0
      %1415 = vmatpush1.msra.mxu0 %v1277
      %1416 = vmatprep.subr.mxu0 0.0
      %1417 = vmatpush1.msra.mxu0 %v1282
      %1418 = vmatprep.subr.mxu0 0.0
      %1419 = vmatpush1.msra.mxu0 %v1287
      %1420 = vmatprep.subr.mxu0 0.0
      %1421 = vmatpush1.msra.mxu0 %v1292
      %1422 = vmatprep.subr.mxu0 0.0
      %1423 = vmatpush1.msra.mxu0 %v1297
      %1424 = vmatprep.subr.mxu0 0.0
      %1425 = vmatpush1.msra.mxu0 %v1302
      %1426 = vmatprep.subr.mxu0 0.0
      %1427 = vmatpush1.msra.mxu0 %v1307
      %1428 = vmatprep.subr.mxu0 0.0
      %1429 = vmatpush1.msra.mxu0 %v1312
      %1430 = vmatprep.subr.mxu0 0.0
      %1431 = vmatpush1.msra.mxu0 %v1317
      %1432 = vmatprep.subr.mxu0 0.0
      %1433 = vmatpush1.msra.mxu0 %v1322
      %1434 = vmatprep.subr.mxu0 0.0
      %1435 = vmatpush1.msra.mxu0 %v1327
      %1436 = vmatprep.subr.mxu0 0.0
      %1437 = vmatpush1.msra.mxu0 %v1332
      %1438 = vmatprep.subr.mxu0 0.0
      %1439 = vmatpush1.msra.mxu0 %v1337
      %1440 = vmatprep.subr.mxu0 0.0
      %1441 = vmatpush1.msra.mxu0 %v1342
      %1442 = vmatprep.subr.mxu0 0.0
      %1443 = vmatpush1.msra.mxu0 %v1347
      %1444 = vmatprep.subr.mxu0 0.0
      %1445 = vmatpush1.msra.mxu0 %v1352
      %1446 = vmatprep.subr.mxu0 0.0
      %1447 = vmatpush1.msra.mxu0 %v1357
      %1448 = vmatprep.subr.mxu0 0.0
      %1449 = vmatpush1.msra.mxu0 %v1362
      %1450 = vmatprep.subr.mxu0 0.0
      %1451 = vmatpush1.msra.mxu0 %v1367
      %1452 = vmatprep.subr.mxu0 0.0
      %1453 = vmatpush1.msra.mxu0 %v1372
      %1454 = vmatprep.subr.mxu0 0.0
      %1455 = vmatpush1.msra.mxu0 %v1377
      %1456 = vmatprep.subr.mxu0 0.0
      %1457 = vmatpush1.msra.mxu0 %v1382
      %1458 = vmatprep.subr.mxu0 0.0
      %1459 = vmatpush1.msra.mxu0 %v1387
      %1460 = vmatprep.subr.mxu0 0.0
      %1461 = vmatpush1.msra.mxu0 %v1392
      %1462 = vmatprep.subr.mxu0 0.0
      %1463 = vmatpush1.msra.mxu0 %v1397
      %1464 = vmatprep.mubr.f32.mxu0 %v172
      %1465 = vmatmul.mubr.f32.gmra.mrb[0].mxu0 %v171
      %v1466 = vpop.f32.mrb[0].mxu0
      %v1467 = vadd.f32 0.0, %v1466
      %v1468 = vpop.f32.mrb[0].mxu0
      %1469 = vmatprep.mubr.f32.mxu0 %v174
      %1470 = vmatmul.mubr.f32.gmra.mrb[0].mxu0 %v173
      %v1471 = vpop.f32.mrb[0].mxu0
      %v1472 = vadd.f32 0.0, %v1471
      %v1473 = vpop.f32.mrb[0].mxu0
      %1474 = vmatprep.mubr.f32.mxu0 %v176
      %1475 = vmatmul.mubr.f32.gmra.mrb[0].mxu0 %v175
      %v1476 = vpop.f32.mrb[0].mxu0
      %v1477 = vadd.f32 0.0, %v1476
      %v1478 = vpop.f32.mrb[0].mxu0
      %1479 = vmatprep.mubr.f32.mxu0 %v178
      %1480 = vmatmul.mubr.f32.gmra.mrb[0].mxu0 %v177
      %v1481 = vpop.f32.mrb[0].mxu0
      %v1482 = vadd.f32 0.0, %v1481
      %v1483 = vpop.f32.mrb[0].mxu0
      %1484 = vmatprep.mubr.f32.mxu0 %v180
      %1485 = vmatmul.mubr.f32.gmra.mrb[0].mxu0 %v179
      %v1486 = vpop.f32.mrb[0].mxu0
      %v1487 = vadd.f32 0.0, %v1486
      %v1488 = vpop.f32.mrb[0].mxu0
      %1489 = vmatprep.mubr.f32.mxu0 %v182
      %1490 = vmatmul.mubr.f32.gmra.mrb[0].mxu0 %v181
      %v1491 = vpop.f32.mrb[0].mxu0
      %v1492 = vadd.f32 0.0, %v1491
      %v1493 = vpop.f32.mrb[0].mxu0
      %1494 = vmatprep.mubr.f32.mxu0 %v184
      %1495 = vmatmul.mubr.f32.gmra.mrb[0].mxu0 %v183
      %v1496 = vpop.f32.mrb[0].mxu0
      %v1497 = vadd.f32 0.0, %v1496
      %v1498 = vpop.f32.mrb[0].mxu0
      %1499 = vmatprep.mubr.f32.mxu0 %v186
      %1500 = vmatmul.mubr.f32.gmra.mrb[0].mxu0 %v185
      %v1501 = vpop.f32.mrb[0].mxu0
      %v1502 = vadd.f32 0.0, %v1501
      %v1503 = vpop.f32.mrb[0].mxu0
      %1504 = vmatprep.mubr.f32.mxu0 %v188
      %1505 = vmatmul.mubr.f32.gmra.mrb[0].mxu0 %v187
      %v1506 = vpop.f32.mrb[0].mxu0
      %v1507 = vadd.f32 0.0, %v1506
      %v1508 = vpop.f32.mrb[0].mxu0
      %1509 = vmatprep.mubr.f32.mxu0 %v190
      %1510 = vmatmul.mubr.f32.gmra.mrb[0].mxu0 %v189
      %v1511 = vpop.f32.mrb[0].mxu0
      %v1512 = vadd.f32 0.0, %v1511
      %v1513 = vpop.f32.mrb[0].mxu0
      %1514 = vmatprep.mubr.f32.mxu0 %v192
      %1515 = vmatmul.mubr.f32.gmra.mrb[0].mxu0 %v191
      %v1516 = vpop.f32.mrb[0].mxu0
      %v1517 = vadd.f32 0.0, %v1516
      %v1518 = vpop.f32.mrb[0].mxu0
      %1519 = vmatprep.mubr.f32.mxu0 %v194
      %1520 = vmatmul.mubr.f32.gmra.mrb[0].mxu0 %v193
      %v1521 = vpop.f32.mrb[0].mxu0
      %v1522 = vadd.f32 0.0, %v1521
      %v1523 = vpop.f32.mrb[0].mxu0
      %1524 = vmatprep.mubr.f32.mxu0 %v196
      %1525 = vmatmul.mubr.f32.gmra.mrb[0].mxu0 %v195
      %v1526 = vpop.f32.mrb[0].mxu0
      %v1527 = vadd.f32 0.0, %v1526
      %v1528 = vpop.f32.mrb[0].mxu0
      %1529 = vmatprep.mubr.f32.mxu0 %v198
      %1530 = vmatmul.mubr.f32.gmra.mrb[0].mxu0 %v197
      %v1531 = vpop.f32.mrb[0].mxu0
      %v1532 = vadd.f32 0.0, %v1531
      %v1533 = vpop.f32.mrb[0].mxu0
      %1534 = vdwg.mxu0
      %s1535 = scalar_lea.vmem %s170, 224
      %1536 = vst.msk [vmem:[%s1535] sm:$0xff] %vm655, %v1467
      %1537 = vst.msk [vmem:[%s1535 + $0x8] sm:$0xff] %vm655, %v1472
      %1538 = vst.msk [vmem:[%s1535 + $0x10] sm:$0xff] %vm655, %v1477
      %1539 = vst.msk [vmem:[%s1535 + $0x18] sm:$0xff] %vm655, %v1482
      %1540 = vst.msk [vmem:[%s1535 + $0x20] sm:$0xff] %vm655, %v1487
      %1541 = vst.msk [vmem:[%s1535 + $0x28] sm:$0xff] %vm655, %v1492
      %1542 = vst.msk [vmem:[%s1535 + $0x30] sm:$0xff] %vm655, %v1497
      %1543 = vst.msk [vmem:[%s1535 + $0x38] sm:$0xff] %vm655, %v1502
      %1544 = vst.msk [vmem:[%s1535 + $0x40] sm:$0xff] %vm655, %v1507
      %1545 = vst.msk [vmem:[%s1535 + $0x48] sm:$0xff] %vm655, %v1512
      %1546 = vst.msk [vmem:[%s1535 + $0x50] sm:$0xff] %vm655, %v1517
      %1547 = vst.msk [vmem:[%s1535 + $0x58] sm:$0xff] %vm655, %v1522
      %1548 = vst.msk [vmem:[%s1535 + $0x60] sm:$0xff] %vm655, %v1527
      %1549 = vst.msk [vmem:[%s1535 + $0x68] sm:$0xff] %vm655, %v1532
      %p1550 = scmp.lt.s32.totalorder %s14, 3
      %s1551 = scalar_select %p1550, %s14, 3
      %s1552 = smul.addr %s1551, 42
      %s1553 = smul.addr %s1552, 8
      %s1554 = scalar_lea.vmem %s3, %s1553
      // Predicated region
      $region33: #{id_loss_forward.2} parent=31 // pred_check
        %p1555 = pneg %p100
      $region34: #{id_loss_forward.2} parent=31 // pred_check_branch
        %1557 = sbr.rel (%p1555) target = $region36
      $region35: #{id_loss_forward.2} parent=31 // pred_region
        _
      $region36: #{id_loss_forward.2} parent=31 // pred_fallthru
        _
    $region32: #{id_loss_forward.2} parent=5 // pred_fallthru
      _
    %p1558 = scmp.le.s32.totalorder 2, %s9
    // Predicated region
    $region37: #{id_loss_forward.2} parent=5 // pred_check
      %p1559 = pneg %p1558
    $region38: #{id_loss_forward.2} parent=5 // pred_check_branch
      %1561 = sbr.rel (%p1559) target = $region40
    $region39: #{id_loss_forward.2} parent=5 // pred_region
      %s1562 = ssub.s32 %s9, 2
      // Predicated region
      $region41: #{id_loss_forward.2} parent=39 // pred_check
        %p1563 = pneg %p106
      $region42: #{id_loss_forward.2} parent=39 // pred_check_branch
        %1565 = sbr.rel (%p1563) target = $region44
      $region43: #{id_loss_forward.2} parent=39 // pred_region
        %p1566 = scmp.lt.s32.totalorder %s15, 3
        %s1567 = scalar_select %p1566, %s15, 3
        %s1568 = smul.addr %s1567, 42
        %s1569 = smul.addr %s1568, 8
        %s1570 = scalar_lea.vmem %s3, %s1569
      $region44: #{id_loss_forward.2} parent=39 // pred_fallthru
        _
    $region40: #{id_loss_forward.2} parent=5 // pred_fallthru
      _
  $region6: #{id_loss_forward.2} parent=0 // loop_footer
    %s13 = sadd.s32 1, %s9
  $region7: #{id_loss_forward.2} parent=0 // loop_footer_branch
    %8 = sbr.rel target = $region3
  $region8: #{id_loss_forward.2} parent=0 // loop_exit
    _

// kernel: id_loss_forward.3
$region0: #{id_loss_forward.3}
  #allocation0 [shape = 'u32[]', space=smem, size = 0x4, offset = 0x4, fixed_abs, tag = 'smem constant byte address 0x4 - core index']
  #allocation1 [shape = 'u32[144,128]{1,0:T(1,128)}', space=vmem, size = 0x12000, scoped, tag = 'internal scratch']
  %s0 = inlined_call_operand.vmem [shape: f32[4,37632], index: 0, kind: input, shape index: {}]
  %s1 = inlined_call_operand.hbm [shape: bf16[37632,512], index: 1, kind: input, shape index: {}]
  %s2 = inlined_call_operand.vmem [shape: f32[4,512], index: 2, kind: output, shape index: {}]
  %s3 = sld [smem:[#allocation0]]
  $region49: #{id_loss_forward.3} parent=0
    _
  %s5 = ssub.s32 1, %s3
  %s6 = scalar_select 0, %s5, %s3
  $region1: #{id_loss_forward.3} parent=0
    #allocation2 [shape = 'u8[2752512]{0}', space=vmem, size = 0x2a0000, scoped, tag = 'input window, operand 1']
    #allocation3 [shape = 's32[2]{0}', space=sflag, size = 0x8, scoped, tag = 'scoped memory for id_loss_forward.3']
    %7 = vsyncpa [#allocation3], 0
    %s8 = scalar_lea.sflag [#allocation3], 1
    %9 = vsyncpa %s8, 0
    loop: start=0, step=1, limit=30
    $region2: #{id_loss_forward.3} parent=1 // loop_pre_header
      _
    $region3: #{id_loss_forward.3} parent=1 // loop_header
      %s11 = sphi 0, %s15
      %p12 = scmp.ge.s32.totalorder %s11, 30
      %s18 = sphi 0, %s30
      %s19 = sphi 0, %s26
      %s20 = sphi 0, %s18
      %s21 = sphi 0, %s19
      %s22 = sphi 0, %s20
      %s23 = sphi 0, %s21
      %s33 = sphi 0, %s35
      %s36 = sphi 0, %s33
      %s37 = sphi 0, %s36
      %s53 = sphi 0, %s37
      %s61 = sphi 0, %s63
      %s64 = sphi 0, %s61
      %s65 = sphi 0, %s64
      %s81 = sphi 0, %s65
      %s87 = sphi 0, %s89
      %s90 = sphi 0, %s87
      %s91 = sphi 0, %s90
      %s107 = sphi 0, %s91
    $region4: #{id_loss_forward.3} parent=1 // loop_header_branch
      %14 = sbr.rel (%p12) target = $region8
    $region5: #{id_loss_forward.3} parent=1 // loop_body
      %s16 = ssub.s32 %s11, 1
      %s17 = ssub.s32 %s11, 2
      %s24 = sadd.s32 1, %s19
      %p25 = scmp.ge.s32.totalorder %s24, 14
      %s26 = scalar_select %p25, 0, %s24
      %s27 = sadd.s32 1, %s18
      %s28 = scalar_select %p25, %s27, %s18
      %p29 = scmp.ge.s32.totalorder %s28, 2
      %s30 = scalar_select %p29, 0, %s28
      %s31 = ssub.s32 %s19, %s26
      %p32 = scmp.eq.s32.totalorder %s31, 0
      %s34 = sadd.s32 %s33, 1
      %s35 = scalar_select %p32, %s33, %s34
      %p38 = pneg %p32
      %p39 = scmp.eq.s32.totalorder %s11, 27
      %p40 = por %p38, %p39
      %p41 = scmp.ne.s32.totalorder %s33, %s36
      %p42 = scmp.eq.s32.totalorder %s11, 0
      %p43 = por %p41, %p42
      %p44 = scmp.ne.s32.totalorder %s33, %s36
      %p45 = scmp.eq.s32.totalorder %s16, 27
      %p46 = por %p44, %p45
      %p47 = scmp.ne.s32.totalorder %s36, %s37
      %p48 = scmp.eq.s32.totalorder %s16, 0
      %p49 = por %p47, %p48
      %p50 = scmp.ne.s32.totalorder %s36, %s37
      %p51 = scmp.eq.s32.totalorder %s17, 27
      %p52 = por %p50, %p51
      %p54 = scmp.ne.s32.totalorder %s37, %s53
      %p55 = scmp.eq.s32.totalorder %s17, 0
      %p56 = por %p54, %p55
      %s57 = ssub.s32 %s19, %s26
      %s58 = ssub.s32 %s18, %s30
      %s59 = sor.u32 %s57, %s58
      %p60 = scmp.eq.s32.totalorder %s59, 0
      %s62 = sadd.s32 %s61, 1
      %s63 = scalar_select %p60, %s61, %s62
      %p66 = pneg %p60
      %p67 = scmp.eq.s32.totalorder %s11, 27
      %p68 = por %p66, %p67
      %p69 = scmp.ne.s32.totalorder %s61, %s64
      %p70 = scmp.eq.s32.totalorder %s11, 0
      %p71 = por %p69, %p70
      %p72 = scmp.ne.s32.totalorder %s61, %s64
      %p73 = scmp.eq.s32.totalorder %s16, 27
      %p74 = por %p72, %p73
      %p75 = scmp.ne.s32.totalorder %s64, %s65
      %p76 = scmp.eq.s32.totalorder %s16, 0
      %p77 = por %p75, %p76
      %p78 = scmp.ne.s32.totalorder %s64, %s65
      %p79 = scmp.eq.s32.totalorder %s17, 27
      %p80 = por %p78, %p79
      %p82 = scmp.ne.s32.totalorder %s65, %s81
      %p83 = scmp.eq.s32.totalorder %s17, 0
      %p84 = por %p82, %p83
      %s85 = ssub.s32 %s18, %s30
      %p86 = scmp.eq.s32.totalorder %s85, 0
      %s88 = sadd.s32 %s87, 1
      %s89 = scalar_select %p86, %s87, %s88
      %p92 = pneg %p86
      %p93 = scmp.eq.s32.totalorder %s11, 27
      %p94 = por %p92, %p93
      %p95 = scmp.ne.s32.totalorder %s87, %s90
      %p96 = scmp.eq.s32.totalorder %s11, 0
      %p97 = por %p95, %p96
      %p98 = scmp.ne.s32.totalorder %s87, %s90
      %p99 = scmp.eq.s32.totalorder %s16, 27
      %p100 = por %p98, %p99
      %p101 = scmp.ne.s32.totalorder %s90, %s91
      %p102 = scmp.eq.s32.totalorder %s16, 0
      %p103 = por %p101, %p102
      %p104 = scmp.ne.s32.totalorder %s90, %s91
      %p105 = scmp.eq.s32.totalorder %s17, 27
      %p106 = por %p104, %p105
      %p108 = scmp.ne.s32.totalorder %s91, %s107
      %p109 = scmp.eq.s32.totalorder %s17, 0
      %p110 = por %p108, %p109
      %p111 = scmp.le.s32.totalorder 1, %s11
      %p112 = scmp.lt.s32.totalorder %s11, 29
      %p113 = pnand %p111, %p112
      %p114 = pneg %p113
      // Predicated region
      $region9: #{id_loss_forward.3} parent=5 // pred_check
        _
      $region10: #{id_loss_forward.3} parent=5 // pred_check_branch
        %116 = sbr.rel (%p113) target = $region12
      $region11: #{id_loss_forward.3} parent=5 // pred_region
        %s117 = ssub.s32 %s11, 1
      $region12: #{id_loss_forward.3} parent=5 // pred_fallthru
        _
      %p118 = scmp.lt.s32.totalorder %s11, 28
      // Predicated region
      $region13: #{id_loss_forward.3} parent=5 // pred_check
        %p119 = pneg %p118
      $region14: #{id_loss_forward.3} parent=5 // pred_check_branch
        %121 = sbr.rel (%p119) target = $region16
      $region15: #{id_loss_forward.3} parent=5 // pred_region
        // Predicated region
        $region17: #{id_loss_forward.3} parent=15 // pred_check
          %p122 = pneg %p43
        $region18: #{id_loss_forward.3} parent=15 // pred_check_branch
          %124 = sbr.rel (%p122) target = $region20
        $region19: #{id_loss_forward.3} parent=15 // pred_region
          %s125 = smul.u32 21, %s19
          %p126 = scmp.lt.s32.totalorder %s125, 293
          %s127 = scalar_select %p126, %s125, 293
          %s128 = smul.addr %s127, 4
          %s129 = scalar_lea.vmem %s0, %s128
          %s130 = smul.u32 21, %s19
        $region20: #{id_loss_forward.3} parent=15 // pred_fallthru
          _
        // Predicated region
        $region21: #{id_loss_forward.3} parent=15 // pred_check
          %p131 = pneg %p71
        $region22: #{id_loss_forward.3} parent=15 // pred_check_branch
          %133 = sbr.rel (%p131) target = $region24
        $region23: #{id_loss_forward.3} parent=15 // pred_region
          %s134 = sand.u32 %s61, 1
          %s135 = scalar_lea.sflag [#allocation3], %s134
          %s136 = sand.u32 %s61, 1
          %s137 = smul.addr %s136, 2688
          %s138 = scalar_lea.vmem [#allocation2], %s137
          %s139 = smul.u32 336, %s19
          %s140 = smul.u32 2, %s18
          %s142 = ssub.s32 43008, 43008
          %143 = vsyncadd %s135, %s142
          %s144 = smul.addr %s139, 4
          %s145 = sadd.s32 %s140, %s144
          %s146 = smul.addr %s145, 64
          %s147 = scalar_lea.hbm %s1, %s146
          %s148 = sshll.u32 %s138, 4
          %s149 = int_to_ptr.vmem [resolvable:$true] %s148
          %154 = dma.hbm_to_vmem [thread:$0]  %s147, 43008, %s149, %s135, 256, 128, 8
        $region24: #{id_loss_forward.3} parent=15 // pred_fallthru
          _
      $region16: #{id_loss_forward.3} parent=5 // pred_fallthru
        _
      %p155 = scmp.le.s32.totalorder 1, %s11
      %p156 = scmp.lt.s32.totalorder %s11, 29
      %p157 = pnand %p155, %p156
      %p158 = pneg %p157
      // Predicated region
      $region25: #{id_loss_forward.3} parent=5 // pred_check
        _
      $region26: #{id_loss_forward.3} parent=5 // pred_check_branch
        %160 = sbr.rel (%p157) target = $region28
      $region27: #{id_loss_forward.3} parent=5 // pred_region
        %s161 = ssub.s32 %s11, 1
        %s162 = sand.u32 %s64, 1
        %s163 = scalar_lea.sflag [#allocation3], %s162
        %s164 = sand.u32 %s64, 1
        %s165 = smul.addr %s164, 2688
        %s166 = scalar_lea.vmem [#allocation2], %s165
        // Predicated region
        $region29: #{id_loss_forward.3} parent=27 // pred_check
          %p167 = pneg %p77
        $region30: #{id_loss_forward.3} parent=27 // pred_check_branch
          %169 = sbr.rel (%p167) target = $region32
        $region31: #{id_loss_forward.3} parent=27 // pred_region
          %170 = dma.done %s163, 43008
        $region32: #{id_loss_forward.3} parent=27 // pred_fallthru
          _
        %s171 = smul.u32 21, %s21
        %p172 = scmp.lt.s32.totalorder %s171, 293
        %s173 = scalar_select %p172, %s171, 293
        %s174 = smul.addr %s173, 4
        %s175 = scalar_lea.vmem %s0, %s174
        %p176 = pneg %p49
        %p177 = pneg %p46
        %s178 = sand.u32 %s64, 1
        %s179 = scalar_lea.sflag [#allocation3], %s178
        %s180 = sand.u32 %s64, 1
        %s181 = smul.addr %s180, 2688
        %s182 = scalar_lea.vmem [#allocation2], %s181
        %p183 = pneg %p77
        %p184 = pneg %p74
        %p185 = pneg %p103
        %p186 = pneg %p100
        %s187 = smul.u32 2, %s20
        %p188 = scmp.lt.s32.totalorder %s187, 3
        %s189 = scalar_select %p188, %s187, 3
        %s190 = smul.addr %s189, 4
        %s191 = scalar_lea.vmem %s2, %s190
        %s192 = smul.u32 21, %s21
        %p193 = scmp.lt.s32.totalorder %s192, 293
        %s194 = scalar_select %p193, %s192, 293
        %s195 = smul.addr %s194, 4
        %s196 = scalar_lea.vmem %s0, %s195
        %s197 = smul.u32 21, %s21
        %s198 = smul.u32 336, %s21
        %s199 = smul.u32 2, %s20
        %s200 = smul.u32 2, %s20
        %p201 = scmp.lt.s32.totalorder %s200, 3
        %s202 = scalar_select %p201, %s200, 3
        %s203 = smul.addr %s202, 4
        %s204 = scalar_lea.vmem %s2, %s203
        %s205 = smul.u32 2, %s20
        %p207 = scmp.eq.s32.totalorder %s21, 0
        // Predicated region
        $region33: #{id_loss_forward.3} parent=27 // pred_check
          %p208 = pneg %p207
        $region34: #{id_loss_forward.3} parent=27 // pred_check_branch
          %210 = sbr.rel (%p208) target = $region36
        $region35: #{id_loss_forward.3} parent=27 // pred_region
          %211 = vst [vmem:[%s204] sm:$0xff] 0.0
        $region36: #{id_loss_forward.3} parent=27 // pred_fallthru
          _
        %v212 = vld [vmem:[%s204] sm:$0xff]
        %v213 = vld [vmem:[%s196] sm:$0xff]
        %v214 = vld [vmem:[%s196 + $0x8] sm:$0xff]
        %v215 = vld [vmem:[%s196 + $0x10] sm:$0xff]
        %v216 = vld [vmem:[%s196 + $0x18] sm:$0xff]
        %v217 = vld [vmem:[%s196 + $0x20] sm:$0xff]
        %v218 = vld [vmem:[%s196 + $0x28] sm:$0xff]
        %v219 = vld [vmem:[%s196 + $0x30] sm:$0xff]
        %v220 = vld [vmem:[%s196 + $0x38] sm:$0xff]
        %v221 = vld [vmem:[%s196 + $0x40] sm:$0xff]
        %v222 = vld [vmem:[%s196 + $0x48] sm:$0xff]
        %v223 = vld [vmem:[%s196 + $0x50] sm:$0xf]
        %v234 = vcombine.high %v213, %v213
        %v235 = vcombine.high %v214, %v214
        %v236 = vcombine.high %v215, %v215
        %v237 = vcombine.high %v216, %v216
        %v238 = vcombine.high %v217, %v217
        %v239 = vcombine.high %v218, %v218
        %v240 = vcombine.high %v219, %v219
        %v241 = vcombine.high %v220, %v220
        %v242 = vcombine.high %v221, %v221
        %v243 = vcombine.high %v222, %v222
        %v254 = vpack.c.bf16 %v213, %v213
        %v255 = vpack.c.bf16 %v234, %v234
        %v256 = vpack.c.bf16 %v214, %v214
        %v257 = vpack.c.bf16 %v235, %v235
        %v258 = vpack.c.bf16 %v215, %v215
        %v259 = vpack.c.bf16 %v236, %v236
        %v260 = vpack.c.bf16 %v216, %v216
        %v261 = vpack.c.bf16 %v237, %v237
        %v262 = vpack.c.bf16 %v217, %v217
        %v263 = vpack.c.bf16 %v238, %v238
        %v264 = vpack.c.bf16 %v218, %v218
        %v265 = vpack.c.bf16 %v239, %v239
        %v266 = vpack.c.bf16 %v219, %v219
        %v267 = vpack.c.bf16 %v240, %v240
        %v268 = vpack.c.bf16 %v220, %v220
        %v269 = vpack.c.bf16 %v241, %v241
        %v270 = vpack.c.bf16 %v221, %v221
        %v271 = vpack.c.bf16 %v242, %v242
        %v272 = vpack.c.bf16 %v222, %v222
        %v273 = vpack.c.bf16 %v243, %v243
        %v274 = vpack.c.bf16 %v223, %v223
        %v275 = vld [vmem:[%s166] sm:$0xff]
        %v276 = vld [vmem:[%s166 + $0x8] sm:$0xff]
        %v277 = vld [vmem:[%s166 + $0x10] sm:$0xff]
        %v278 = vld [vmem:[%s166 + $0x18] sm:$0xff]
        %v279 = vld [vmem:[%s166 + $0x20] sm:$0xff]
        %v280 = vld [vmem:[%s166 + $0x28] sm:$0xff]
        %v281 = vld [vmem:[%s166 + $0x30] sm:$0xff]
        %v282 = vld [vmem:[%s166 + $0x38] sm:$0xff]
        %v283 = vld [vmem:[%s166 + $0x40] sm:$0xff]
        %v284 = vld [vmem:[%s166 + $0x48] sm:$0xff]
        %v285 = vld [vmem:[%s166 + $0x50] sm:$0xff]
        %v286 = vld [vmem:[%s166 + $0x58] sm:$0xff]
        %v287 = vld [vmem:[%s166 + $0x60] sm:$0xff]
        %v288 = vld [vmem:[%s166 + $0x68] sm:$0xff]
        %v289 = vld [vmem:[%s166 + $0x70] sm:$0xff]
        %v290 = vld [vmem:[%s166 + $0x78] sm:$0xff]
        %v291 = vld [vmem:[%s166 + $0x80] sm:$0xff]
        %v292 = vld [vmem:[%s166 + $0x88] sm:$0xff]
        %v293 = vld [vmem:[%s166 + $0x90] sm:$0xff]
        %v294 = vld [vmem:[%s166 + $0x98] sm:$0xff]
        %v295 = vld [vmem:[%s166 + $0xa0] sm:$0xff]
        %v296 = vld [vmem:[%s166 + $0xa8] sm:$0xff]
        %v297 = vld [vmem:[%s166 + $0xb0] sm:$0xff]
        %v298 = vld [vmem:[%s166 + $0xb8] sm:$0xff]
        %v299 = vld [vmem:[%s166 + $0xc0] sm:$0xff]
        %v300 = vld [vmem:[%s166 + $0xc8] sm:$0xff]
        %v301 = vld [vmem:[%s166 + $0xd0] sm:$0xff]
        %v302 = vld [vmem:[%s166 + $0xd8] sm:$0xff]
        %v303 = vld [vmem:[%s166 + $0xe0] sm:$0xff]
        %v304 = vld [vmem:[%s166 + $0xe8] sm:$0xff]
        %v305 = vld [vmem:[%s166 + $0xf0] sm:$0xff]
        %v306 = vld [vmem:[%s166 + $0xf8] sm:$0xff]
        %v307 = vld [vmem:[%s166 + $0x100] sm:$0xff]
        %v308 = vld [vmem:[%s166 + $0x108] sm:$0xff]
        %v309 = vld [vmem:[%s166 + $0x110] sm:$0xff]
        %v310 = vld [vmem:[%s166 + $0x118] sm:$0xff]
        %v311 = vld [vmem:[%s166 + $0x120] sm:$0xff]
        %v312 = vld [vmem:[%s166 + $0x128] sm:$0xff]
        %v313 = vld [vmem:[%s166 + $0x130] sm:$0xff]
        %v314 = vld [vmem:[%s166 + $0x138] sm:$0xff]
        %v315 = vld [vmem:[%s166 + $0x140] sm:$0xff]
        %v316 = vld [vmem:[%s166 + $0x148] sm:$0xff]
        %v317 = vld [vmem:[%s166 + $0x150] sm:$0xff]
        %v318 = vld [vmem:[%s166 + $0x158] sm:$0xff]
        %v319 = vld [vmem:[%s166 + $0x160] sm:$0xff]
        %v320 = vld [vmem:[%s166 + $0x168] sm:$0xff]
        %v321 = vld [vmem:[%s166 + $0x170] sm:$0xff]
        %v322 = vld [vmem:[%s166 + $0x178] sm:$0xff]
        %v323 = vld [vmem:[%s166 + $0x180] sm:$0xff]
        %v324 = vld [vmem:[%s166 + $0x188] sm:$0xff]
        %v325 = vld [vmem:[%s166 + $0x190] sm:$0xff]
        %v326 = vld [vmem:[%s166 + $0x198] sm:$0xff]
        %v327 = vld [vmem:[%s166 + $0x1a0] sm:$0xff]
        %v328 = vld [vmem:[%s166 + $0x1a8] sm:$0xff]
        %v329 = vld [vmem:[%s166 + $0x1b0] sm:$0xff]
        %v330 = vld [vmem:[%s166 + $0x1b8] sm:$0xff]
        %v331 = vld [vmem:[%s166 + $0x1c0] sm:$0xff]
        %v332 = vld [vmem:[%s166 + $0x1c8] sm:$0xff]
        %v333 = vld [vmem:[%s166 + $0x1d0] sm:$0xff]
        %v334 = vld [vmem:[%s166 + $0x1d8] sm:$0xff]
        %v335 = vld [vmem:[%s166 + $0x1e0] sm:$0xff]
        %v336 = vld [vmem:[%s166 + $0x1e8] sm:$0xff]
        %v337 = vld [vmem:[%s166 + $0x1f0] sm:$0xff]
        %v338 = vld [vmem:[%s166 + $0x1f8] sm:$0xff]
        %v339 = vld [vmem:[%s166 + $0x200] sm:$0xff]
        %v340 = vld [vmem:[%s166 + $0x208] sm:$0xff]
        %v341 = vld [vmem:[%s166 + $0x210] sm:$0xff]
        %v342 = vld [vmem:[%s166 + $0x218] sm:$0xff]
        %v343 = vld [vmem:[%s166 + $0x220] sm:$0xff]
        %v344 = vld [vmem:[%s166 + $0x228] sm:$0xff]
        %v345 = vld [vmem:[%s166 + $0x230] sm:$0xff]
        %v346 = vld [vmem:[%s166 + $0x238] sm:$0xff]
        %v347 = vld [vmem:[%s166 + $0x240] sm:$0xff]
        %v348 = vld [vmem:[%s166 + $0x248] sm:$0xff]
        %v349 = vld [vmem:[%s166 + $0x250] sm:$0xff]
        %v350 = vld [vmem:[%s166 + $0x258] sm:$0xff]
        %v351 = vld [vmem:[%s166 + $0x260] sm:$0xff]
        %v352 = vld [vmem:[%s166 + $0x268] sm:$0xff]
        %v353 = vld [vmem:[%s166 + $0x270] sm:$0xff]
        %v354 = vld [vmem:[%s166 + $0x278] sm:$0xff]
        %v355 = vld [vmem:[%s166 + $0x280] sm:$0xff]
        %v356 = vld [vmem:[%s166 + $0x288] sm:$0xff]
        %v357 = vld [vmem:[%s166 + $0x290] sm:$0xff]
        %v358 = vld [vmem:[%s166 + $0x298] sm:$0xff]
        %v359 = vld [vmem:[%s166 + $0x2a0] sm:$0xff]
        %v360 = vld [vmem:[%s166 + $0x2a8] sm:$0xff]
        %v361 = vld [vmem:[%s166 + $0x2b0] sm:$0xff]
        %v362 = vld [vmem:[%s166 + $0x2b8] sm:$0xff]
        %v363 = vld [vmem:[%s166 + $0x2c0] sm:$0xff]
        %v364 = vld [vmem:[%s166 + $0x2c8] sm:$0xff]
        %v365 = vld [vmem:[%s166 + $0x2d0] sm:$0xff]
        %v366 = vld [vmem:[%s166 + $0x2d8] sm:$0xff]
        %v367 = vld [vmem:[%s166 + $0x2e0] sm:$0xff]
        %v368 = vld [vmem:[%s166 + $0x2e8] sm:$0xff]
        %v369 = vld [vmem:[%s166 + $0x2f0] sm:$0xff]
        %v370 = vld [vmem:[%s166 + $0x2f8] sm:$0xff]
        %v371 = vld [vmem:[%s166 + $0x300] sm:$0xff]
        %v372 = vld [vmem:[%s166 + $0x308] sm:$0xff]
        %v373 = vld [vmem:[%s166 + $0x310] sm:$0xff]
        %v374 = vld [vmem:[%s166 + $0x318] sm:$0xff]
        %v375 = vld [vmem:[%s166 + $0x320] sm:$0xff]
        %v376 = vld [vmem:[%s166 + $0x328] sm:$0xff]
        %v377 = vld [vmem:[%s166 + $0x330] sm:$0xff]
        %v378 = vld [vmem:[%s166 + $0x338] sm:$0xff]
        %v379 = vld [vmem:[%s166 + $0x340] sm:$0xff]
        %v380 = vld [vmem:[%s166 + $0x348] sm:$0xff]
        %v381 = vld [vmem:[%s166 + $0x350] sm:$0xff]
        %v382 = vld [vmem:[%s166 + $0x358] sm:$0xff]
        %v383 = vld [vmem:[%s166 + $0x360] sm:$0xff]
        %v384 = vld [vmem:[%s166 + $0x368] sm:$0xff]
        %v385 = vld [vmem:[%s166 + $0x370] sm:$0xff]
        %v386 = vld [vmem:[%s166 + $0x378] sm:$0xff]
        %v387 = vld [vmem:[%s166 + $0x380] sm:$0xff]
        %v388 = vld [vmem:[%s166 + $0x388] sm:$0xff]
        %v389 = vld [vmem:[%s166 + $0x390] sm:$0xff]
        %v390 = vld [vmem:[%s166 + $0x398] sm:$0xff]
        %v391 = vld [vmem:[%s166 + $0x3a0] sm:$0xff]
        %v392 = vld [vmem:[%s166 + $0x3a8] sm:$0xff]
        %v393 = vld [vmem:[%s166 + $0x3b0] sm:$0xff]
        %v394 = vld [vmem:[%s166 + $0x3b8] sm:$0xff]
        %v395 = vld [vmem:[%s166 + $0x3c0] sm:$0xff]
        %v396 = vld [vmem:[%s166 + $0x3c8] sm:$0xff]
        %v397 = vld [vmem:[%s166 + $0x3d0] sm:$0xff]
        %v398 = vld [vmem:[%s166 + $0x3d8] sm:$0xff]
        %v399 = vld [vmem:[%s166 + $0x3e0] sm:$0xff]
        %v400 = vld [vmem:[%s166 + $0x3e8] sm:$0xff]
        %v401 = vld [vmem:[%s166 + $0x3f0] sm:$0xff]
        %v402 = vld [vmem:[%s166 + $0x3f8] sm:$0xff]
        %v403 = vld [vmem:[%s166 + $0x400] sm:$0xff]
        %v404 = vld [vmem:[%s166 + $0x408] sm:$0xff]
        %v405 = vld [vmem:[%s166 + $0x410] sm:$0xff]
        %v406 = vld [vmem:[%s166 + $0x418] sm:$0xff]
        %v407 = vld [vmem:[%s166 + $0x420] sm:$0xff]
        %v408 = vld [vmem:[%s166 + $0x428] sm:$0xff]
        %v409 = vld [vmem:[%s166 + $0x430] sm:$0xff]
        %v410 = vld [vmem:[%s166 + $0x438] sm:$0xff]
        %v411 = vld [vmem:[%s166 + $0x440] sm:$0xff]
        %v412 = vld [vmem:[%s166 + $0x448] sm:$0xff]
        %v413 = vld [vmem:[%s166 + $0x450] sm:$0xff]
        %v414 = vld [vmem:[%s166 + $0x458] sm:$0xff]
        %v415 = vld [vmem:[%s166 + $0x460] sm:$0xff]
        %v416 = vld [vmem:[%s166 + $0x468] sm:$0xff]
        %v417 = vld [vmem:[%s166 + $0x470] sm:$0xff]
        %v418 = vld [vmem:[%s166 + $0x478] sm:$0xff]
        %v419 = vld [vmem:[%s166 + $0x480] sm:$0xff]
        %v420 = vld [vmem:[%s166 + $0x488] sm:$0xff]
        %v421 = vld [vmem:[%s166 + $0x490] sm:$0xff]
        %v422 = vld [vmem:[%s166 + $0x498] sm:$0xff]
        %v423 = vld [vmem:[%s166 + $0x4a0] sm:$0xff]
        %v424 = vld [vmem:[%s166 + $0x4a8] sm:$0xff]
        %v425 = vld [vmem:[%s166 + $0x4b0] sm:$0xff]
        %v426 = vld [vmem:[%s166 + $0x4b8] sm:$0xff]
        %v427 = vld [vmem:[%s166 + $0x4c0] sm:$0xff]
        %v428 = vld [vmem:[%s166 + $0x4c8] sm:$0xff]
        %v429 = vld [vmem:[%s166 + $0x4d0] sm:$0xff]
        %v430 = vld [vmem:[%s166 + $0x4d8] sm:$0xff]
        %v431 = vld [vmem:[%s166 + $0x4e0] sm:$0xff]
        %v432 = vld [vmem:[%s166 + $0x4e8] sm:$0xff]
        %v433 = vld [vmem:[%s166 + $0x4f0] sm:$0xff]
        %v434 = vld [vmem:[%s166 + $0x4f8] sm:$0xff]
        %v435 = vld [vmem:[%s166 + $0x500] sm:$0xff]
        %v436 = vld [vmem:[%s166 + $0x508] sm:$0xff]
        %v437 = vld [vmem:[%s166 + $0x510] sm:$0xff]
        %v438 = vld [vmem:[%s166 + $0x518] sm:$0xff]
        %v439 = vld [vmem:[%s166 + $0x520] sm:$0xff]
        %v440 = vld [vmem:[%s166 + $0x528] sm:$0xff]
        %v441 = vld [vmem:[%s166 + $0x530] sm:$0xff]
        %v442 = vld [vmem:[%s166 + $0x538] sm:$0xff]
        %v443 = vld [vmem:[%s166 + $0x540] sm:$0xff]
        %v444 = vld [vmem:[%s166 + $0x548] sm:$0xff]
        %v445 = vld [vmem:[%s166 + $0x550] sm:$0xff]
        %v446 = vld [vmem:[%s166 + $0x558] sm:$0xff]
        %v447 = vld [vmem:[%s166 + $0x560] sm:$0xff]
        %v448 = vld [vmem:[%s166 + $0x568] sm:$0xff]
        %v449 = vld [vmem:[%s166 + $0x570] sm:$0xff]
        %v450 = vld [vmem:[%s166 + $0x578] sm:$0xff]
        %v451 = vld [vmem:[%s166 + $0x580] sm:$0xff]
        %v452 = vld [vmem:[%s166 + $0x588] sm:$0xff]
        %v453 = vld [vmem:[%s166 + $0x590] sm:$0xff]
        %v454 = vld [vmem:[%s166 + $0x598] sm:$0xff]
        %v455 = vld [vmem:[%s166 + $0x5a0] sm:$0xff]
        %v456 = vld [vmem:[%s166 + $0x5a8] sm:$0xff]
        %v457 = vld [vmem:[%s166 + $0x5b0] sm:$0xff]
        %v458 = vld [vmem:[%s166 + $0x5b8] sm:$0xff]
        %v459 = vld [vmem:[%s166 + $0x5c0] sm:$0xff]
        %v460 = vld [vmem:[%s166 + $0x5c8] sm:$0xff]
        %v461 = vld [vmem:[%s166 + $0x5d0] sm:$0xff]
        %v462 = vld [vmem:[%s166 + $0x5d8] sm:$0xff]
        %v463 = vld [vmem:[%s166 + $0x5e0] sm:$0xff]
        %v464 = vld [vmem:[%s166 + $0x5e8] sm:$0xff]
        %v465 = vld [vmem:[%s166 + $0x5f0] sm:$0xff]
        %v466 = vld [vmem:[%s166 + $0x5f8] sm:$0xff]
        %v467 = vld [vmem:[%s166 + $0x600] sm:$0xff]
        %v468 = vld [vmem:[%s166 + $0x608] sm:$0xff]
        %v469 = vld [vmem:[%s166 + $0x610] sm:$0xff]
        %v470 = vld [vmem:[%s166 + $0x618] sm:$0xff]
        %v471 = vld [vmem:[%s166 + $0x620] sm:$0xff]
        %v472 = vld [vmem:[%s166 + $0x628] sm:$0xff]
        %v473 = vld [vmem:[%s166 + $0x630] sm:$0xff]
        %v474 = vld [vmem:[%s166 + $0x638] sm:$0xff]
        %v475 = vld [vmem:[%s166 + $0x640] sm:$0xff]
        %v476 = vld [vmem:[%s166 + $0x648] sm:$0xff]
        %v477 = vld [vmem:[%s166 + $0x650] sm:$0xff]
        %v478 = vld [vmem:[%s166 + $0x658] sm:$0xff]
        %v479 = vld [vmem:[%s166 + $0x660] sm:$0xff]
        %v480 = vld [vmem:[%s166 + $0x668] sm:$0xff]
        %v481 = vld [vmem:[%s166 + $0x670] sm:$0xff]
        %v482 = vld [vmem:[%s166 + $0x678] sm:$0xff]
        %v483 = vld [vmem:[%s166 + $0x680] sm:$0xff]
        %v484 = vld [vmem:[%s166 + $0x688] sm:$0xff]
        %v485 = vld [vmem:[%s166 + $0x690] sm:$0xff]
        %v486 = vld [vmem:[%s166 + $0x698] sm:$0xff]
        %v487 = vld [vmem:[%s166 + $0x6a0] sm:$0xff]
        %v488 = vld [vmem:[%s166 + $0x6a8] sm:$0xff]
        %v489 = vld [vmem:[%s166 + $0x6b0] sm:$0xff]
        %v490 = vld [vmem:[%s166 + $0x6b8] sm:$0xff]
        %v491 = vld [vmem:[%s166 + $0x6c0] sm:$0xff]
        %v492 = vld [vmem:[%s166 + $0x6c8] sm:$0xff]
        %v493 = vld [vmem:[%s166 + $0x6d0] sm:$0xff]
        %v494 = vld [vmem:[%s166 + $0x6d8] sm:$0xff]
        %v495 = vld [vmem:[%s166 + $0x6e0] sm:$0xff]
        %v496 = vld [vmem:[%s166 + $0x6e8] sm:$0xff]
        %v497 = vld [vmem:[%s166 + $0x6f0] sm:$0xff]
        %v498 = vld [vmem:[%s166 + $0x6f8] sm:$0xff]
        %v499 = vld [vmem:[%s166 + $0x700] sm:$0xff]
        %v500 = vld [vmem:[%s166 + $0x708] sm:$0xff]
        %v501 = vld [vmem:[%s166 + $0x710] sm:$0xff]
        %v502 = vld [vmem:[%s166 + $0x718] sm:$0xff]
        %v503 = vld [vmem:[%s166 + $0x720] sm:$0xff]
        %v504 = vld [vmem:[%s166 + $0x728] sm:$0xff]
        %v505 = vld [vmem:[%s166 + $0x730] sm:$0xff]
        %v506 = vld [vmem:[%s166 + $0x738] sm:$0xff]
        %v507 = vld [vmem:[%s166 + $0x740] sm:$0xff]
        %v508 = vld [vmem:[%s166 + $0x748] sm:$0xff]
        %v509 = vld [vmem:[%s166 + $0x750] sm:$0xff]
        %v510 = vld [vmem:[%s166 + $0x758] sm:$0xff]
        %v511 = vld [vmem:[%s166 + $0x760] sm:$0xff]
        %v512 = vld [vmem:[%s166 + $0x768] sm:$0xff]
        %v513 = vld [vmem:[%s166 + $0x770] sm:$0xff]
        %v514 = vld [vmem:[%s166 + $0x778] sm:$0xff]
        %v515 = vld [vmem:[%s166 + $0x780] sm:$0xff]
        %v516 = vld [vmem:[%s166 + $0x788] sm:$0xff]
        %v517 = vld [vmem:[%s166 + $0x790] sm:$0xff]
        %v518 = vld [vmem:[%s166 + $0x798] sm:$0xff]
        %v519 = vld [vmem:[%s166 + $0x7a0] sm:$0xff]
        %v520 = vld [vmem:[%s166 + $0x7a8] sm:$0xff]
        %v521 = vld [vmem:[%s166 + $0x7b0] sm:$0xff]
        %v522 = vld [vmem:[%s166 + $0x7b8] sm:$0xff]
        %v523 = vld [vmem:[%s166 + $0x7c0] sm:$0xff]
        %v524 = vld [vmem:[%s166 + $0x7c8] sm:$0xff]
        %v525 = vld [vmem:[%s166 + $0x7d0] sm:$0xff]
        %v526 = vld [vmem:[%s166 + $0x7d8] sm:$0xff]
        %v527 = vld [vmem:[%s166 + $0x7e0] sm:$0xff]
        %v528 = vld [vmem:[%s166 + $0x7e8] sm:$0xff]
        %v529 = vld [vmem:[%s166 + $0x7f0] sm:$0xff]
        %v530 = vld [vmem:[%s166 + $0x7f8] sm:$0xff]
        %v531 = vld [vmem:[%s166 + $0x800] sm:$0xff]
        %v532 = vld [vmem:[%s166 + $0x808] sm:$0xff]
        %v533 = vld [vmem:[%s166 + $0x810] sm:$0xff]
        %v534 = vld [vmem:[%s166 + $0x818] sm:$0xff]
        %v535 = vld [vmem:[%s166 + $0x820] sm:$0xff]
        %v536 = vld [vmem:[%s166 + $0x828] sm:$0xff]
        %v537 = vld [vmem:[%s166 + $0x830] sm:$0xff]
        %v538 = vld [vmem:[%s166 + $0x838] sm:$0xff]
        %v539 = vld [vmem:[%s166 + $0x840] sm:$0xff]
        %v540 = vld [vmem:[%s166 + $0x848] sm:$0xff]
        %v541 = vld [vmem:[%s166 + $0x850] sm:$0xff]
        %v542 = vld [vmem:[%s166 + $0x858] sm:$0xff]
        %v543 = vld [vmem:[%s166 + $0x860] sm:$0xff]
        %v544 = vld [vmem:[%s166 + $0x868] sm:$0xff]
        %v545 = vld [vmem:[%s166 + $0x870] sm:$0xff]
        %v546 = vld [vmem:[%s166 + $0x878] sm:$0xff]
        %v547 = vld [vmem:[%s166 + $0x880] sm:$0xff]
        %v548 = vld [vmem:[%s166 + $0x888] sm:$0xff]
        %v549 = vld [vmem:[%s166 + $0x890] sm:$0xff]
        %v550 = vld [vmem:[%s166 + $0x898] sm:$0xff]
        %v551 = vld [vmem:[%s166 + $0x8a0] sm:$0xff]
        %v552 = vld [vmem:[%s166 + $0x8a8] sm:$0xff]
        %v553 = vld [vmem:[%s166 + $0x8b0] sm:$0xff]
        %v554 = vld [vmem:[%s166 + $0x8b8] sm:$0xff]
        %v555 = vld [vmem:[%s166 + $0x8c0] sm:$0xff]
        %v556 = vld [vmem:[%s166 + $0x8c8] sm:$0xff]
        %v557 = vld [vmem:[%s166 + $0x8d0] sm:$0xff]
        %v558 = vld [vmem:[%s166 + $0x8d8] sm:$0xff]
        %v559 = vld [vmem:[%s166 + $0x8e0] sm:$0xff]
        %v560 = vld [vmem:[%s166 + $0x8e8] sm:$0xff]
        %v561 = vld [vmem:[%s166 + $0x8f0] sm:$0xff]
        %v562 = vld [vmem:[%s166 + $0x8f8] sm:$0xff]
        %v563 = vld [vmem:[%s166 + $0x900] sm:$0xff]
        %v564 = vld [vmem:[%s166 + $0x908] sm:$0xff]
        %v565 = vld [vmem:[%s166 + $0x910] sm:$0xff]
        %v566 = vld [vmem:[%s166 + $0x918] sm:$0xff]
        %v567 = vld [vmem:[%s166 + $0x920] sm:$0xff]
        %v568 = vld [vmem:[%s166 + $0x928] sm:$0xff]
        %v569 = vld [vmem:[%s166 + $0x930] sm:$0xff]
        %v570 = vld [vmem:[%s166 + $0x938] sm:$0xff]
        %v571 = vld [vmem:[%s166 + $0x940] sm:$0xff]
        %v572 = vld [vmem:[%s166 + $0x948] sm:$0xff]
        %v573 = vld [vmem:[%s166 + $0x950] sm:$0xff]
        %v574 = vld [vmem:[%s166 + $0x958] sm:$0xff]
        %v575 = vld [vmem:[%s166 + $0x960] sm:$0xff]
        %v576 = vld [vmem:[%s166 + $0x968] sm:$0xff]
        %v577 = vld [vmem:[%s166 + $0x970] sm:$0xff]
        %v578 = vld [vmem:[%s166 + $0x978] sm:$0xff]
        %v579 = vld [vmem:[%s166 + $0x980] sm:$0xff]
        %v580 = vld [vmem:[%s166 + $0x988] sm:$0xff]
        %v581 = vld [vmem:[%s166 + $0x990] sm:$0xff]
        %v582 = vld [vmem:[%s166 + $0x998] sm:$0xff]
        %v583 = vld [vmem:[%s166 + $0x9a0] sm:$0xff]
        %v584 = vld [vmem:[%s166 + $0x9a8] sm:$0xff]
        %v585 = vld [vmem:[%s166 + $0x9b0] sm:$0xff]
        %v586 = vld [vmem:[%s166 + $0x9b8] sm:$0xff]
        %v587 = vld [vmem:[%s166 + $0x9c0] sm:$0xff]
        %v588 = vld [vmem:[%s166 + $0x9c8] sm:$0xff]
        %v589 = vld [vmem:[%s166 + $0x9d0] sm:$0xff]
        %v590 = vld [vmem:[%s166 + $0x9d8] sm:$0xff]
        %v591 = vld [vmem:[%s166 + $0x9e0] sm:$0xff]
        %v592 = vld [vmem:[%s166 + $0x9e8] sm:$0xff]
        %v593 = vld [vmem:[%s166 + $0x9f0] sm:$0xff]
        %v594 = vld [vmem:[%s166 + $0x9f8] sm:$0xff]
        %v595 = vld [vmem:[%s166 + $0xa00] sm:$0xff]
        %v596 = vld [vmem:[%s166 + $0xa08] sm:$0xff]
        %v597 = vld [vmem:[%s166 + $0xa10] sm:$0xff]
        %v598 = vld [vmem:[%s166 + $0xa18] sm:$0xff]
        %v599 = vld [vmem:[%s166 + $0xa20] sm:$0xff]
        %v600 = vld [vmem:[%s166 + $0xa28] sm:$0xff]
        %v601 = vld [vmem:[%s166 + $0xa30] sm:$0xff]
        %v602 = vld [vmem:[%s166 + $0xa38] sm:$0xff]
        %v603 = vld [vmem:[%s166 + $0xa40] sm:$0xff]
        %v604 = vld [vmem:[%s166 + $0xa48] sm:$0xff]
        %v605 = vld [vmem:[%s166 + $0xa50] sm:$0xff]
        %v606 = vld [vmem:[%s166 + $0xa58] sm:$0xff]
        %v607 = vld [vmem:[%s166 + $0xa60] sm:$0xff]
        %v608 = vld [vmem:[%s166 + $0xa68] sm:$0xff]
        %v609 = vld [vmem:[%s166 + $0xa70] sm:$0xff]
        %v610 = vld [vmem:[%s166 + $0xa78] sm:$0xff]
        %v947 = vunpack.c.l.b16 %v275
        %v948 = vunpack.c.h.b16 %v275
        %v949 = vunpack.c.l.b16 %v276
        %v950 = vunpack.c.h.b16 %v276
        %v951 = vunpack.c.l.b16 %v277
        %v952 = vunpack.c.h.b16 %v277
        %v953 = vunpack.c.l.b16 %v278
        %v954 = vunpack.c.h.b16 %v278
        %v955 = vunpack.c.l.b16 %v279
        %v956 = vunpack.c.h.b16 %v279
        %v957 = vunpack.c.l.b16 %v280
        %v958 = vunpack.c.h.b16 %v280
        %v959 = vunpack.c.l.b16 %v281
        %v960 = vunpack.c.h.b16 %v281
        %v961 = vunpack.c.l.b16 %v282
        %v962 = vunpack.c.h.b16 %v282
        %v963 = vunpack.c.l.b16 %v283
        %v964 = vunpack.c.h.b16 %v283
        %v965 = vunpack.c.l.b16 %v284
        %v966 = vunpack.c.h.b16 %v284
        %v967 = vunpack.c.l.b16 %v285
        %v968 = vunpack.c.h.b16 %v285
        %v969 = vunpack.c.l.b16 %v286
        %v970 = vunpack.c.h.b16 %v286
        %v971 = vunpack.c.l.b16 %v287
        %v972 = vunpack.c.h.b16 %v287
        %v973 = vunpack.c.l.b16 %v288
        %v974 = vunpack.c.h.b16 %v288
        %v975 = vunpack.c.l.b16 %v289
        %v976 = vunpack.c.h.b16 %v289
        %v977 = vunpack.c.l.b16 %v290
        %v978 = vunpack.c.h.b16 %v290
        %v979 = vunpack.c.l.b16 %v291
        %v980 = vunpack.c.h.b16 %v291
        %v981 = vunpack.c.l.b16 %v292
        %v982 = vunpack.c.h.b16 %v292
        %v983 = vunpack.c.l.b16 %v293
        %v984 = vunpack.c.h.b16 %v293
        %v985 = vunpack.c.l.b16 %v294
        %v986 = vunpack.c.h.b16 %v294
        %v987 = vunpack.c.l.b16 %v295
        %v988 = vunpack.c.h.b16 %v295
        %v989 = vunpack.c.l.b16 %v296
        %v990 = vunpack.c.h.b16 %v296
        %v991 = vunpack.c.l.b16 %v297
        %v992 = vunpack.c.h.b16 %v297
        %v993 = vunpack.c.l.b16 %v298
        %v994 = vunpack.c.h.b16 %v298
        %v995 = vunpack.c.l.b16 %v299
        %v996 = vunpack.c.h.b16 %v299
        %v997 = vunpack.c.l.b16 %v300
        %v998 = vunpack.c.h.b16 %v300
        %v999 = vunpack.c.l.b16 %v301
        %v1000 = vunpack.c.h.b16 %v301
        %v1001 = vunpack.c.l.b16 %v302
        %v1002 = vunpack.c.h.b16 %v302
        %v1003 = vunpack.c.l.b16 %v303
        %v1004 = vunpack.c.h.b16 %v303
        %v1005 = vunpack.c.l.b16 %v304
        %v1006 = vunpack.c.h.b16 %v304
        %v1007 = vunpack.c.l.b16 %v305
        %v1008 = vunpack.c.h.b16 %v305
        %v1009 = vunpack.c.l.b16 %v306
        %v1010 = vunpack.c.h.b16 %v306
        %v1011 = vunpack.c.l.b16 %v307
        %v1012 = vunpack.c.h.b16 %v307
        %v1013 = vunpack.c.l.b16 %v308
        %v1014 = vunpack.c.h.b16 %v308
        %v1015 = vunpack.c.l.b16 %v309
        %v1016 = vunpack.c.h.b16 %v309
        %v1017 = vunpack.c.l.b16 %v310
        %v1018 = vunpack.c.h.b16 %v310
        %v1019 = vunpack.c.l.b16 %v311
        %v1020 = vunpack.c.h.b16 %v311
        %v1021 = vunpack.c.l.b16 %v312
        %v1022 = vunpack.c.h.b16 %v312
        %v1023 = vunpack.c.l.b16 %v313
        %v1024 = vunpack.c.h.b16 %v313
        %v1025 = vunpack.c.l.b16 %v314
        %v1026 = vunpack.c.h.b16 %v314
        %v1027 = vunpack.c.l.b16 %v315
        %v1028 = vunpack.c.h.b16 %v315
        %v1029 = vunpack.c.l.b16 %v316
        %v1030 = vunpack.c.h.b16 %v316
        %v1031 = vunpack.c.l.b16 %v317
        %v1032 = vunpack.c.h.b16 %v317
        %v1033 = vunpack.c.l.b16 %v318
        %v1034 = vunpack.c.h.b16 %v318
        %v1035 = vunpack.c.l.b16 %v319
        %v1036 = vunpack.c.h.b16 %v319
        %v1037 = vunpack.c.l.b16 %v320
        %v1038 = vunpack.c.h.b16 %v320
        %v1039 = vunpack.c.l.b16 %v321
        %v1040 = vunpack.c.h.b16 %v321
        %v1041 = vunpack.c.l.b16 %v322
        %v1042 = vunpack.c.h.b16 %v322
        %v1043 = vunpack.c.l.b16 %v323
        %v1044 = vunpack.c.h.b16 %v323
        %v1045 = vunpack.c.l.b16 %v324
        %v1046 = vunpack.c.h.b16 %v324
        %v1047 = vunpack.c.l.b16 %v325
        %v1048 = vunpack.c.h.b16 %v325
        %v1049 = vunpack.c.l.b16 %v326
        %v1050 = vunpack.c.h.b16 %v326
        %v1051 = vunpack.c.l.b16 %v327
        %v1052 = vunpack.c.h.b16 %v327
        %v1053 = vunpack.c.l.b16 %v328
        %v1054 = vunpack.c.h.b16 %v328
        %v1055 = vunpack.c.l.b16 %v329
        %v1056 = vunpack.c.h.b16 %v329
        %v1057 = vunpack.c.l.b16 %v330
        %v1058 = vunpack.c.h.b16 %v330
        %v1059 = vunpack.c.l.b16 %v331
        %v1060 = vunpack.c.h.b16 %v331
        %v1061 = vunpack.c.l.b16 %v332
        %v1062 = vunpack.c.h.b16 %v332
        %v1063 = vunpack.c.l.b16 %v333
        %v1064 = vunpack.c.h.b16 %v333
        %v1065 = vunpack.c.l.b16 %v334
        %v1066 = vunpack.c.h.b16 %v334
        %v1067 = vunpack.c.l.b16 %v335
        %v1068 = vunpack.c.h.b16 %v335
        %v1069 = vunpack.c.l.b16 %v336
        %v1070 = vunpack.c.h.b16 %v336
        %v1071 = vunpack.c.l.b16 %v337
        %v1072 = vunpack.c.h.b16 %v337
        %v1073 = vunpack.c.l.b16 %v338
        %v1074 = vunpack.c.h.b16 %v338
        %v1075 = vunpack.c.l.b16 %v339
        %v1076 = vunpack.c.h.b16 %v339
        %v1077 = vunpack.c.l.b16 %v340
        %v1078 = vunpack.c.h.b16 %v340
        %v1079 = vunpack.c.l.b16 %v341
        %v1080 = vunpack.c.h.b16 %v341
        %v1081 = vunpack.c.l.b16 %v342
        %v1082 = vunpack.c.h.b16 %v342
        %v1083 = vunpack.c.l.b16 %v343
        %v1084 = vunpack.c.h.b16 %v343
        %v1085 = vunpack.c.l.b16 %v344
        %v1086 = vunpack.c.h.b16 %v344
        %v1087 = vunpack.c.l.b16 %v345
        %v1088 = vunpack.c.h.b16 %v345
        %v1089 = vunpack.c.l.b16 %v346
        %v1090 = vunpack.c.h.b16 %v346
        %v1091 = vunpack.c.l.b16 %v347
        %v1092 = vunpack.c.h.b16 %v347
        %v1093 = vunpack.c.l.b16 %v348
        %v1094 = vunpack.c.h.b16 %v348
        %v1095 = vunpack.c.l.b16 %v349
        %v1096 = vunpack.c.h.b16 %v349
        %v1097 = vunpack.c.l.b16 %v350
        %v1098 = vunpack.c.h.b16 %v350
        %v1099 = vunpack.c.l.b16 %v351
        %v1100 = vunpack.c.h.b16 %v351
        %v1101 = vunpack.c.l.b16 %v352
        %v1102 = vunpack.c.h.b16 %v352
        %v1103 = vunpack.c.l.b16 %v353
        %v1104 = vunpack.c.h.b16 %v353
        %v1105 = vunpack.c.l.b16 %v354
        %v1106 = vunpack.c.h.b16 %v354
        %v1107 = vunpack.c.l.b16 %v355
        %v1108 = vunpack.c.h.b16 %v355
        %v1109 = vunpack.c.l.b16 %v356
        %v1110 = vunpack.c.h.b16 %v356
        %v1111 = vunpack.c.l.b16 %v357
        %v1112 = vunpack.c.h.b16 %v357
        %v1113 = vunpack.c.l.b16 %v358
        %v1114 = vunpack.c.h.b16 %v358
        %v1115 = vunpack.c.l.b16 %v359
        %v1116 = vunpack.c.h.b16 %v359
        %v1117 = vunpack.c.l.b16 %v360
        %v1118 = vunpack.c.h.b16 %v360
        %v1119 = vunpack.c.l.b16 %v361
        %v1120 = vunpack.c.h.b16 %v361
        %v1121 = vunpack.c.l.b16 %v362
        %v1122 = vunpack.c.h.b16 %v362
        %v1123 = vunpack.c.l.b16 %v363
        %v1124 = vunpack.c.h.b16 %v363
        %v1125 = vunpack.c.l.b16 %v364
        %v1126 = vunpack.c.h.b16 %v364
        %v1127 = vunpack.c.l.b16 %v365
        %v1128 = vunpack.c.h.b16 %v365
        %v1129 = vunpack.c.l.b16 %v366
        %v1130 = vunpack.c.h.b16 %v366
        %v1131 = vunpack.c.l.b16 %v367
        %v1132 = vunpack.c.h.b16 %v367
        %v1133 = vunpack.c.l.b16 %v368
        %v1134 = vunpack.c.h.b16 %v368
        %v1135 = vunpack.c.l.b16 %v369
        %v1136 = vunpack.c.h.b16 %v369
        %v1137 = vunpack.c.l.b16 %v370
        %v1138 = vunpack.c.h.b16 %v370
        %v1139 = vunpack.c.l.b16 %v371
        %v1140 = vunpack.c.h.b16 %v371
        %v1141 = vunpack.c.l.b16 %v372
        %v1142 = vunpack.c.h.b16 %v372
        %v1143 = vunpack.c.l.b16 %v373
        %v1144 = vunpack.c.h.b16 %v373
        %v1145 = vunpack.c.l.b16 %v374
        %v1146 = vunpack.c.h.b16 %v374
        %v1147 = vunpack.c.l.b16 %v375
        %v1148 = vunpack.c.h.b16 %v375
        %v1149 = vunpack.c.l.b16 %v376
        %v1150 = vunpack.c.h.b16 %v376
        %v1151 = vunpack.c.l.b16 %v377
        %v1152 = vunpack.c.h.b16 %v377
        %v1153 = vunpack.c.l.b16 %v378
        %v1154 = vunpack.c.h.b16 %v378
        %v1155 = vunpack.c.l.b16 %v379
        %v1156 = vunpack.c.h.b16 %v379
        %v1157 = vunpack.c.l.b16 %v380
        %v1158 = vunpack.c.h.b16 %v380
        %v1159 = vunpack.c.l.b16 %v381
        %v1160 = vunpack.c.h.b16 %v381
        %v1161 = vunpack.c.l.b16 %v382
        %v1162 = vunpack.c.h.b16 %v382
        %v1163 = vunpack.c.l.b16 %v383
        %v1164 = vunpack.c.h.b16 %v383
        %v1165 = vunpack.c.l.b16 %v384
        %v1166 = vunpack.c.h.b16 %v384
        %v1167 = vunpack.c.l.b16 %v385
        %v1168 = vunpack.c.h.b16 %v385
        %v1169 = vunpack.c.l.b16 %v386
        %v1170 = vunpack.c.h.b16 %v386
        %v1171 = vunpack.c.l.b16 %v387
        %v1172 = vunpack.c.h.b16 %v387
        %v1173 = vunpack.c.l.b16 %v388
        %v1174 = vunpack.c.h.b16 %v388
        %v1175 = vunpack.c.l.b16 %v389
        %v1176 = vunpack.c.h.b16 %v389
        %v1177 = vunpack.c.l.b16 %v390
        %v1178 = vunpack.c.h.b16 %v390
        %v1179 = vunpack.c.l.b16 %v391
        %v1180 = vunpack.c.h.b16 %v391
        %v1181 = vunpack.c.l.b16 %v392
        %v1182 = vunpack.c.h.b16 %v392
        %v1183 = vunpack.c.l.b16 %v393
        %v1184 = vunpack.c.h.b16 %v393
        %v1185 = vunpack.c.l.b16 %v394
        %v1186 = vunpack.c.h.b16 %v394
        %v1187 = vunpack.c.l.b16 %v395
        %v1188 = vunpack.c.h.b16 %v395
        %v1189 = vunpack.c.l.b16 %v396
        %v1190 = vunpack.c.h.b16 %v396
        %v1191 = vunpack.c.l.b16 %v397
        %v1192 = vunpack.c.h.b16 %v397
        %v1193 = vunpack.c.l.b16 %v398
        %v1194 = vunpack.c.h.b16 %v398
        %v1195 = vunpack.c.l.b16 %v399
        %v1196 = vunpack.c.h.b16 %v399
        %v1197 = vunpack.c.l.b16 %v400
        %v1198 = vunpack.c.h.b16 %v400
        %v1199 = vunpack.c.l.b16 %v401
        %v1200 = vunpack.c.h.b16 %v401
        %v1201 = vunpack.c.l.b16 %v402
        %v1202 = vunpack.c.h.b16 %v402
        %v1203 = vunpack.c.l.b16 %v403
        %v1204 = vunpack.c.h.b16 %v403
        %v1205 = vunpack.c.l.b16 %v404
        %v1206 = vunpack.c.h.b16 %v404
        %v1207 = vunpack.c.l.b16 %v405
        %v1208 = vunpack.c.h.b16 %v405
        %v1209 = vunpack.c.l.b16 %v406
        %v1210 = vunpack.c.h.b16 %v406
        %v1211 = vunpack.c.l.b16 %v407
        %v1212 = vunpack.c.h.b16 %v407
        %v1213 = vunpack.c.l.b16 %v408
        %v1214 = vunpack.c.h.b16 %v408
        %v1215 = vunpack.c.l.b16 %v409
        %v1216 = vunpack.c.h.b16 %v409
        %v1217 = vunpack.c.l.b16 %v410
        %v1218 = vunpack.c.h.b16 %v410
        %v1219 = vunpack.c.l.b16 %v411
        %v1220 = vunpack.c.h.b16 %v411
        %v1221 = vunpack.c.l.b16 %v412
        %v1222 = vunpack.c.h.b16 %v412
        %v1223 = vunpack.c.l.b16 %v413
        %v1224 = vunpack.c.h.b16 %v413
        %v1225 = vunpack.c.l.b16 %v414
        %v1226 = vunpack.c.h.b16 %v414
        %v1227 = vunpack.c.l.b16 %v415
        %v1228 = vunpack.c.h.b16 %v415
        %v1229 = vunpack.c.l.b16 %v416
        %v1230 = vunpack.c.h.b16 %v416
        %v1231 = vunpack.c.l.b16 %v417
        %v1232 = vunpack.c.h.b16 %v417
        %v1233 = vunpack.c.l.b16 %v418
        %v1234 = vunpack.c.h.b16 %v418
        %v1235 = vunpack.c.l.b16 %v419
        %v1236 = vunpack.c.h.b16 %v419
        %v1237 = vunpack.c.l.b16 %v420
        %v1238 = vunpack.c.h.b16 %v420
        %v1239 = vunpack.c.l.b16 %v421
        %v1240 = vunpack.c.h.b16 %v421
        %v1241 = vunpack.c.l.b16 %v422
        %v1242 = vunpack.c.h.b16 %v422
        %v1243 = vunpack.c.l.b16 %v423
        %v1244 = vunpack.c.h.b16 %v423
        %v1245 = vunpack.c.l.b16 %v424
        %v1246 = vunpack.c.h.b16 %v424
        %v1247 = vunpack.c.l.b16 %v425
        %v1248 = vunpack.c.h.b16 %v425
        %v1249 = vunpack.c.l.b16 %v426
        %v1250 = vunpack.c.h.b16 %v426
        %v1251 = vunpack.c.l.b16 %v427
        %v1252 = vunpack.c.h.b16 %v427
        %v1253 = vunpack.c.l.b16 %v428
        %v1254 = vunpack.c.h.b16 %v428
        %v1255 = vunpack.c.l.b16 %v429
        %v1256 = vunpack.c.h.b16 %v429
        %v1257 = vunpack.c.l.b16 %v430
        %v1258 = vunpack.c.h.b16 %v430
        %v1259 = vunpack.c.l.b16 %v431
        %v1260 = vunpack.c.h.b16 %v431
        %v1261 = vunpack.c.l.b16 %v432
        %v1262 = vunpack.c.h.b16 %v432
        %v1263 = vunpack.c.l.b16 %v433
        %v1264 = vunpack.c.h.b16 %v433
        %v1265 = vunpack.c.l.b16 %v434
        %v1266 = vunpack.c.h.b16 %v434
        %v1267 = vunpack.c.l.b16 %v435
        %v1268 = vunpack.c.h.b16 %v435
        %v1269 = vunpack.c.l.b16 %v436
        %v1270 = vunpack.c.h.b16 %v436
        %v1271 = vunpack.c.l.b16 %v437
        %v1272 = vunpack.c.h.b16 %v437
        %v1273 = vunpack.c.l.b16 %v438
        %v1274 = vunpack.c.h.b16 %v438
        %v1275 = vunpack.c.l.b16 %v439
        %v1276 = vunpack.c.h.b16 %v439
        %v1277 = vunpack.c.l.b16 %v440
        %v1278 = vunpack.c.h.b16 %v440
        %v1279 = vunpack.c.l.b16 %v441
        %v1280 = vunpack.c.h.b16 %v441
        %v1281 = vunpack.c.l.b16 %v442
        %v1282 = vunpack.c.h.b16 %v442
        %v1283 = vunpack.c.l.b16 %v443
        %v1284 = vunpack.c.h.b16 %v443
        %v1285 = vunpack.c.l.b16 %v444
        %v1286 = vunpack.c.h.b16 %v444
        %v1287 = vunpack.c.l.b16 %v445
        %v1288 = vunpack.c.h.b16 %v445
        %v1289 = vunpack.c.l.b16 %v446
        %v1290 = vunpack.c.h.b16 %v446
        %v1291 = vunpack.c.l.b16 %v447
        %v1292 = vunpack.c.h.b16 %v447
        %v1293 = vunpack.c.l.b16 %v448
        %v1294 = vunpack.c.h.b16 %v448
        %v1295 = vunpack.c.l.b16 %v449
        %v1296 = vunpack.c.h.b16 %v449
        %v1297 = vunpack.c.l.b16 %v450
        %v1298 = vunpack.c.h.b16 %v450
        %v1299 = vunpack.c.l.b16 %v451
        %v1300 = vunpack.c.h.b16 %v451
        %v1301 = vunpack.c.l.b16 %v452
        %v1302 = vunpack.c.h.b16 %v452
        %v1303 = vunpack.c.l.b16 %v453
        %v1304 = vunpack.c.h.b16 %v453
        %v1305 = vunpack.c.l.b16 %v454
        %v1306 = vunpack.c.h.b16 %v454
        %v1307 = vunpack.c.l.b16 %v455
        %v1308 = vunpack.c.h.b16 %v455
        %v1309 = vunpack.c.l.b16 %v456
        %v1310 = vunpack.c.h.b16 %v456
        %v1311 = vunpack.c.l.b16 %v457
        %v1312 = vunpack.c.h.b16 %v457
        %v1313 = vunpack.c.l.b16 %v458
        %v1314 = vunpack.c.h.b16 %v458
        %v1315 = vunpack.c.l.b16 %v459
        %v1316 = vunpack.c.h.b16 %v459
        %v1317 = vunpack.c.l.b16 %v460
        %v1318 = vunpack.c.h.b16 %v460
        %v1319 = vunpack.c.l.b16 %v461
        %v1320 = vunpack.c.h.b16 %v461
        %v1321 = vunpack.c.l.b16 %v462
        %v1322 = vunpack.c.h.b16 %v462
        %v1323 = vunpack.c.l.b16 %v463
        %v1324 = vunpack.c.h.b16 %v463
        %v1325 = vunpack.c.l.b16 %v464
        %v1326 = vunpack.c.h.b16 %v464
        %v1327 = vunpack.c.l.b16 %v465
        %v1328 = vunpack.c.h.b16 %v465
        %v1329 = vunpack.c.l.b16 %v466
        %v1330 = vunpack.c.h.b16 %v466
        %v1331 = vunpack.c.l.b16 %v467
        %v1332 = vunpack.c.h.b16 %v467
        %v1333 = vunpack.c.l.b16 %v468
        %v1334 = vunpack.c.h.b16 %v468
        %v1335 = vunpack.c.l.b16 %v469
        %v1336 = vunpack.c.h.b16 %v469
        %v1337 = vunpack.c.l.b16 %v470
        %v1338 = vunpack.c.h.b16 %v470
        %v1339 = vunpack.c.l.b16 %v471
        %v1340 = vunpack.c.h.b16 %v471
        %v1341 = vunpack.c.l.b16 %v472
        %v1342 = vunpack.c.h.b16 %v472
        %v1343 = vunpack.c.l.b16 %v473
        %v1344 = vunpack.c.h.b16 %v473
        %v1345 = vunpack.c.l.b16 %v474
        %v1346 = vunpack.c.h.b16 %v474
        %v1347 = vunpack.c.l.b16 %v475
        %v1348 = vunpack.c.h.b16 %v475
        %v1349 = vunpack.c.l.b16 %v476
        %v1350 = vunpack.c.h.b16 %v476
        %v1351 = vunpack.c.l.b16 %v477
        %v1352 = vunpack.c.h.b16 %v477
        %v1353 = vunpack.c.l.b16 %v478
        %v1354 = vunpack.c.h.b16 %v478
        %v1355 = vunpack.c.l.b16 %v479
        %v1356 = vunpack.c.h.b16 %v479
        %v1357 = vunpack.c.l.b16 %v480
        %v1358 = vunpack.c.h.b16 %v480
        %v1359 = vunpack.c.l.b16 %v481
        %v1360 = vunpack.c.h.b16 %v481
        %v1361 = vunpack.c.l.b16 %v482
        %v1362 = vunpack.c.h.b16 %v482
        %v1363 = vunpack.c.l.b16 %v483
        %v1364 = vunpack.c.h.b16 %v483
        %v1365 = vunpack.c.l.b16 %v484
        %v1366 = vunpack.c.h.b16 %v484
        %v1367 = vunpack.c.l.b16 %v485
        %v1368 = vunpack.c.h.b16 %v485
        %v1369 = vunpack.c.l.b16 %v486
        %v1370 = vunpack.c.h.b16 %v486
        %v1371 = vunpack.c.l.b16 %v487
        %v1372 = vunpack.c.h.b16 %v487
        %v1373 = vunpack.c.l.b16 %v488
        %v1374 = vunpack.c.h.b16 %v488
        %v1375 = vunpack.c.l.b16 %v489
        %v1376 = vunpack.c.h.b16 %v489
        %v1377 = vunpack.c.l.b16 %v490
        %v1378 = vunpack.c.h.b16 %v490
        %v1379 = vunpack.c.l.b16 %v491
        %v1380 = vunpack.c.h.b16 %v491
        %v1381 = vunpack.c.l.b16 %v492
        %v1382 = vunpack.c.h.b16 %v492
        %v1383 = vunpack.c.l.b16 %v493
        %v1384 = vunpack.c.h.b16 %v493
        %v1385 = vunpack.c.l.b16 %v494
        %v1386 = vunpack.c.h.b16 %v494
        %v1387 = vunpack.c.l.b16 %v495
        %v1388 = vunpack.c.h.b16 %v495
        %v1389 = vunpack.c.l.b16 %v496
        %v1390 = vunpack.c.h.b16 %v496
        %v1391 = vunpack.c.l.b16 %v497
        %v1392 = vunpack.c.h.b16 %v497
        %v1393 = vunpack.c.l.b16 %v498
        %v1394 = vunpack.c.h.b16 %v498
        %v1395 = vunpack.c.l.b16 %v499
        %v1396 = vunpack.c.h.b16 %v499
        %v1397 = vunpack.c.l.b16 %v500
        %v1398 = vunpack.c.h.b16 %v500
        %v1399 = vunpack.c.l.b16 %v501
        %v1400 = vunpack.c.h.b16 %v501
        %v1401 = vunpack.c.l.b16 %v502
        %v1402 = vunpack.c.h.b16 %v502
        %v1403 = vunpack.c.l.b16 %v503
        %v1404 = vunpack.c.h.b16 %v503
        %v1405 = vunpack.c.l.b16 %v504
        %v1406 = vunpack.c.h.b16 %v504
        %v1407 = vunpack.c.l.b16 %v505
        %v1408 = vunpack.c.h.b16 %v505
        %v1409 = vunpack.c.l.b16 %v506
        %v1410 = vunpack.c.h.b16 %v506
        %v1411 = vunpack.c.l.b16 %v507
        %v1412 = vunpack.c.h.b16 %v507
        %v1413 = vunpack.c.l.b16 %v508
        %v1414 = vunpack.c.h.b16 %v508
        %v1415 = vunpack.c.l.b16 %v509
        %v1416 = vunpack.c.h.b16 %v509
        %v1417 = vunpack.c.l.b16 %v510
        %v1418 = vunpack.c.h.b16 %v510
        %v1419 = vunpack.c.l.b16 %v511
        %v1420 = vunpack.c.h.b16 %v511
        %v1421 = vunpack.c.l.b16 %v512
        %v1422 = vunpack.c.h.b16 %v512
        %v1423 = vunpack.c.l.b16 %v513
        %v1424 = vunpack.c.h.b16 %v513
        %v1425 = vunpack.c.l.b16 %v514
        %v1426 = vunpack.c.h.b16 %v514
        %v1427 = vunpack.c.l.b16 %v515
        %v1428 = vunpack.c.h.b16 %v515
        %v1429 = vunpack.c.l.b16 %v516
        %v1430 = vunpack.c.h.b16 %v516
        %v1431 = vunpack.c.l.b16 %v517
        %v1432 = vunpack.c.h.b16 %v517
        %v1433 = vunpack.c.l.b16 %v518
        %v1434 = vunpack.c.h.b16 %v518
        %v1435 = vunpack.c.l.b16 %v519
        %v1436 = vunpack.c.h.b16 %v519
        %v1437 = vunpack.c.l.b16 %v520
        %v1438 = vunpack.c.h.b16 %v520
        %v1439 = vunpack.c.l.b16 %v521
        %v1440 = vunpack.c.h.b16 %v521
        %v1441 = vunpack.c.l.b16 %v522
        %v1442 = vunpack.c.h.b16 %v522
        %v1443 = vunpack.c.l.b16 %v523
        %v1444 = vunpack.c.h.b16 %v523
        %v1445 = vunpack.c.l.b16 %v524
        %v1446 = vunpack.c.h.b16 %v524
        %v1447 = vunpack.c.l.b16 %v525
        %v1448 = vunpack.c.h.b16 %v525
        %v1449 = vunpack.c.l.b16 %v526
        %v1450 = vunpack.c.h.b16 %v526
        %v1451 = vunpack.c.l.b16 %v527
        %v1452 = vunpack.c.h.b16 %v527
        %v1453 = vunpack.c.l.b16 %v528
        %v1454 = vunpack.c.h.b16 %v528
        %v1455 = vunpack.c.l.b16 %v529
        %v1456 = vunpack.c.h.b16 %v529
        %v1457 = vunpack.c.l.b16 %v530
        %v1458 = vunpack.c.h.b16 %v530
        %v1459 = vunpack.c.l.b16 %v531
        %v1460 = vunpack.c.h.b16 %v531
        %v1461 = vunpack.c.l.b16 %v532
        %v1462 = vunpack.c.h.b16 %v532
        %v1463 = vunpack.c.l.b16 %v533
        %v1464 = vunpack.c.h.b16 %v533
        %v1465 = vunpack.c.l.b16 %v534
        %v1466 = vunpack.c.h.b16 %v534
        %v1467 = vunpack.c.l.b16 %v535
        %v1468 = vunpack.c.h.b16 %v535
        %v1469 = vunpack.c.l.b16 %v536
        %v1470 = vunpack.c.h.b16 %v536
        %v1471 = vunpack.c.l.b16 %v537
        %v1472 = vunpack.c.h.b16 %v537
        %v1473 = vunpack.c.l.b16 %v538
        %v1474 = vunpack.c.h.b16 %v538
        %v1475 = vunpack.c.l.b16 %v539
        %v1476 = vunpack.c.h.b16 %v539
        %v1477 = vunpack.c.l.b16 %v540
        %v1478 = vunpack.c.h.b16 %v540
        %v1479 = vunpack.c.l.b16 %v541
        %v1480 = vunpack.c.h.b16 %v541
        %v1481 = vunpack.c.l.b16 %v542
        %v1482 = vunpack.c.h.b16 %v542
        %v1483 = vunpack.c.l.b16 %v543
        %v1484 = vunpack.c.h.b16 %v543
        %v1485 = vunpack.c.l.b16 %v544
        %v1486 = vunpack.c.h.b16 %v544
        %v1487 = vunpack.c.l.b16 %v545
        %v1488 = vunpack.c.h.b16 %v545
        %v1489 = vunpack.c.l.b16 %v546
        %v1490 = vunpack.c.h.b16 %v546
        %v1491 = vunpack.c.l.b16 %v547
        %v1492 = vunpack.c.h.b16 %v547
        %v1493 = vunpack.c.l.b16 %v548
        %v1494 = vunpack.c.h.b16 %v548
        %v1495 = vunpack.c.l.b16 %v549
        %v1496 = vunpack.c.h.b16 %v549
        %v1497 = vunpack.c.l.b16 %v550
        %v1498 = vunpack.c.h.b16 %v550
        %v1499 = vunpack.c.l.b16 %v551
        %v1500 = vunpack.c.h.b16 %v551
        %v1501 = vunpack.c.l.b16 %v552
        %v1502 = vunpack.c.h.b16 %v552
        %v1503 = vunpack.c.l.b16 %v553
        %v1504 = vunpack.c.h.b16 %v553
        %v1505 = vunpack.c.l.b16 %v554
        %v1506 = vunpack.c.h.b16 %v554
        %v1507 = vunpack.c.l.b16 %v555
        %v1508 = vunpack.c.h.b16 %v555
        %v1509 = vunpack.c.l.b16 %v556
        %v1510 = vunpack.c.h.b16 %v556
        %v1511 = vunpack.c.l.b16 %v557
        %v1512 = vunpack.c.h.b16 %v557
        %v1513 = vunpack.c.l.b16 %v558
        %v1514 = vunpack.c.h.b16 %v558
        %v1515 = vunpack.c.l.b16 %v559
        %v1516 = vunpack.c.h.b16 %v559
        %v1517 = vunpack.c.l.b16 %v560
        %v1518 = vunpack.c.h.b16 %v560
        %v1519 = vunpack.c.l.b16 %v561
        %v1520 = vunpack.c.h.b16 %v561
        %v1521 = vunpack.c.l.b16 %v562
        %v1522 = vunpack.c.h.b16 %v562
        %v1523 = vunpack.c.l.b16 %v563
        %v1524 = vunpack.c.h.b16 %v563
        %v1525 = vunpack.c.l.b16 %v564
        %v1526 = vunpack.c.h.b16 %v564
        %v1527 = vunpack.c.l.b16 %v565
        %v1528 = vunpack.c.h.b16 %v565
        %v1529 = vunpack.c.l.b16 %v566
        %v1530 = vunpack.c.h.b16 %v566
        %v1531 = vunpack.c.l.b16 %v567
        %v1532 = vunpack.c.h.b16 %v567
        %v1533 = vunpack.c.l.b16 %v568
        %v1534 = vunpack.c.h.b16 %v568
        %v1535 = vunpack.c.l.b16 %v569
        %v1536 = vunpack.c.h.b16 %v569
        %v1537 = vunpack.c.l.b16 %v570
        %v1538 = vunpack.c.h.b16 %v570
        %v1539 = vunpack.c.l.b16 %v571
        %v1540 = vunpack.c.h.b16 %v571
        %v1541 = vunpack.c.l.b16 %v572
        %v1542 = vunpack.c.h.b16 %v572
        %v1543 = vunpack.c.l.b16 %v573
        %v1544 = vunpack.c.h.b16 %v573
        %v1545 = vunpack.c.l.b16 %v574
        %v1546 = vunpack.c.h.b16 %v574
        %v1547 = vunpack.c.l.b16 %v575
        %v1548 = vunpack.c.h.b16 %v575
        %v1549 = vunpack.c.l.b16 %v576
        %v1550 = vunpack.c.h.b16 %v576
        %v1551 = vunpack.c.l.b16 %v577
        %v1552 = vunpack.c.h.b16 %v577
        %v1553 = vunpack.c.l.b16 %v578
        %v1554 = vunpack.c.h.b16 %v578
        %v1555 = vunpack.c.l.b16 %v579
        %v1556 = vunpack.c.h.b16 %v579
        %v1557 = vunpack.c.l.b16 %v580
        %v1558 = vunpack.c.h.b16 %v580
        %v1559 = vunpack.c.l.b16 %v581
        %v1560 = vunpack.c.h.b16 %v581
        %v1561 = vunpack.c.l.b16 %v582
        %v1562 = vunpack.c.h.b16 %v582
        %v1563 = vunpack.c.l.b16 %v583
        %v1564 = vunpack.c.h.b16 %v583
        %v1565 = vunpack.c.l.b16 %v584
        %v1566 = vunpack.c.h.b16 %v584
        %v1567 = vunpack.c.l.b16 %v585
        %v1568 = vunpack.c.h.b16 %v585
        %v1569 = vunpack.c.l.b16 %v586
        %v1570 = vunpack.c.h.b16 %v586
        %v1571 = vunpack.c.l.b16 %v587
        %v1572 = vunpack.c.h.b16 %v587
        %v1573 = vunpack.c.l.b16 %v588
        %v1574 = vunpack.c.h.b16 %v588
        %v1575 = vunpack.c.l.b16 %v589
        %v1576 = vunpack.c.h.b16 %v589
        %v1577 = vunpack.c.l.b16 %v590
        %v1578 = vunpack.c.h.b16 %v590
        %v1579 = vunpack.c.l.b16 %v591
        %v1580 = vunpack.c.h.b16 %v591
        %v1581 = vunpack.c.l.b16 %v592
        %v1582 = vunpack.c.h.b16 %v592
        %v1583 = vunpack.c.l.b16 %v593
        %v1584 = vunpack.c.h.b16 %v593
        %v1585 = vunpack.c.l.b16 %v594
        %v1586 = vunpack.c.h.b16 %v594
        %v1587 = vunpack.c.l.b16 %v595
        %v1588 = vunpack.c.h.b16 %v595
        %v1589 = vunpack.c.l.b16 %v596
        %v1590 = vunpack.c.h.b16 %v596
        %v1591 = vunpack.c.l.b16 %v597
        %v1592 = vunpack.c.h.b16 %v597
        %v1593 = vunpack.c.l.b16 %v598
        %v1594 = vunpack.c.h.b16 %v598
        %v1595 = vunpack.c.l.b16 %v599
        %v1596 = vunpack.c.h.b16 %v599
        %v1597 = vunpack.c.l.b16 %v600
        %v1598 = vunpack.c.h.b16 %v600
        %v1599 = vunpack.c.l.b16 %v601
        %v1600 = vunpack.c.h.b16 %v601
        %v1601 = vunpack.c.l.b16 %v602
        %v1602 = vunpack.c.h.b16 %v602
        %v1603 = vunpack.c.l.b16 %v603
        %v1604 = vunpack.c.h.b16 %v603
        %v1605 = vunpack.c.l.b16 %v604
        %v1606 = vunpack.c.h.b16 %v604
        %v1607 = vunpack.c.l.b16 %v605
        %v1608 = vunpack.c.h.b16 %v605
        %v1609 = vunpack.c.l.b16 %v606
        %v1610 = vunpack.c.h.b16 %v606
        %v1611 = vunpack.c.l.b16 %v607
        %v1612 = vunpack.c.h.b16 %v607
        %v1613 = vunpack.c.l.b16 %v608
        %v1614 = vunpack.c.h.b16 %v608
        %v1615 = vunpack.c.l.b16 %v609
        %v1616 = vunpack.c.h.b16 %v609
        %v1617 = vunpack.c.l.b16 %v610
        %v1618 = vunpack.c.h.b16 %v610
        %v1619 = vpack.c.b16 %v949, %v947
        %v1620 = vpack.c.b16 %v950, %v948
        %v1621 = vpack.c.b16 %v953, %v951
        %v1622 = vpack.c.b16 %v954, %v952
        %v1623 = vpack.c.b16 %v957, %v955
        %v1624 = vpack.c.b16 %v958, %v956
        %v1625 = vpack.c.b16 %v961, %v959
        %v1626 = vpack.c.b16 %v962, %v960
        %v1627 = vpack.c.b16 %v965, %v963
        %v1628 = vpack.c.b16 %v966, %v964
        %v1629 = vpack.c.b16 %v969, %v967
        %v1630 = vpack.c.b16 %v970, %v968
        %v1631 = vpack.c.b16 %v973, %v971
        %v1632 = vpack.c.b16 %v974, %v972
        %v1633 = vpack.c.b16 %v977, %v975
        %v1634 = vpack.c.b16 %v978, %v976
        %v1635 = vpack.c.b16 %v981, %v979
        %v1636 = vpack.c.b16 %v982, %v980
        %v1637 = vpack.c.b16 %v985, %v983
        %v1638 = vpack.c.b16 %v986, %v984
        %v1639 = vpack.c.b16 %v989, %v987
        %v1640 = vpack.c.b16 %v990, %v988
        %v1641 = vpack.c.b16 %v993, %v991
        %v1642 = vpack.c.b16 %v994, %v992
        %v1643 = vpack.c.b16 %v997, %v995
        %v1644 = vpack.c.b16 %v998, %v996
        %v1645 = vpack.c.b16 %v1001, %v999
        %v1646 = vpack.c.b16 %v1002, %v1000
        %v1647 = vpack.c.b16 %v1005, %v1003
        %v1648 = vpack.c.b16 %v1006, %v1004
        %v1649 = vpack.c.b16 %v1009, %v1007
        %v1650 = vpack.c.b16 %v1010, %v1008
        %v1651 = vpack.c.b16 %v1013, %v1011
        %v1652 = vpack.c.b16 %v1014, %v1012
        %v1653 = vpack.c.b16 %v1017, %v1015
        %v1654 = vpack.c.b16 %v1018, %v1016
        %v1655 = vpack.c.b16 %v1021, %v1019
        %v1656 = vpack.c.b16 %v1022, %v1020
        %v1657 = vpack.c.b16 %v1025, %v1023
        %v1658 = vpack.c.b16 %v1026, %v1024
        %v1659 = vpack.c.b16 %v1029, %v1027
        %v1660 = vpack.c.b16 %v1030, %v1028
        %v1661 = vpack.c.b16 %v1033, %v1031
        %v1662 = vpack.c.b16 %v1034, %v1032
        %v1663 = vpack.c.b16 %v1037, %v1035
        %v1664 = vpack.c.b16 %v1038, %v1036
        %v1665 = vpack.c.b16 %v1041, %v1039
        %v1666 = vpack.c.b16 %v1042, %v1040
        %v1667 = vpack.c.b16 %v1045, %v1043
        %v1668 = vpack.c.b16 %v1046, %v1044
        %v1669 = vpack.c.b16 %v1049, %v1047
        %v1670 = vpack.c.b16 %v1050, %v1048
        %v1671 = vpack.c.b16 %v1053, %v1051
        %v1672 = vpack.c.b16 %v1054, %v1052
        %v1673 = vpack.c.b16 %v1057, %v1055
        %v1674 = vpack.c.b16 %v1058, %v1056
        %v1675 = vpack.c.b16 %v1061, %v1059
        %v1676 = vpack.c.b16 %v1062, %v1060
        %v1677 = vpack.c.b16 %v1065, %v1063
        %v1678 = vpack.c.b16 %v1066, %v1064
        %v1679 = vpack.c.b16 %v1069, %v1067
        %v1680 = vpack.c.b16 %v1070, %v1068
        %v1681 = vpack.c.b16 %v1073, %v1071
        %v1682 = vpack.c.b16 %v1074, %v1072
        %v1683 = vpack.c.b16 %v1077, %v1075
        %v1684 = vpack.c.b16 %v1078, %v1076
        %v1685 = vpack.c.b16 %v1081, %v1079
        %v1686 = vpack.c.b16 %v1082, %v1080
        %v1687 = vpack.c.b16 %v1085, %v1083
        %v1688 = vpack.c.b16 %v1086, %v1084
        %v1689 = vpack.c.b16 %v1089, %v1087
        %v1690 = vpack.c.b16 %v1090, %v1088
        %v1691 = vpack.c.b16 %v1093, %v1091
        %v1692 = vpack.c.b16 %v1094, %v1092
        %v1693 = vpack.c.b16 %v1097, %v1095
        %v1694 = vpack.c.b16 %v1098, %v1096
        %v1695 = vpack.c.b16 %v1101, %v1099
        %v1696 = vpack.c.b16 %v1102, %v1100
        %v1697 = vpack.c.b16 %v1105, %v1103
        %v1698 = vpack.c.b16 %v1106, %v1104
        %v1699 = vpack.c.b16 %v1109, %v1107
        %v1700 = vpack.c.b16 %v1110, %v1108
        %v1701 = vpack.c.b16 %v1113, %v1111
        %v1702 = vpack.c.b16 %v1114, %v1112
        %v1703 = vpack.c.b16 %v1117, %v1115
        %v1704 = vpack.c.b16 %v1118, %v1116
        %v1705 = vpack.c.b16 %v1121, %v1119
        %v1706 = vpack.c.b16 %v1122, %v1120
        %v1707 = vpack.c.b16 %v1125, %v1123
        %v1708 = vpack.c.b16 %v1126, %v1124
        %v1709 = vpack.c.b16 %v1129, %v1127
        %v1710 = vpack.c.b16 %v1130, %v1128
        %v1711 = vpack.c.b16 %v1133, %v1131
        %v1712 = vpack.c.b16 %v1134, %v1132
        %v1713 = vpack.c.b16 %v1137, %v1135
        %v1714 = vpack.c.b16 %v1138, %v1136
        %v1715 = vpack.c.b16 %v1141, %v1139
        %v1716 = vpack.c.b16 %v1142, %v1140
        %v1717 = vpack.c.b16 %v1145, %v1143
        %v1718 = vpack.c.b16 %v1146, %v1144
        %v1719 = vpack.c.b16 %v1149, %v1147
        %v1720 = vpack.c.b16 %v1150, %v1148
        %v1721 = vpack.c.b16 %v1153, %v1151
        %v1722 = vpack.c.b16 %v1154, %v1152
        %v1723 = vpack.c.b16 %v1157, %v1155
        %v1724 = vpack.c.b16 %v1158, %v1156
        %v1725 = vpack.c.b16 %v1161, %v1159
        %v1726 = vpack.c.b16 %v1162, %v1160
        %v1727 = vpack.c.b16 %v1165, %v1163
        %v1728 = vpack.c.b16 %v1166, %v1164
        %v1729 = vpack.c.b16 %v1169, %v1167
        %v1730 = vpack.c.b16 %v1170, %v1168
        %v1731 = vpack.c.b16 %v1173, %v1171
        %v1732 = vpack.c.b16 %v1174, %v1172
        %v1733 = vpack.c.b16 %v1177, %v1175
        %v1734 = vpack.c.b16 %v1178, %v1176
        %v1735 = vpack.c.b16 %v1181, %v1179
        %v1736 = vpack.c.b16 %v1182, %v1180
        %v1737 = vpack.c.b16 %v1185, %v1183
        %v1738 = vpack.c.b16 %v1186, %v1184
        %v1739 = vpack.c.b16 %v1189, %v1187
        %v1740 = vpack.c.b16 %v1190, %v1188
        %v1741 = vpack.c.b16 %v1193, %v1191
        %v1742 = vpack.c.b16 %v1194, %v1192
        %v1743 = vpack.c.b16 %v1197, %v1195
        %v1744 = vpack.c.b16 %v1198, %v1196
        %v1745 = vpack.c.b16 %v1201, %v1199
        %v1746 = vpack.c.b16 %v1202, %v1200
        %v1747 = vpack.c.b16 %v1205, %v1203
        %v1748 = vpack.c.b16 %v1206, %v1204
        %v1749 = vpack.c.b16 %v1209, %v1207
        %v1750 = vpack.c.b16 %v1210, %v1208
        %v1751 = vpack.c.b16 %v1213, %v1211
        %v1752 = vpack.c.b16 %v1214, %v1212
        %v1753 = vpack.c.b16 %v1217, %v1215
        %v1754 = vpack.c.b16 %v1218, %v1216
        %v1755 = vpack.c.b16 %v1221, %v1219
        %v1756 = vpack.c.b16 %v1222, %v1220
        %v1757 = vpack.c.b16 %v1225, %v1223
        %v1758 = vpack.c.b16 %v1226, %v1224
        %v1759 = vpack.c.b16 %v1229, %v1227
        %v1760 = vpack.c.b16 %v1230, %v1228
        %v1761 = vpack.c.b16 %v1233, %v1231
        %v1762 = vpack.c.b16 %v1234, %v1232
        %v1763 = vpack.c.b16 %v1237, %v1235
        %v1764 = vpack.c.b16 %v1238, %v1236
        %v1765 = vpack.c.b16 %v1241, %v1239
        %v1766 = vpack.c.b16 %v1242, %v1240
        %v1767 = vpack.c.b16 %v1245, %v1243
        %v1768 = vpack.c.b16 %v1246, %v1244
        %v1769 = vpack.c.b16 %v1249, %v1247
        %v1770 = vpack.c.b16 %v1250, %v1248
        %v1771 = vpack.c.b16 %v1253, %v1251
        %v1772 = vpack.c.b16 %v1254, %v1252
        %v1773 = vpack.c.b16 %v1257, %v1255
        %v1774 = vpack.c.b16 %v1258, %v1256
        %v1775 = vpack.c.b16 %v1261, %v1259
        %v1776 = vpack.c.b16 %v1262, %v1260
        %v1777 = vpack.c.b16 %v1265, %v1263
        %v1778 = vpack.c.b16 %v1266, %v1264
        %v1779 = vpack.c.b16 %v1269, %v1267
        %v1780 = vpack.c.b16 %v1270, %v1268
        %v1781 = vpack.c.b16 %v1273, %v1271
        %v1782 = vpack.c.b16 %v1274, %v1272
        %v1783 = vpack.c.b16 %v1277, %v1275
        %v1784 = vpack.c.b16 %v1278, %v1276
        %v1785 = vpack.c.b16 %v1281, %v1279
        %v1786 = vpack.c.b16 %v1282, %v1280
        %v1787 = vpack.c.b16 %v1285, %v1283
        %v1788 = vpack.c.b16 %v1286, %v1284
        %v1789 = vpack.c.b16 %v1289, %v1287
        %v1790 = vpack.c.b16 %v1290, %v1288
        %v1791 = vpack.c.b16 %v1293, %v1291
        %v1792 = vpack.c.b16 %v1294, %v1292
        %v1793 = vpack.c.b16 %v1297, %v1295
        %v1794 = vpack.c.b16 %v1298, %v1296
        %v1795 = vpack.c.b16 %v1301, %v1299
        %v1796 = vpack.c.b16 %v1302, %v1300
        %v1797 = vpack.c.b16 %v1305, %v1303
        %v1798 = vpack.c.b16 %v1306, %v1304
        %v1799 = vpack.c.b16 %v1309, %v1307
        %v1800 = vpack.c.b16 %v1310, %v1308
        %v1801 = vpack.c.b16 %v1313, %v1311
        %v1802 = vpack.c.b16 %v1314, %v1312
        %v1803 = vpack.c.b16 %v1317, %v1315
        %v1804 = vpack.c.b16 %v1318, %v1316
        %v1805 = vpack.c.b16 %v1321, %v1319
        %v1806 = vpack.c.b16 %v1322, %v1320
        %v1807 = vpack.c.b16 %v1325, %v1323
        %v1808 = vpack.c.b16 %v1326, %v1324
        %v1809 = vpack.c.b16 %v1329, %v1327
        %v1810 = vpack.c.b16 %v1330, %v1328
        %v1811 = vpack.c.b16 %v1333, %v1331
        %v1812 = vpack.c.b16 %v1334, %v1332
        %v1813 = vpack.c.b16 %v1337, %v1335
        %v1814 = vpack.c.b16 %v1338, %v1336
        %v1815 = vpack.c.b16 %v1341, %v1339
        %v1816 = vpack.c.b16 %v1342, %v1340
        %v1817 = vpack.c.b16 %v1345, %v1343
        %v1818 = vpack.c.b16 %v1346, %v1344
        %v1819 = vpack.c.b16 %v1349, %v1347
        %v1820 = vpack.c.b16 %v1350, %v1348
        %v1821 = vpack.c.b16 %v1353, %v1351
        %v1822 = vpack.c.b16 %v1354, %v1352
        %v1823 = vpack.c.b16 %v1357, %v1355
        %v1824 = vpack.c.b16 %v1358, %v1356
        %v1825 = vpack.c.b16 %v1361, %v1359
        %v1826 = vpack.c.b16 %v1362, %v1360
        %v1827 = vpack.c.b16 %v1365, %v1363
        %v1828 = vpack.c.b16 %v1366, %v1364
        %v1829 = vpack.c.b16 %v1369, %v1367
        %v1830 = vpack.c.b16 %v1370, %v1368
        %v1831 = vpack.c.b16 %v1373, %v1371
        %v1832 = vpack.c.b16 %v1374, %v1372
        %v1833 = vpack.c.b16 %v1377, %v1375
        %v1834 = vpack.c.b16 %v1378, %v1376
        %v1835 = vpack.c.b16 %v1381, %v1379
        %v1836 = vpack.c.b16 %v1382, %v1380
        %v1837 = vpack.c.b16 %v1385, %v1383
        %v1838 = vpack.c.b16 %v1386, %v1384
        %v1839 = vpack.c.b16 %v1389, %v1387
        %v1840 = vpack.c.b16 %v1390, %v1388
        %v1841 = vpack.c.b16 %v1393, %v1391
        %v1842 = vpack.c.b16 %v1394, %v1392
        %v1843 = vpack.c.b16 %v1397, %v1395
        %v1844 = vpack.c.b16 %v1398, %v1396
        %v1845 = vpack.c.b16 %v1401, %v1399
        %v1846 = vpack.c.b16 %v1402, %v1400
        %v1847 = vpack.c.b16 %v1405, %v1403
        %v1848 = vpack.c.b16 %v1406, %v1404
        %v1849 = vpack.c.b16 %v1409, %v1407
        %v1850 = vpack.c.b16 %v1410, %v1408
        %v1851 = vpack.c.b16 %v1413, %v1411
        %v1852 = vpack.c.b16 %v1414, %v1412
        %v1853 = vpack.c.b16 %v1417, %v1415
        %v1854 = vpack.c.b16 %v1418, %v1416
        %v1855 = vpack.c.b16 %v1421, %v1419
        %v1856 = vpack.c.b16 %v1422, %v1420
        %v1857 = vpack.c.b16 %v1425, %v1423
        %v1858 = vpack.c.b16 %v1426, %v1424
        %v1859 = vpack.c.b16 %v1429, %v1427
        %v1860 = vpack.c.b16 %v1430, %v1428
        %v1861 = vpack.c.b16 %v1433, %v1431
        %v1862 = vpack.c.b16 %v1434, %v1432
        %v1863 = vpack.c.b16 %v1437, %v1435
        %v1864 = vpack.c.b16 %v1438, %v1436
        %v1865 = vpack.c.b16 %v1441, %v1439
        %v1866 = vpack.c.b16 %v1442, %v1440
        %v1867 = vpack.c.b16 %v1445, %v1443
        %v1868 = vpack.c.b16 %v1446, %v1444
        %v1869 = vpack.c.b16 %v1449, %v1447
        %v1870 = vpack.c.b16 %v1450, %v1448
        %v1871 = vpack.c.b16 %v1453, %v1451
        %v1872 = vpack.c.b16 %v1454, %v1452
        %v1873 = vpack.c.b16 %v1457, %v1455
        %v1874 = vpack.c.b16 %v1458, %v1456
        %v1875 = vpack.c.b16 %v1461, %v1459
        %v1876 = vpack.c.b16 %v1462, %v1460
        %v1877 = vpack.c.b16 %v1465, %v1463
        %v1878 = vpack.c.b16 %v1466, %v1464
        %v1879 = vpack.c.b16 %v1469, %v1467
        %v1880 = vpack.c.b16 %v1470, %v1468
        %v1881 = vpack.c.b16 %v1473, %v1471
        %v1882 = vpack.c.b16 %v1474, %v1472
        %v1883 = vpack.c.b16 %v1477, %v1475
        %v1884 = vpack.c.b16 %v1478, %v1476
        %v1885 = vpack.c.b16 %v1481, %v1479
        %v1886 = vpack.c.b16 %v1482, %v1480
        %v1887 = vpack.c.b16 %v1485, %v1483
        %v1888 = vpack.c.b16 %v1486, %v1484
        %v1889 = vpack.c.b16 %v1489, %v1487
        %v1890 = vpack.c.b16 %v1490, %v1488
        %v1891 = vpack.c.b16 %v1493, %v1491
        %v1892 = vpack.c.b16 %v1494, %v1492
        %v1893 = vpack.c.b16 %v1497, %v1495
        %v1894 = vpack.c.b16 %v1498, %v1496
        %v1895 = vpack.c.b16 %v1501, %v1499
        %v1896 = vpack.c.b16 %v1502, %v1500
        %v1897 = vpack.c.b16 %v1505, %v1503
        %v1898 = vpack.c.b16 %v1506, %v1504
        %v1899 = vpack.c.b16 %v1509, %v1507
        %v1900 = vpack.c.b16 %v1510, %v1508
        %v1901 = vpack.c.b16 %v1513, %v1511
        %v1902 = vpack.c.b16 %v1514, %v1512
        %v1903 = vpack.c.b16 %v1517, %v1515
        %v1904 = vpack.c.b16 %v1518, %v1516
        %v1905 = vpack.c.b16 %v1521, %v1519
        %v1906 = vpack.c.b16 %v1522, %v1520
        %v1907 = vpack.c.b16 %v1525, %v1523
        %v1908 = vpack.c.b16 %v1526, %v1524
        %v1909 = vpack.c.b16 %v1529, %v1527
        %v1910 = vpack.c.b16 %v1530, %v1528
        %v1911 = vpack.c.b16 %v1533, %v1531
        %v1912 = vpack.c.b16 %v1534, %v1532
        %v1913 = vpack.c.b16 %v1537, %v1535
        %v1914 = vpack.c.b16 %v1538, %v1536
        %v1915 = vpack.c.b16 %v1541, %v1539
        %v1916 = vpack.c.b16 %v1542, %v1540
        %v1917 = vpack.c.b16 %v1545, %v1543
        %v1918 = vpack.c.b16 %v1546, %v1544
        %v1919 = vpack.c.b16 %v1549, %v1547
        %v1920 = vpack.c.b16 %v1550, %v1548
        %v1921 = vpack.c.b16 %v1553, %v1551
        %v1922 = vpack.c.b16 %v1554, %v1552
        %v1923 = vpack.c.b16 %v1557, %v1555
        %v1924 = vpack.c.b16 %v1558, %v1556
        %v1925 = vpack.c.b16 %v1561, %v1559
        %v1926 = vpack.c.b16 %v1562, %v1560
        %v1927 = vpack.c.b16 %v1565, %v1563
        %v1928 = vpack.c.b16 %v1566, %v1564
        %v1929 = vpack.c.b16 %v1569, %v1567
        %v1930 = vpack.c.b16 %v1570, %v1568
        %v1931 = vpack.c.b16 %v1573, %v1571
        %v1932 = vpack.c.b16 %v1574, %v1572
        %v1933 = vpack.c.b16 %v1577, %v1575
        %v1934 = vpack.c.b16 %v1578, %v1576
        %v1935 = vpack.c.b16 %v1581, %v1579
        %v1936 = vpack.c.b16 %v1582, %v1580
        %v1937 = vpack.c.b16 %v1585, %v1583
        %v1938 = vpack.c.b16 %v1586, %v1584
        %v1939 = vpack.c.b16 %v1589, %v1587
        %v1940 = vpack.c.b16 %v1590, %v1588
        %v1941 = vpack.c.b16 %v1593, %v1591
        %v1942 = vpack.c.b16 %v1594, %v1592
        %v1943 = vpack.c.b16 %v1597, %v1595
        %v1944 = vpack.c.b16 %v1598, %v1596
        %v1945 = vpack.c.b16 %v1601, %v1599
        %v1946 = vpack.c.b16 %v1602, %v1600
        %v1947 = vpack.c.b16 %v1605, %v1603
        %v1948 = vpack.c.b16 %v1606, %v1604
        %v1949 = vpack.c.b16 %v1609, %v1607
        %v1950 = vpack.c.b16 %v1610, %v1608
        %v1951 = vpack.c.b16 %v1613, %v1611
        %v1952 = vpack.c.b16 %v1614, %v1612
        %v1953 = vpack.c.b16 %v1617, %v1615
        %v1954 = vpack.c.b16 %v1618, %v1616
        %2291 = vmatprep.subr.bf16.mxu0 %v1620
        %2292 = vmatpush1.bf16.msra.mxu0 %v1619
        %2293 = vmatprep.subr.bf16.mxu0 %v1622
        %2294 = vmatpush1.bf16.msra.mxu0 %v1621
        %2295 = vmatprep.subr.bf16.mxu0 %v1624
        %2296 = vmatpush1.bf16.msra.mxu0 %v1623
        %2297 = vmatprep.subr.bf16.mxu0 %v1626
        %2298 = vmatpush1.bf16.msra.mxu0 %v1625
        %2299 = vmatprep.subr.bf16.mxu0 %v1628
        %2300 = vmatpush1.bf16.msra.mxu0 %v1627
        %2301 = vmatprep.subr.bf16.mxu0 %v1630
        %2302 = vmatpush1.bf16.msra.mxu0 %v1629
        %2303 = vmatprep.subr.bf16.mxu0 %v1632
        %2304 = vmatpush1.bf16.msra.mxu0 %v1631
        %2305 = vmatprep.subr.bf16.mxu0 %v1634
        %2306 = vmatpush1.bf16.msra.mxu0 %v1633
        %2307 = vmatprep.subr.bf16.mxu0 %v1636
        %2308 = vmatpush1.bf16.msra.mxu0 %v1635
        %2309 = vmatprep.subr.bf16.mxu0 %v1638
        %2310 = vmatpush1.bf16.msra.mxu0 %v1637
        %2311 = vmatprep.subr.bf16.mxu0 %v1640
        %2312 = vmatpush1.bf16.msra.mxu0 %v1639
        %2313 = vmatprep.subr.bf16.mxu0 %v1642
        %2314 = vmatpush1.bf16.msra.mxu0 %v1641
        %2315 = vmatprep.subr.bf16.mxu0 %v1644
        %2316 = vmatpush1.bf16.msra.mxu0 %v1643
        %2317 = vmatprep.subr.bf16.mxu0 %v1646
        %2318 = vmatpush1.bf16.msra.mxu0 %v1645
        %2319 = vmatprep.subr.bf16.mxu0 %v1648
        %2320 = vmatpush1.bf16.msra.mxu0 %v1647
        %2321 = vmatprep.subr.bf16.mxu0 %v1650
        %2322 = vmatpush1.bf16.msra.mxu0 %v1649
        %2323 = vmatprep.mubr.bf16.mxu0 %v255
        %2324 = vmatmul.mubr.bf16.gmra.mrb[0].mxu0 %v254
        %v2325 = vpop.f32.mrb[0].mxu0
        %v2326 = vadd.f32 0.0, %v2325
        %v2327 = vpop.f32.mrb[0].mxu0
        %v2328 = vadd.f32 0.0, %v2327
        %v2329 = vpop.f32.mrb[0].mxu0
        %v2330 = vpop.f32.mrb[0].mxu0
        %2331 = vdwg.mxu0
        %2332 = vmatprep.subr.bf16.mxu0 %v1652
        %2333 = vmatpush1.bf16.msra.mxu0 %v1651
        %2334 = vmatprep.subr.bf16.mxu0 %v1654
        %2335 = vmatpush1.bf16.msra.mxu0 %v1653
        %2336 = vmatprep.subr.bf16.mxu0 %v1656
        %2337 = vmatpush1.bf16.msra.mxu0 %v1655
        %2338 = vmatprep.subr.bf16.mxu0 %v1658
        %2339 = vmatpush1.bf16.msra.mxu0 %v1657
        %2340 = vmatprep.subr.bf16.mxu0 %v1660
        %2341 = vmatpush1.bf16.msra.mxu0 %v1659
        %2342 = vmatprep.subr.bf16.mxu0 %v1662
        %2343 = vmatpush1.bf16.msra.mxu0 %v1661
        %2344 = vmatprep.subr.bf16.mxu0 %v1664
        %2345 = vmatpush1.bf16.msra.mxu0 %v1663
        %2346 = vmatprep.subr.bf16.mxu0 %v1666
        %2347 = vmatpush1.bf16.msra.mxu0 %v1665
        %2348 = vmatprep.subr.bf16.mxu0 %v1668
        %2349 = vmatpush1.bf16.msra.mxu0 %v1667
        %2350 = vmatprep.subr.bf16.mxu0 %v1670
        %2351 = vmatpush1.bf16.msra.mxu0 %v1669
        %2352 = vmatprep.subr.bf16.mxu0 %v1672
        %2353 = vmatpush1.bf16.msra.mxu0 %v1671
        %2354 = vmatprep.subr.bf16.mxu0 %v1674
        %2355 = vmatpush1.bf16.msra.mxu0 %v1673
        %2356 = vmatprep.subr.bf16.mxu0 %v1676
        %2357 = vmatpush1.bf16.msra.mxu0 %v1675
        %2358 = vmatprep.subr.bf16.mxu0 %v1678
        %2359 = vmatpush1.bf16.msra.mxu0 %v1677
        %2360 = vmatprep.subr.bf16.mxu0 %v1680
        %2361 = vmatpush1.bf16.msra.mxu0 %v1679
        %2362 = vmatprep.subr.bf16.mxu0 %v1682
        %2363 = vmatpush1.bf16.msra.mxu0 %v1681
        %2364 = vmatprep.mubr.bf16.mxu0 %v257
        %2365 = vmatmul.mubr.bf16.gmra.mrb[0].mxu0 %v256
        %v2366 = vpop.f32.mrb[0].mxu0
        %v2367 = vadd.f32 %v2326, %v2366
        %v2368 = vpop.f32.mrb[0].mxu0
        %v2369 = vadd.f32 %v2328, %v2368
        %v2370 = vpop.f32.mrb[0].mxu0
        %v2371 = vpop.f32.mrb[0].mxu0
        %2372 = vdwg.mxu0
        %2373 = vmatprep.subr.bf16.mxu0 %v1684
        %2374 = vmatpush1.bf16.msra.mxu0 %v1683
        %2375 = vmatprep.subr.bf16.mxu0 %v1686
        %2376 = vmatpush1.bf16.msra.mxu0 %v1685
        %2377 = vmatprep.subr.bf16.mxu0 %v1688
        %2378 = vmatpush1.bf16.msra.mxu0 %v1687
        %2379 = vmatprep.subr.bf16.mxu0 %v1690
        %2380 = vmatpush1.bf16.msra.mxu0 %v1689
        %2381 = vmatprep.subr.bf16.mxu0 %v1692
        %2382 = vmatpush1.bf16.msra.mxu0 %v1691
        %2383 = vmatprep.subr.bf16.mxu0 %v1694
        %2384 = vmatpush1.bf16.msra.mxu0 %v1693
        %2385 = vmatprep.subr.bf16.mxu0 %v1696
        %2386 = vmatpush1.bf16.msra.mxu0 %v1695
        %2387 = vmatprep.subr.bf16.mxu0 %v1698
        %2388 = vmatpush1.bf16.msra.mxu0 %v1697
        %2389 = vmatprep.subr.bf16.mxu0 %v1700
        %2390 = vmatpush1.bf16.msra.mxu0 %v1699
        %2391 = vmatprep.subr.bf16.mxu0 %v1702
        %2392 = vmatpush1.bf16.msra.mxu0 %v1701
        %2393 = vmatprep.subr.bf16.mxu0 %v1704
        %2394 = vmatpush1.bf16.msra.mxu0 %v1703
        %2395 = vmatprep.subr.bf16.mxu0 %v1706
        %2396 = vmatpush1.bf16.msra.mxu0 %v1705
        %2397 = vmatprep.subr.bf16.mxu0 %v1708
        %2398 = vmatpush1.bf16.msra.mxu0 %v1707
        %2399 = vmatprep.subr.bf16.mxu0 %v1710
        %2400 = vmatpush1.bf16.msra.mxu0 %v1709
        %2401 = vmatprep.subr.bf16.mxu0 %v1712
        %2402 = vmatpush1.bf16.msra.mxu0 %v1711
        %2403 = vmatprep.subr.bf16.mxu0 %v1714
        %2404 = vmatpush1.bf16.msra.mxu0 %v1713
        %2405 = vmatprep.mubr.bf16.mxu0 %v259
        %2406 = vmatmul.mubr.bf16.gmra.mrb[0].mxu0 %v258
        %v2407 = vpop.f32.mrb[0].mxu0
        %v2408 = vadd.f32 %v2367, %v2407
        %v2409 = vpop.f32.mrb[0].mxu0
        %v2410 = vadd.f32 %v2369, %v2409
        %v2411 = vpop.f32.mrb[0].mxu0
        %v2412 = vpop.f32.mrb[0].mxu0
        %2413 = vdwg.mxu0
        %2414 = vmatprep.subr.bf16.mxu0 %v1716
        %2415 = vmatpush1.bf16.msra.mxu0 %v1715
        %2416 = vmatprep.subr.bf16.mxu0 %v1718
        %2417 = vmatpush1.bf16.msra.mxu0 %v1717
        %2418 = vmatprep.subr.bf16.mxu0 %v1720
        %2419 = vmatpush1.bf16.msra.mxu0 %v1719
        %2420 = vmatprep.subr.bf16.mxu0 %v1722
        %2421 = vmatpush1.bf16.msra.mxu0 %v1721
        %2422 = vmatprep.subr.bf16.mxu0 %v1724
        %2423 = vmatpush1.bf16.msra.mxu0 %v1723
        %2424 = vmatprep.subr.bf16.mxu0 %v1726
        %2425 = vmatpush1.bf16.msra.mxu0 %v1725
        %2426 = vmatprep.subr.bf16.mxu0 %v1728
        %2427 = vmatpush1.bf16.msra.mxu0 %v1727
        %2428 = vmatprep.subr.bf16.mxu0 %v1730
        %2429 = vmatpush1.bf16.msra.mxu0 %v1729
        %2430 = vmatprep.subr.bf16.mxu0 %v1732
        %2431 = vmatpush1.bf16.msra.mxu0 %v1731
        %2432 = vmatprep.subr.bf16.mxu0 %v1734
        %2433 = vmatpush1.bf16.msra.mxu0 %v1733
        %2434 = vmatprep.subr.bf16.mxu0 %v1736
        %2435 = vmatpush1.bf16.msra.mxu0 %v1735
        %2436 = vmatprep.subr.bf16.mxu0 %v1738
        %2437 = vmatpush1.bf16.msra.mxu0 %v1737
        %2438 = vmatprep.subr.bf16.mxu0 %v1740
        %2439 = vmatpush1.bf16.msra.mxu0 %v1739
        %2440 = vmatprep.subr.bf16.mxu0 %v1742
        %2441 = vmatpush1.bf16.msra.mxu0 %v1741
        %2442 = vmatprep.subr.bf16.mxu0 %v1744
        %2443 = vmatpush1.bf16.msra.mxu0 %v1743
        %2444 = vmatprep.subr.bf16.mxu0 %v1746
        %2445 = vmatpush1.bf16.msra.mxu0 %v1745
        %2446 = vmatprep.mubr.bf16.mxu0 %v261
        %2447 = vmatmul.mubr.bf16.gmra.mrb[0].mxu0 %v260
        %v2448 = vpop.f32.mrb[0].mxu0
        %v2449 = vadd.f32 %v2408, %v2448
        %v2450 = vpop.f32.mrb[0].mxu0
        %v2451 = vadd.f32 %v2410, %v2450
        %v2452 = vpop.f32.mrb[0].mxu0
        %v2453 = vpop.f32.mrb[0].mxu0
        %2454 = vdwg.mxu0
        %2455 = vmatprep.subr.bf16.mxu0 %v1748
        %2456 = vmatpush1.bf16.msra.mxu0 %v1747
        %2457 = vmatprep.subr.bf16.mxu0 %v1750
        %2458 = vmatpush1.bf16.msra.mxu0 %v1749
        %2459 = vmatprep.subr.bf16.mxu0 %v1752
        %2460 = vmatpush1.bf16.msra.mxu0 %v1751
        %2461 = vmatprep.subr.bf16.mxu0 %v1754
        %2462 = vmatpush1.bf16.msra.mxu0 %v1753
        %2463 = vmatprep.subr.bf16.mxu0 %v1756
        %2464 = vmatpush1.bf16.msra.mxu0 %v1755
        %2465 = vmatprep.subr.bf16.mxu0 %v1758
        %2466 = vmatpush1.bf16.msra.mxu0 %v1757
        %2467 = vmatprep.subr.bf16.mxu0 %v1760
        %2468 = vmatpush1.bf16.msra.mxu0 %v1759
        %2469 = vmatprep.subr.bf16.mxu0 %v1762
        %2470 = vmatpush1.bf16.msra.mxu0 %v1761
        %2471 = vmatprep.subr.bf16.mxu0 %v1764
        %2472 = vmatpush1.bf16.msra.mxu0 %v1763
        %2473 = vmatprep.subr.bf16.mxu0 %v1766
        %2474 = vmatpush1.bf16.msra.mxu0 %v1765
        %2475 = vmatprep.subr.bf16.mxu0 %v1768
        %2476 = vmatpush1.bf16.msra.mxu0 %v1767
        %2477 = vmatprep.subr.bf16.mxu0 %v1770
        %2478 = vmatpush1.bf16.msra.mxu0 %v1769
        %2479 = vmatprep.subr.bf16.mxu0 %v1772
        %2480 = vmatpush1.bf16.msra.mxu0 %v1771
        %2481 = vmatprep.subr.bf16.mxu0 %v1774
        %2482 = vmatpush1.bf16.msra.mxu0 %v1773
        %2483 = vmatprep.subr.bf16.mxu0 %v1776
        %2484 = vmatpush1.bf16.msra.mxu0 %v1775
        %2485 = vmatprep.subr.bf16.mxu0 %v1778
        %2486 = vmatpush1.bf16.msra.mxu0 %v1777
        %2487 = vmatprep.mubr.bf16.mxu0 %v263
        %2488 = vmatmul.mubr.bf16.gmra.mrb[0].mxu0 %v262
        %v2489 = vpop.f32.mrb[0].mxu0
        %v2490 = vadd.f32 %v2449, %v2489
        %v2491 = vpop.f32.mrb[0].mxu0
        %v2492 = vadd.f32 %v2451, %v2491
        %v2493 = vpop.f32.mrb[0].mxu0
        %v2494 = vpop.f32.mrb[0].mxu0
        %2495 = vdwg.mxu0
        %2496 = vmatprep.subr.bf16.mxu0 %v1780
        %2497 = vmatpush1.bf16.msra.mxu0 %v1779
        %2498 = vmatprep.subr.bf16.mxu0 %v1782
        %2499 = vmatpush1.bf16.msra.mxu0 %v1781
        %2500 = vmatprep.subr.bf16.mxu0 %v1784
        %2501 = vmatpush1.bf16.msra.mxu0 %v1783
        %2502 = vmatprep.subr.bf16.mxu0 %v1786
        %2503 = vmatpush1.bf16.msra.mxu0 %v1785
        %2504 = vmatprep.subr.bf16.mxu0 %v1788
        %2505 = vmatpush1.bf16.msra.mxu0 %v1787
        %2506 = vmatprep.subr.bf16.mxu0 %v1790
        %2507 = vmatpush1.bf16.msra.mxu0 %v1789
        %2508 = vmatprep.subr.bf16.mxu0 %v1792
        %2509 = vmatpush1.bf16.msra.mxu0 %v1791
        %2510 = vmatprep.subr.bf16.mxu0 %v1794
        %2511 = vmatpush1.bf16.msra.mxu0 %v1793
        %2512 = vmatprep.subr.bf16.mxu0 %v1796
        %2513 = vmatpush1.bf16.msra.mxu0 %v1795
        %2514 = vmatprep.subr.bf16.mxu0 %v1798
        %2515 = vmatpush1.bf16.msra.mxu0 %v1797
        %2516 = vmatprep.subr.bf16.mxu0 %v1800
        %2517 = vmatpush1.bf16.msra.mxu0 %v1799
        %2518 = vmatprep.subr.bf16.mxu0 %v1802
        %2519 = vmatpush1.bf16.msra.mxu0 %v1801
        %2520 = vmatprep.subr.bf16.mxu0 %v1804
        %2521 = vmatpush1.bf16.msra.mxu0 %v1803
        %2522 = vmatprep.subr.bf16.mxu0 %v1806
        %2523 = vmatpush1.bf16.msra.mxu0 %v1805
        %2524 = vmatprep.subr.bf16.mxu0 %v1808
        %2525 = vmatpush1.bf16.msra.mxu0 %v1807
        %2526 = vmatprep.subr.bf16.mxu0 %v1810
        %2527 = vmatpush1.bf16.msra.mxu0 %v1809
        %2528 = vmatprep.mubr.bf16.mxu0 %v265
        %2529 = vmatmul.mubr.bf16.gmra.mrb[0].mxu0 %v264
        %v2530 = vpop.f32.mrb[0].mxu0
        %v2531 = vadd.f32 %v2490, %v2530
        %v2532 = vpop.f32.mrb[0].mxu0
        %v2533 = vadd.f32 %v2492, %v2532
        %v2534 = vpop.f32.mrb[0].mxu0
        %v2535 = vpop.f32.mrb[0].mxu0
        %2536 = vdwg.mxu0
        %2537 = vmatprep.subr.bf16.mxu0 %v1812
        %2538 = vmatpush1.bf16.msra.mxu0 %v1811
        %2539 = vmatprep.subr.bf16.mxu0 %v1814
        %2540 = vmatpush1.bf16.msra.mxu0 %v1813
        %2541 = vmatprep.subr.bf16.mxu0 %v1816
        %2542 = vmatpush1.bf16.msra.mxu0 %v1815
        %2543 = vmatprep.subr.bf16.mxu0 %v1818
        %2544 = vmatpush1.bf16.msra.mxu0 %v1817
        %2545 = vmatprep.subr.bf16.mxu0 %v1820
        %2546 = vmatpush1.bf16.msra.mxu0 %v1819
        %2547 = vmatprep.subr.bf16.mxu0 %v1822
        %2548 = vmatpush1.bf16.msra.mxu0 %v1821
        %2549 = vmatprep.subr.bf16.mxu0 %v1824
        %2550 = vmatpush1.bf16.msra.mxu0 %v1823
        %2551 = vmatprep.subr.bf16.mxu0 %v1826
        %2552 = vmatpush1.bf16.msra.mxu0 %v1825
        %2553 = vmatprep.subr.bf16.mxu0 %v1828
        %2554 = vmatpush1.bf16.msra.mxu0 %v1827
        %2555 = vmatprep.subr.bf16.mxu0 %v1830
        %2556 = vmatpush1.bf16.msra.mxu0 %v1829
        %2557 = vmatprep.subr.bf16.mxu0 %v1832
        %2558 = vmatpush1.bf16.msra.mxu0 %v1831
        %2559 = vmatprep.subr.bf16.mxu0 %v1834
        %2560 = vmatpush1.bf16.msra.mxu0 %v1833
        %2561 = vmatprep.subr.bf16.mxu0 %v1836
        %2562 = vmatpush1.bf16.msra.mxu0 %v1835
        %2563 = vmatprep.subr.bf16.mxu0 %v1838
        %2564 = vmatpush1.bf16.msra.mxu0 %v1837
        %2565 = vmatprep.subr.bf16.mxu0 %v1840
        %2566 = vmatpush1.bf16.msra.mxu0 %v1839
        %2567 = vmatprep.subr.bf16.mxu0 %v1842
        %2568 = vmatpush1.bf16.msra.mxu0 %v1841
        %2569 = vmatprep.mubr.bf16.mxu0 %v267
        %2570 = vmatmul.mubr.bf16.gmra.mrb[0].mxu0 %v266
        %v2571 = vpop.f32.mrb[0].mxu0
        %v2572 = vadd.f32 %v2531, %v2571
        %v2573 = vpop.f32.mrb[0].mxu0
        %v2574 = vadd.f32 %v2533, %v2573
        %v2575 = vpop.f32.mrb[0].mxu0
        %v2576 = vpop.f32.mrb[0].mxu0
        %2577 = vdwg.mxu0
        %2578 = vmatprep.subr.bf16.mxu0 %v1844
        %2579 = vmatpush1.bf16.msra.mxu0 %v1843
        %2580 = vmatprep.subr.bf16.mxu0 %v1846
        %2581 = vmatpush1.bf16.msra.mxu0 %v1845
        %2582 = vmatprep.subr.bf16.mxu0 %v1848
        %2583 = vmatpush1.bf16.msra.mxu0 %v1847
        %2584 = vmatprep.subr.bf16.mxu0 %v1850
        %2585 = vmatpush1.bf16.msra.mxu0 %v1849
        %2586 = vmatprep.subr.bf16.mxu0 %v1852
        %2587 = vmatpush1.bf16.msra.mxu0 %v1851
        %2588 = vmatprep.subr.bf16.mxu0 %v1854
        %2589 = vmatpush1.bf16.msra.mxu0 %v1853
        %2590 = vmatprep.subr.bf16.mxu0 %v1856
        %2591 = vmatpush1.bf16.msra.mxu0 %v1855
        %2592 = vmatprep.subr.bf16.mxu0 %v1858
        %2593 = vmatpush1.bf16.msra.mxu0 %v1857
        %2594 = vmatprep.subr.bf16.mxu0 %v1860
        %2595 = vmatpush1.bf16.msra.mxu0 %v1859
        %2596 = vmatprep.subr.bf16.mxu0 %v1862
        %2597 = vmatpush1.bf16.msra.mxu0 %v1861
        %2598 = vmatprep.subr.bf16.mxu0 %v1864
        %2599 = vmatpush1.bf16.msra.mxu0 %v1863
        %2600 = vmatprep.subr.bf16.mxu0 %v1866
        %2601 = vmatpush1.bf16.msra.mxu0 %v1865
        %2602 = vmatprep.subr.bf16.mxu0 %v1868
        %2603 = vmatpush1.bf16.msra.mxu0 %v1867
        %2604 = vmatprep.subr.bf16.mxu0 %v1870
        %2605 = vmatpush1.bf16.msra.mxu0 %v1869
        %2606 = vmatprep.subr.bf16.mxu0 %v1872
        %2607 = vmatpush1.bf16.msra.mxu0 %v1871
        %2608 = vmatprep.subr.bf16.mxu0 %v1874
        %2609 = vmatpush1.bf16.msra.mxu0 %v1873
        %2610 = vmatprep.mubr.bf16.mxu0 %v269
        %2611 = vmatmul.mubr.bf16.gmra.mrb[0].mxu0 %v268
        %v2612 = vpop.f32.mrb[0].mxu0
        %v2613 = vadd.f32 %v2572, %v2612
        %v2614 = vpop.f32.mrb[0].mxu0
        %v2615 = vadd.f32 %v2574, %v2614
        %v2616 = vpop.f32.mrb[0].mxu0
        %v2617 = vpop.f32.mrb[0].mxu0
        %2618 = vdwg.mxu0
        %2619 = vmatprep.subr.bf16.mxu0 %v1876
        %2620 = vmatpush1.bf16.msra.mxu0 %v1875
        %2621 = vmatprep.subr.bf16.mxu0 %v1878
        %2622 = vmatpush1.bf16.msra.mxu0 %v1877
        %2623 = vmatprep.subr.bf16.mxu0 %v1880
        %2624 = vmatpush1.bf16.msra.mxu0 %v1879
        %2625 = vmatprep.subr.bf16.mxu0 %v1882
        %2626 = vmatpush1.bf16.msra.mxu0 %v1881
        %2627 = vmatprep.subr.bf16.mxu0 %v1884
        %2628 = vmatpush1.bf16.msra.mxu0 %v1883
        %2629 = vmatprep.subr.bf16.mxu0 %v1886
        %2630 = vmatpush1.bf16.msra.mxu0 %v1885
        %2631 = vmatprep.subr.bf16.mxu0 %v1888
        %2632 = vmatpush1.bf16.msra.mxu0 %v1887
        %2633 = vmatprep.subr.bf16.mxu0 %v1890
        %2634 = vmatpush1.bf16.msra.mxu0 %v1889
        %2635 = vmatprep.subr.bf16.mxu0 %v1892
        %2636 = vmatpush1.bf16.msra.mxu0 %v1891
        %2637 = vmatprep.subr.bf16.mxu0 %v1894
        %2638 = vmatpush1.bf16.msra.mxu0 %v1893
        %2639 = vmatprep.subr.bf16.mxu0 %v1896
        %2640 = vmatpush1.bf16.msra.mxu0 %v1895
        %2641 = vmatprep.subr.bf16.mxu0 %v1898
        %2642 = vmatpush1.bf16.msra.mxu0 %v1897
        %2643 = vmatprep.subr.bf16.mxu0 %v1900
        %2644 = vmatpush1.bf16.msra.mxu0 %v1899
        %2645 = vmatprep.subr.bf16.mxu0 %v1902
        %2646 = vmatpush1.bf16.msra.mxu0 %v1901
        %2647 = vmatprep.subr.bf16.mxu0 %v1904
        %2648 = vmatpush1.bf16.msra.mxu0 %v1903
        %2649 = vmatprep.subr.bf16.mxu0 %v1906
        %2650 = vmatpush1.bf16.msra.mxu0 %v1905
        %2651 = vmatprep.mubr.bf16.mxu0 %v271
        %2652 = vmatmul.mubr.bf16.gmra.mrb[0].mxu0 %v270
        %v2653 = vpop.f32.mrb[0].mxu0
        %v2654 = vadd.f32 %v2613, %v2653
        %v2655 = vpop.f32.mrb[0].mxu0
        %v2656 = vadd.f32 %v2615, %v2655
        %v2657 = vpop.f32.mrb[0].mxu0
        %v2658 = vpop.f32.mrb[0].mxu0
        %2659 = vdwg.mxu0
        %2660 = vmatprep.subr.bf16.mxu0 %v1908
        %2661 = vmatpush1.bf16.msra.mxu0 %v1907
        %2662 = vmatprep.subr.bf16.mxu0 %v1910
        %2663 = vmatpush1.bf16.msra.mxu0 %v1909
        %2664 = vmatprep.subr.bf16.mxu0 %v1912
        %2665 = vmatpush1.bf16.msra.mxu0 %v1911
        %2666 = vmatprep.subr.bf16.mxu0 %v1914
        %2667 = vmatpush1.bf16.msra.mxu0 %v1913
        %2668 = vmatprep.subr.bf16.mxu0 %v1916
        %2669 = vmatpush1.bf16.msra.mxu0 %v1915
        %2670 = vmatprep.subr.bf16.mxu0 %v1918
        %2671 = vmatpush1.bf16.msra.mxu0 %v1917
        %2672 = vmatprep.subr.bf16.mxu0 %v1920
        %2673 = vmatpush1.bf16.msra.mxu0 %v1919
        %2674 = vmatprep.subr.bf16.mxu0 %v1922
        %2675 = vmatpush1.bf16.msra.mxu0 %v1921
        %2676 = vmatprep.subr.bf16.mxu0 %v1924
        %2677 = vmatpush1.bf16.msra.mxu0 %v1923
        %2678 = vmatprep.subr.bf16.mxu0 %v1926
        %2679 = vmatpush1.bf16.msra.mxu0 %v1925
        %2680 = vmatprep.subr.bf16.mxu0 %v1928
        %2681 = vmatpush1.bf16.msra.mxu0 %v1927
        %2682 = vmatprep.subr.bf16.mxu0 %v1930
        %2683 = vmatpush1.bf16.msra.mxu0 %v1929
        %2684 = vmatprep.subr.bf16.mxu0 %v1932
        %2685 = vmatpush1.bf16.msra.mxu0 %v1931
        %2686 = vmatprep.subr.bf16.mxu0 %v1934
        %2687 = vmatpush1.bf16.msra.mxu0 %v1933
        %2688 = vmatprep.subr.bf16.mxu0 %v1936
        %2689 = vmatpush1.bf16.msra.mxu0 %v1935
        %2690 = vmatprep.subr.bf16.mxu0 %v1938
        %2691 = vmatpush1.bf16.msra.mxu0 %v1937
        %2692 = vmatprep.mubr.bf16.mxu0 %v273
        %2693 = vmatmul.mubr.bf16.gmra.mrb[0].mxu0 %v272
        %v2694 = vpop.f32.mrb[0].mxu0
        %v2695 = vadd.f32 %v2654, %v2694
        %v2696 = vpop.f32.mrb[0].mxu0
        %v2697 = vadd.f32 %v2656, %v2696
        %v2698 = vpop.f32.mrb[0].mxu0
        %v2699 = vpop.f32.mrb[0].mxu0
        %2700 = vdwg.mxu0
        %2701 = vmatprep.subr.bf16.mxu0 %v1940
        %2702 = vmatpush1.bf16.msra.mxu0 %v1939
        %2703 = vmatprep.subr.bf16.mxu0 %v1942
        %2704 = vmatpush1.bf16.msra.mxu0 %v1941
        %2705 = vmatprep.subr.bf16.mxu0 %v1944
        %2706 = vmatpush1.bf16.msra.mxu0 %v1943
        %2707 = vmatprep.subr.bf16.mxu0 %v1946
        %2708 = vmatpush1.bf16.msra.mxu0 %v1945
        %2709 = vmatprep.subr.bf16.mxu0 %v1948
        %2710 = vmatpush1.bf16.msra.mxu0 %v1947
        %2711 = vmatprep.subr.bf16.mxu0 %v1950
        %2712 = vmatpush1.bf16.msra.mxu0 %v1949
        %2713 = vmatprep.subr.bf16.mxu0 %v1952
        %2714 = vmatpush1.bf16.msra.mxu0 %v1951
        %2715 = vmatprep.subr.bf16.mxu0 %v1954
        %2716 = vmatpush1.bf16.msra.mxu0 %v1953
        %2717 = vmatprep.subr.bf16.mxu0 0
        %2718 = vmatpush1.bf16.msra.mxu0 0
        %2719 = vmatprep.subr.bf16.mxu0 0
        %2720 = vmatpush1.bf16.msra.mxu0 0
        %2721 = vmatprep.subr.bf16.mxu0 0
        %2722 = vmatpush1.bf16.msra.mxu0 0
        %2723 = vmatprep.subr.bf16.mxu0 0
        %2724 = vmatpush1.bf16.msra.mxu0 0
        %2725 = vmatprep.subr.bf16.mxu0 0
        %2726 = vmatpush1.bf16.msra.mxu0 0
        %2727 = vmatprep.subr.bf16.mxu0 0
        %2728 = vmatpush1.bf16.msra.mxu0 0
        %2729 = vmatprep.subr.bf16.mxu0 0
        %2730 = vmatpush1.bf16.msra.mxu0 0
        %2731 = vmatprep.subr.bf16.mxu0 0
        %2732 = vmatpush1.bf16.msra.mxu0 0
        %2733 = vmatprep.mubr.bf16.mxu0 0
        %2734 = vmatmul.mubr.bf16.gmra.mrb[0].mxu0 %v274
        %v2735 = vpop.f32.mrb[0].mxu0
        %v2736 = vadd.f32 %v2695, %v2735
        %v2737 = vpop.f32.mrb[0].mxu0
        %v2738 = vadd.f32 %v2697, %v2737
        %v2739 = vpop.f32.mrb[0].mxu0
        %v2740 = vpop.f32.mrb[0].mxu0
        %2741 = vdwg.mxu0
        %v2744 = vcombine.low %v2736, %v2738
        %v2746 = vadd.f32 %v212, %v2744
        %2747 = vst [vmem:[%s204] sm:$0xff] %v2746
        %s2748 = smul.u32 2, %s20
        %p2749 = scmp.lt.s32.totalorder %s2748, 3
        %s2750 = scalar_select %p2749, %s2748, 3
        %s2751 = smul.addr %s2750, 4
        %s2752 = scalar_lea.vmem %s2, %s2751
        // Predicated region
        $region37: #{id_loss_forward.3} parent=27 // pred_check
          %p2753 = pneg %p100
        $region38: #{id_loss_forward.3} parent=27 // pred_check_branch
          %2755 = sbr.rel (%p2753) target = $region40
        $region39: #{id_loss_forward.3} parent=27 // pred_region
          %s2756 = smul.u32 2, %s20
        $region40: #{id_loss_forward.3} parent=27 // pred_fallthru
          _
      $region28: #{id_loss_forward.3} parent=5 // pred_fallthru
        _
      %p2757 = scmp.le.s32.totalorder 2, %s11
      // Predicated region
      $region41: #{id_loss_forward.3} parent=5 // pred_check
        %p2758 = pneg %p2757
      $region42: #{id_loss_forward.3} parent=5 // pred_check_branch
        %2760 = sbr.rel (%p2758) target = $region44
      $region43: #{id_loss_forward.3} parent=5 // pred_region
        %s2761 = ssub.s32 %s11, 2
        // Predicated region
        $region45: #{id_loss_forward.3} parent=43 // pred_check
          %p2762 = pneg %p106
        $region46: #{id_loss_forward.3} parent=43 // pred_check_branch
          %2764 = sbr.rel (%p2762) target = $region48
        $region47: #{id_loss_forward.3} parent=43 // pred_region
          %s2765 = smul.u32 2, %s22
          %p2766 = scmp.lt.s32.totalorder %s2765, 3
          %s2767 = scalar_select %p2766, %s2765, 3
          %s2768 = smul.addr %s2767, 4
          %s2769 = scalar_lea.vmem %s2, %s2768
        $region48: #{id_loss_forward.3} parent=43 // pred_fallthru
          _
      $region44: #{id_loss_forward.3} parent=5 // pred_fallthru
        _
    $region6: #{id_loss_forward.3} parent=1 // loop_footer
      %s15 = sadd.s32 1, %s11
    $region7: #{id_loss_forward.3} parent=1 // loop_footer_branch
      %10 = sbr.rel target = $region3
    $region8: #{id_loss_forward.3} parent=1 // loop_exit
      _
    %2770 = vsyncpa [#allocation3], 1
    %s2771 = scalar_lea.sflag [#allocation3], 1
    %2772 = vsyncpa %s2771, 1

</llo_original>
